<compile_context>
chip_gen: v6e
topology: v6e:2x2x1
jax: 0.10.0
libtpu: 0.0.40
codegen_flags: <defaults>
</compile_context>

<pallas_src>
import math
import jax
import jax.numpy as jnp
import numpy as np
from jax.experimental import pallas as pl
from jax.experimental.pallas import tpu as pltpu

# ----------------------------- config (small) -------------------------------
BATCH = 2
SEQ = 8
BS = BATCH * SEQ          # batch folded into the sublane axis
HIDDEN = 32
NUM_HEADS = 4
HEAD_DIM = HIDDEN // NUM_HEADS
FFN = 4 * HIDDEN
NUM_LAYERS = 2
VOCAB = 100
TYPE_VOCAB = 2
LABEL_NUM = 5
LN_EPS = 1e-12
PAD_OUT = 128             # lane-dense fused (cls | logits | zero-pad) output width


# ------------------------------ shared helpers -------------------------------
def _layernorm_2pass(x, gamma, beta):
    """Reference-style LayerNorm (two passes)."""
    mean = jnp.mean(x, axis=-1, keepdims=True)
    var = jnp.mean((x - mean) ** 2, axis=-1, keepdims=True)
    return (x - mean) * jax.lax.rsqrt(var + LN_EPS) * gamma + beta


def _layernorm_1pass(x, gamma, beta):
    """Single-pass LayerNorm: var = E[x^2] - E[x]^2 (one fewer elementwise pass)."""
    inv_n = 1.0 / x.shape[-1]
    mean = jnp.sum(x, axis=-1, keepdims=True) * inv_n
    ex2 = jnp.sum(x * x, axis=-1, keepdims=True) * inv_n
    var = ex2 - mean * mean
    return (x - mean) * jax.lax.rsqrt(var + LN_EPS) * gamma + beta


# --------------------------- fused forward kernel ----------------------------
def model_kernel(x_ref, mask_ref, gvec_ref,
                 wqkv_ref, wo_ref, w1_ref, w2_ref, lvec_ref,
                 whead_ref, out_ref):
    # Embedding LayerNorm on the whole (B*S, H) slab.
    x = _layernorm_1pass(x_ref[...], gvec_ref[0:1, :HIDDEN], gvec_ref[1:2, :HIDDEN])

    # Hoist mask broadcast out of the layer loop (JAX does not CSE broadcasts).
    maskb = jnp.broadcast_to(mask_ref[...], (NUM_HEADS, BS, BS))

    def split_heads(t):  # (BS, H) -> (nh, BS, hd): static lane slices + major-axis stack
        return jnp.stack(
            [t[:, h * HEAD_DIM:(h + 1) * HEAD_DIM] for h in range(NUM_HEADS)], axis=0)

    # Toy size: static unroll with all weights VMEM-resident.
    # TODO(synk): for real BERT-base (768/12L) stream one layer of bf16 weights
    # per grid step ('arbitrary' axis / emit_pipeline) to fit v7x's 64 MiB VMEM.
    for l in range(NUM_LAYERS):
        vec = lvec_ref[l]                       # (8, 128) per-layer bias/LN slab
        bqkv = vec[0:1, :3 * HIDDEN]
        bo = vec[1:2, :HIDDEN]
        b1 = vec[2:3, :FFN]
        b2 = vec[3:4, :HIDDEN]

        # --- fused QKV: one (BS, H) @ (H, 3H) matmul (scale folded into Q cols) ---
        qkv = jnp.dot(x, wqkv_ref[l], preferred_element_type=jnp.float32) + bqkv
        q = split_heads(qkv[:, :HIDDEN])
        k = split_heads(qkv[:, HIDDEN:2 * HIDDEN])
        v = split_heads(qkv[:, 2 * HIDDEN:])

        # --- attention, batched over heads ---
        s = jnp.einsum("hqd,hkd->hqk", q, k,
                       preferred_element_type=jnp.float32) + maskb
        s = s - jnp.max(s, axis=-1, keepdims=True)
        p = jnp.exp(s)
        p = p / jnp.sum(p, axis=-1, keepdims=True)          # exact division
        ctx = jnp.einsum("hqk,hkd->hqd", p, v,
                         preferred_element_type=jnp.float32)  # (nh, BS, hd)
        ctx = jnp.concatenate([ctx[h] for h in range(NUM_HEADS)], axis=-1)  # (BS, H)

        # --- output projection: ONE (BS, H) @ (H, H) dot against original wo ---
        attn = jnp.dot(ctx, wo_ref[l], preferred_element_type=jnp.float32) + bo
        x1 = _layernorm_1pass(x + attn, vec[4:5, :HIDDEN], vec[5:6, :HIDDEN])

        # --- feed-forward ---
        h1 = jnp.dot(x1, w1_ref[l], preferred_element_type=jnp.float32) + b1
        # TODO(synk): standard BERT uses exact erf GELU; tanh approximation used here.
        h1 = jax.nn.gelu(h1, approximate=True)
        h2 = jnp.dot(h1, w2_ref[l], preferred_element_type=jnp.float32) + b2
        x = _layernorm_1pass(x1 + h2, vec[6:7, :HIDDEN], vec[7:8, :HIDDEN])

    # --- fused lane-dense head on all B*S rows: [cls | logits | 0] @ 128 lanes ---
    # (all rows computed -> 2 full-sublane unmasked vreg stores; wrapper picks CLS rows)
    out_ref[...] = (jnp.dot(x, whead_ref[...], preferred_element_type=jnp.float32)
                    + gvec_ref[2:3, :])


# ------------------------------- parameters ----------------------------------
def init_params(key):
    def normal(k, shape, scale=0.02):
        return scale * jax.random.normal(k, shape, dtype=jnp.float32)

    keys = iter(jax.random.split(key, 5 + NUM_LAYERS * 16))
    params = {
        "word_emb": normal(next(keys), (VOCAB, HIDDEN)),
        "pos_emb": normal(next(keys), (SEQ, HIDDEN)),
        "type_emb": normal(next(keys), (TYPE_VOCAB, HIDDEN)),
        "emb_ln_g": jnp.ones((1, HIDDEN), jnp.float32),
        "emb_ln_b": jnp.zeros((1, HIDDEN), jnp.float32),
        # nn.Linear(H, label_num): weight (L, H), bias (L,)
        "lin_w": normal(next(keys), (LABEL_NUM, HIDDEN)),
        "lin_b": normal(next(keys), (LABEL_NUM,)),
        "layers": [],
    }
    for _ in range(NUM_LAYERS):
        lp = {
            "wq": normal(next(keys), (HIDDEN, HIDDEN)),
            "bq": normal(next(keys), (1, HIDDEN)),
            "wk": normal(next(keys), (HIDDEN, HIDDEN)),
            "bk": normal(next(keys), (1, HIDDEN)),
            "wv": normal(next(keys), (HIDDEN, HIDDEN)),
            "bv": normal(next(keys), (1, HIDDEN)),
            "wo": normal(next(keys), (HIDDEN, HIDDEN)),
            "bo": normal(next(keys), (1, HIDDEN)),
            "ln1_g": 1.0 + normal(next(keys), (1, HIDDEN), 0.05),
            "ln1_b": normal(next(keys), (1, HIDDEN)),
            "w1": normal(next(keys), (HIDDEN, FFN)),
            "b1": normal(next(keys), (1, FFN)),
            "w2": normal(next(keys), (FFN, HIDDEN)),
            "b2": normal(next(keys), (1, HIDDEN)),
            "ln2_g": 1.0 + normal(next(keys), (1, HIDDEN), 0.05),
            "ln2_b": normal(next(keys), (1, HIDDEN)),
        }
        params["layers"].append(lp)
    return params


def pack_params(params):
    """Repack weights into the kernel's consolidated, lane-dense layout."""
    H = HIDDEN
    scale = 1.0 / math.sqrt(HEAD_DIM)
    L = params["layers"]

    packed = {
        "word_emb": params["word_emb"],
        "pos_emb": params["pos_emb"],
        "type_emb": params["type_emb"],
        # fused QKV with 1/sqrt(hd) folded into the Q columns: (L, H, 3H)
        "wqkv": jnp.stack([jnp.concatenate(
            [lp["wq"] * scale, lp["wk"], lp["wv"]], axis=1) for lp in L]),
        "wo": jnp.stack([lp["wo"] for lp in L]),      # (L, H, H)
        "w1": jnp.stack([lp["w1"] for lp in L]),      # (L, H, FFN)
        "w2": jnp.stack([lp["w2"] for lp in L]),      # (L, FFN, H)
    }

    # Per-layer biases + LN params packed into one (L, 8, 128) slab.
    lvec = np.zeros((NUM_LAYERS, 8, 128), np.float32)
    for i, lp in enumerate(L):
        lvec[i, 0, :3 * H] = np.concatenate(
            [np.asarray(lp["bq"][0]) * scale, np.asarray(lp["bk"][0]),
             np.asarray(lp["bv"][0])])
        lvec[i, 1, :H] = np.asarray(lp["bo"][0])
        lvec[i, 2, :FFN] = np.asarray(lp["b1"][0])
        lvec[i, 3, :H] = np.asarray(lp["b2"][0])
        lvec[i, 4, :H] = np.asarray(lp["ln1_g"][0])
        lvec[i, 5, :H] = np.asarray(lp["ln1_b"][0])
        lvec[i, 6, :H] = np.asarray(lp["ln2_g"][0])
        lvec[i, 7, :H] = np.asarray(lp["ln2_b"][0])
    packed["lvec"] = jnp.asarray(lvec)

    # Global vectors: embedding-LN gamma/beta + fused-head bias, one (8, 128) slab.
    gvec = np.zeros((8, 128), np.float32)
    gvec[0, :H] = np.asarray(params["emb_ln_g"][0])
    gvec[1, :H] = np.asarray(params["emb_ln_b"][0])
    gvec[2, H:H + LABEL_NUM] = np.asarray(params["lin_b"])
    packed["gvec"] = jnp.asarray(gvec)

    # Fused lane-dense head:  x @ [I_H | W_lin^T | 0]  (kept f32 so cls is exact)
    w_head = np.zeros((H, PAD_OUT), np.float32)
    w_head[:, :H] = np.eye(H, dtype=np.float32)
    w_head[:, H:H + LABEL_NUM] = np.asarray(params["lin_w"]).T
    packed["w_head"] = jnp.asarray(w_head)
    return packed


# ------------------------------ forward (glue) --------------------------------
def simcse_forward(packed, input_ids, attention_mask, token_type_ids):
    """Equivalent of SimcseModel.forward with pooling='cls', labels=None."""
    p = packed
    # Embedding gathers stay in plain JAX (glue); everything after runs in ONE
    # fused Pallas kernel with the batch folded into the sublane axis.
    positions = jnp.arange(SEQ)
    emb = (p["word_emb"][input_ids]
           + p["pos_emb"][positions][None, :, :]
           + p["type_emb"][token_type_ids]).astype(jnp.float32)
    emb = emb.reshape(BS, HIDDEN)

    # Block-diagonal additive mask over the folded batch: a query attends only
    # to the unmasked keys of its own sample (BERT-style 0 / -1e4).
    batch_idx = jnp.repeat(jnp.arange(BATCH), SEQ)
    same_sample = batch_idx[:, None] == batch_idx[None, :]
    key_ok = attention_mask.astype(jnp.float32).reshape(-1)[None, :] > 0.5
    add_mask = jnp.where(same_sample & key_ok, 0.0, -10000.0).astype(jnp.float32)

    out = pl.pallas_call(
        model_kernel,
        out_shape=jax.ShapeDtypeStruct((BS, PAD_OUT), jnp.float32),
    )(emb, add_mask, p["gvec"],
      p["wqkv"], p["wo"], p["w1"], p["w2"], p["lvec"], p["w_head"])

    cls_rows = out[::SEQ]                       # CLS row of each sample -> (B, 128)
    cls_emb = cls_rows[:, :HIDDEN]
    logits = cls_rows[:, HIDDEN:HIDDEN + LABEL_NUM]
    # TODO(synk): AMsoftmax.loss_logic (labels != None branch) is an external,
    # undefined class in the source; only the labels=None path is implemented.
    # TODO(synk): pooling modes 'pooler'/'mix_cls'/'last-avg'/'first-last-avg'
    # and out.attentions are not implemented (checkpoint-specific outputs).
    return cls_emb, logits


# ------------------------- pure-JAX reference (check) -------------------------
def reference_forward(params, input_ids, attention_mask, token_type_ids):
    positions = jnp.arange(SEQ)
    x = (params["word_emb"][input_ids]
         + params["pos_emb"][positions][None, :, :]
         + params["type_emb"][token_type_ids])
    x = _layernorm_2pass(x, params["emb_ln_g"], params["emb_ln_b"])
    add_mask = (1.0 - attention_mask.astype(jnp.float32)) * -10000.0   # (B, S)
    scale = 1.0 / math.sqrt(HEAD_DIM)
    for lp in params["layers"]:
        q = x @ lp["wq"] + lp["bq"]
        k = x @ lp["wk"] + lp["bk"]
        v = x @ lp["wv"] + lp["bv"]

        def split(t):
            return t.reshape(BATCH, SEQ, NUM_HEADS, HEAD_DIM).transpose(0, 2, 1, 3)

        s = jnp.einsum("bhsd,bhtd->bhst", split(q), split(k)) * scale
        s = s + add_mask[:, None, None, :]
        p = jax.nn.softmax(s, axis=-1)
        ctx = jnp.einsum("bhst,bhtd->bhsd", p, split(v))
        ctx = ctx.transpose(0, 2, 1, 3).reshape(BATCH, SEQ, HIDDEN)
        x1 = _layernorm_2pass(x + ctx @ lp["wo"] + lp["bo"], lp["ln1_g"], lp["ln1_b"])
        h = jax.nn.gelu(x1 @ lp["w1"] + lp["b1"], approximate=True)
        x = _layernorm_2pass(x1 + h @ lp["w2"] + lp["b2"], lp["ln2_g"], lp["ln2_b"])
    cls = x[:, 0, :]
    logits = cls @ params["lin_w"].T + params["lin_b"][None, :]
    return cls, logits


# ----------------------------------- main --------------------------------------
if __name__ == "__main__":
    key = jax.random.PRNGKey(0)
    k_ids, k_params = jax.random.split(key)

    input_ids = jax.random.randint(k_ids, (BATCH, SEQ), 0, VOCAB, dtype=jnp.int32)
    attention_mask = jnp.ones((BATCH, SEQ), dtype=jnp.float32)
    attention_mask = attention_mask.at[1, SEQ - 2:].set(0.0)   # exercise masking
    token_type_ids = jnp.zeros((BATCH, SEQ), dtype=jnp.int32)

    params = init_params(k_params)
    packed = pack_params(params)

    cls_emb, logits = simcse_forward(packed, input_ids, attention_mask, token_type_ids)
    jax.block_until_ready((cls_emb, logits))

    assert cls_emb.shape == (BATCH, HIDDEN)
    assert logits.shape == (BATCH, LABEL_NUM)
    assert bool(jnp.all(jnp.isfinite(cls_emb))) and bool(jnp.all(jnp.isfinite(logits)))

    # Numerical check against a pure-JAX reference (exact softmax; only
    # single-pass-LN / op-reassociation level f32 noise expected).
    ref_cls, ref_logits = reference_forward(params, input_ids, attention_mask,
                                            token_type_ids)
    np.testing.assert_allclose(np.asarray(cls_emb), np.asarray(ref_cls),
                               rtol=1e-3, atol=1e-3)
    np.testing.assert_allclose(np.asarray(logits), np.asarray(ref_logits),
                               rtol=1e-3, atol=1e-3)
    print("KERNEL_OK")
</pallas_src>

<mosaic_0001>
module attributes {stable_mosaic.version = 11 : i64} {
  func.func @model_kernel(%arg0: memref<16x32xf32, #tpu.memory_space<vmem>>, %arg1: memref<16x16xf32, #tpu.memory_space<vmem>>, %arg2: memref<8x128xf32, #tpu.memory_space<vmem>>, %arg3: memref<2x32x96xf32, #tpu.memory_space<vmem>>, %arg4: memref<2x32x32xf32, #tpu.memory_space<vmem>>, %arg5: memref<2x32x128xf32, #tpu.memory_space<vmem>>, %arg6: memref<2x128x32xf32, #tpu.memory_space<vmem>>, %arg7: memref<2x8x128xf32, #tpu.memory_space<vmem>>, %arg8: memref<32x128xf32, #tpu.memory_space<vmem>>, %arg9: memref<16x128xf32, #tpu.memory_space<vmem>>) attributes {dimension_semantics = [], scalar_prefetch = 0 : i64, scratch_operands = 0 : i64, tpu.core_type = #tpu.core_type<tc>} {
    %c0 = arith.constant 0 : index
    %c0_0 = arith.constant 0 : index
    %0 = vector.load %arg0[%c0, %c0_0] : memref<16x32xf32, #tpu.memory_space<vmem>>, vector<16x32xf32>
    %c0_1 = arith.constant 0 : index
    %c0_2 = arith.constant 0 : index
    %1 = vector.load %arg2[%c0_1, %c0_2] : memref<8x128xf32, #tpu.memory_space<vmem>>, vector<1x32xf32>
    %c1 = arith.constant 1 : index
    %c0_3 = arith.constant 0 : index
    %2 = vector.load %arg2[%c1, %c0_3] : memref<8x128xf32, #tpu.memory_space<vmem>>, vector<1x32xf32>
    %cst = arith.constant dense<0.000000e+00> : vector<16xf32>
    %3 = vector.multi_reduction <add>, %0, %cst [1] : vector<16x32xf32> to vector<16xf32>
    %4 = vector.shape_cast %3 : vector<16xf32> to vector<16x1xf32>
    %cst_4 = arith.constant 3.125000e-02 : f32
    %5 = vector.broadcast %cst_4 : f32 to vector<16x1xf32>
    %6 = arith.mulf %4, %5 : vector<16x1xf32>
    %7 = arith.mulf %0, %0 : vector<16x32xf32>
    %cst_5 = arith.constant dense<0.000000e+00> : vector<16xf32>
    %8 = vector.multi_reduction <add>, %7, %cst_5 [1] : vector<16x32xf32> to vector<16xf32>
    %9 = vector.shape_cast %8 : vector<16xf32> to vector<16x1xf32>
    %cst_6 = arith.constant 3.125000e-02 : f32
    %10 = vector.broadcast %cst_6 : f32 to vector<16x1xf32>
    %11 = arith.mulf %9, %10 : vector<16x1xf32>
    %12 = arith.mulf %6, %6 : vector<16x1xf32>
    %13 = arith.subf %11, %12 : vector<16x1xf32>
    %14 = vector.broadcast %6 : vector<16x1xf32> to vector<16x32xf32>
    %15 = arith.subf %0, %14 : vector<16x32xf32>
    %cst_7 = arith.constant 9.99999996E-13 : f32
    %16 = vector.broadcast %cst_7 : f32 to vector<16x1xf32>
    %17 = arith.addf %13, %16 : vector<16x1xf32>
    %18 = math.rsqrt %17 : vector<16x1xf32>
    %19 = vector.broadcast %18 : vector<16x1xf32> to vector<16x32xf32>
    %20 = arith.mulf %15, %19 : vector<16x32xf32>
    %21 = vector.broadcast %1 : vector<1x32xf32> to vector<16x32xf32>
    %22 = arith.mulf %20, %21 : vector<16x32xf32>
    %23 = vector.broadcast %2 : vector<1x32xf32> to vector<16x32xf32>
    %24 = arith.addf %22, %23 : vector<16x32xf32>
    %c0_8 = arith.constant 0 : index
    %c0_9 = arith.constant 0 : index
    %25 = vector.load %arg1[%c0_8, %c0_9] : memref<16x16xf32, #tpu.memory_space<vmem>>, vector<16x16xf32>
    %26 = vector.shape_cast %25 : vector<16x16xf32> to vector<1x16x16xf32>
    %27 = vector.broadcast %26 : vector<1x16x16xf32> to vector<4x16x16xf32>
    %c0_10 = arith.constant 0 : index
    %c0_11 = arith.constant 0 : index
    %c0_12 = arith.constant 0 : index
    %28 = vector.load %arg7[%c0_10, %c0_11, %c0_12] : memref<2x8x128xf32, #tpu.memory_space<vmem>>, vector<1x8x128xf32>
    %29 = vector.shape_cast %28 : vector<1x8x128xf32> to vector<8x128xf32>
    %30 = vector.extract_strided_slice %29 {offsets = [0, 0], sizes = [1, 96], strides = [1, 1]} : vector<8x128xf32> to vector<1x96xf32>
    %31 = vector.extract_strided_slice %29 {offsets = [1, 0], sizes = [1, 32], strides = [1, 1]} : vector<8x128xf32> to vector<1x32xf32>
    %32 = vector.extract_strided_slice %29 {offsets = [2, 0], sizes = [1, 128], strides = [1, 1]} : vector<8x128xf32> to vector<1x128xf32>
    %33 = vector.extract_strided_slice %29 {offsets = [3, 0], sizes = [1, 32], strides = [1, 1]} : vector<8x128xf32> to vector<1x32xf32>
    %c0_13 = arith.constant 0 : index
    %c0_14 = arith.constant 0 : index
    %c0_15 = arith.constant 0 : index
    %34 = vector.load %arg3[%c0_13, %c0_14, %c0_15] : memref<2x32x96xf32, #tpu.memory_space<vmem>>, vector<1x32x96xf32>
    %35 = vector.shape_cast %34 : vector<1x32x96xf32> to vector<32x96xf32>
    %cst_16 = arith.constant dense<0.000000e+00> : vector<16x96xf32>
    %36 = tpu.matmul %24, %35, %cst_16 {dimension_numbers = #tpu.dot_dimension_numbers<[1], [0], [0], [1], [0, 0, 1, 1], [], []>} : vector<16x32xf32>, vector<32x96xf32>, vector<16x96xf32> -> vector<16x96xf32>
    %37 = vector.broadcast %30 : vector<1x96xf32> to vector<16x96xf32>
    %38 = arith.addf %36, %37 : vector<16x96xf32>
    %39 = vector.extract_strided_slice %38 {offsets = [0, 0], sizes = [16, 32], strides = [1, 1]} : vector<16x96xf32> to vector<16x32xf32>
    %40 = vector.extract_strided_slice %39 {offsets = [0, 0], sizes = [16, 8], strides = [1, 1]} : vector<16x32xf32> to vector<16x8xf32>
    %41 = vector.extract_strided_slice %39 {offsets = [0, 8], sizes = [16, 8], strides = [1, 1]} : vector<16x32xf32> to vector<16x8xf32>
    %42 = vector.extract_strided_slice %39 {offsets = [0, 16], sizes = [16, 8], strides = [1, 1]} : vector<16x32xf32> to vector<16x8xf32>
    %43 = vector.extract_strided_slice %39 {offsets = [0, 24], sizes = [16, 8], strides = [1, 1]} : vector<16x32xf32> to vector<16x8xf32>
    %44 = vector.shape_cast %40 : vector<16x8xf32> to vector<1x16x8xf32>
    %45 = vector.shape_cast %41 : vector<16x8xf32> to vector<1x16x8xf32>
    %46 = vector.shape_cast %42 : vector<16x8xf32> to vector<1x16x8xf32>
    %47 = vector.shape_cast %43 : vector<16x8xf32> to vector<1x16x8xf32>
    %48 = tpu.concatenate %44, %45, %46, %47 in 0 : vector<1x16x8xf32>, vector<1x16x8xf32>, vector<1x16x8xf32>, vector<1x16x8xf32> -> vector<4x16x8xf32>
    %49 = vector.extract_strided_slice %38 {offsets = [0, 32], sizes = [16, 32], strides = [1, 1]} : vector<16x96xf32> to vector<16x32xf32>
    %50 = vector.extract_strided_slice %49 {offsets = [0, 0], sizes = [16, 8], strides = [1, 1]} : vector<16x32xf32> to vector<16x8xf32>
    %51 = vector.extract_strided_slice %49 {offsets = [0, 8], sizes = [16, 8], strides = [1, 1]} : vector<16x32xf32> to vector<16x8xf32>
    %52 = vector.extract_strided_slice %49 {offsets = [0, 16], sizes = [16, 8], strides = [1, 1]} : vector<16x32xf32> to vector<16x8xf32>
    %53 = vector.extract_strided_slice %49 {offsets = [0, 24], sizes = [16, 8], strides = [1, 1]} : vector<16x32xf32> to vector<16x8xf32>
    %54 = vector.shape_cast %50 : vector<16x8xf32> to vector<1x16x8xf32>
    %55 = vector.shape_cast %51 : vector<16x8xf32> to vector<1x16x8xf32>
    %56 = vector.shape_cast %52 : vector<16x8xf32> to vector<1x16x8xf32>
    %57 = vector.shape_cast %53 : vector<16x8xf32> to vector<1x16x8xf32>
    %58 = tpu.concatenate %54, %55, %56, %57 in 0 : vector<1x16x8xf32>, vector<1x16x8xf32>, vector<1x16x8xf32>, vector<1x16x8xf32> -> vector<4x16x8xf32>
    %59 = vector.extract_strided_slice %38 {offsets = [0, 64], sizes = [16, 32], strides = [1, 1]} : vector<16x96xf32> to vector<16x32xf32>
    %60 = vector.extract_strided_slice %59 {offsets = [0, 0], sizes = [16, 8], strides = [1, 1]} : vector<16x32xf32> to vector<16x8xf32>
    %61 = vector.extract_strided_slice %59 {offsets = [0, 8], sizes = [16, 8], strides = [1, 1]} : vector<16x32xf32> to vector<16x8xf32>
    %62 = vector.extract_strided_slice %59 {offsets = [0, 16], sizes = [16, 8], strides = [1, 1]} : vector<16x32xf32> to vector<16x8xf32>
    %63 = vector.extract_strided_slice %59 {offsets = [0, 24], sizes = [16, 8], strides = [1, 1]} : vector<16x32xf32> to vector<16x8xf32>
    %64 = vector.shape_cast %60 : vector<16x8xf32> to vector<1x16x8xf32>
    %65 = vector.shape_cast %61 : vector<16x8xf32> to vector<1x16x8xf32>
    %66 = vector.shape_cast %62 : vector<16x8xf32> to vector<1x16x8xf32>
    %67 = vector.shape_cast %63 : vector<16x8xf32> to vector<1x16x8xf32>
    %68 = tpu.concatenate %64, %65, %66, %67 in 0 : vector<1x16x8xf32>, vector<1x16x8xf32>, vector<1x16x8xf32>, vector<1x16x8xf32> -> vector<4x16x8xf32>
    "tpu.trace_start"() <{level = 10 : i32, message = "hqd,hkd->hqk"}> : () -> ()
    %cst_17 = arith.constant dense<0.000000e+00> : vector<4x16x16xf32>
    %69 = tpu.matmul %48, %58, %cst_17 {dimension_numbers = #tpu.dot_dimension_numbers<[2], [2], [1], [1], [0, 0, 0, 1, 1, 1], [0], [0]>} : vector<4x16x8xf32>, vector<4x16x8xf32>, vector<4x16x16xf32> -> vector<4x16x16xf32>
    "tpu.trace_stop"() : () -> ()
    %70 = arith.addf %69, %27 : vector<4x16x16xf32>
    %cst_18 = arith.constant dense<0xFF800000> : vector<4x16xf32>
    %71 = vector.multi_reduction <maximumf>, %70, %cst_18 [2] : vector<4x16x16xf32> to vector<4x16xf32>
    %72 = vector.shape_cast %71 : vector<4x16xf32> to vector<4x16x1xf32>
    %73 = vector.broadcast %72 : vector<4x16x1xf32> to vector<4x16x16xf32>
    %74 = arith.subf %70, %73 : vector<4x16x16xf32>
    %75 = math.exp %74 : vector<4x16x16xf32>
    %cst_19 = arith.constant dense<0.000000e+00> : vector<4x16xf32>
    %76 = vector.multi_reduction <add>, %75, %cst_19 [2] : vector<4x16x16xf32> to vector<4x16xf32>
    %77 = vector.shape_cast %76 : vector<4x16xf32> to vector<4x16x1xf32>
    %78 = vector.broadcast %77 : vector<4x16x1xf32> to vector<4x16x16xf32>
    %79 = arith.divf %75, %78 : vector<4x16x16xf32>
    "tpu.trace_start"() <{level = 10 : i32, message = "hqk,hkd->hqd"}> : () -> ()
    %cst_20 = arith.constant dense<0.000000e+00> : vector<4x16x8xf32>
    %80 = tpu.matmul %79, %68, %cst_20 {dimension_numbers = #tpu.dot_dimension_numbers<[2], [1], [1], [2], [0, 0, 0, 1, 1, 2], [0], [0]>} : vector<4x16x16xf32>, vector<4x16x8xf32>, vector<4x16x8xf32> -> vector<4x16x8xf32>
    "tpu.trace_stop"() : () -> ()
    %81 = vector.extract_strided_slice %80 {offsets = [0, 0, 0], sizes = [1, 16, 8], strides = [1, 1, 1]} : vector<4x16x8xf32> to vector<1x16x8xf32>
    %82 = vector.shape_cast %81 : vector<1x16x8xf32> to vector<16x8xf32>
    %83 = vector.extract_strided_slice %80 {offsets = [1, 0, 0], sizes = [1, 16, 8], strides = [1, 1, 1]} : vector<4x16x8xf32> to vector<1x16x8xf32>
    %84 = vector.shape_cast %83 : vector<1x16x8xf32> to vector<16x8xf32>
    %85 = vector.extract_strided_slice %80 {offsets = [2, 0, 0], sizes = [1, 16, 8], strides = [1, 1, 1]} : vector<4x16x8xf32> to vector<1x16x8xf32>
    %86 = vector.shape_cast %85 : vector<1x16x8xf32> to vector<16x8xf32>
    %87 = vector.extract_strided_slice %80 {offsets = [3, 0, 0], sizes = [1, 16, 8], strides = [1, 1, 1]} : vector<4x16x8xf32> to vector<1x16x8xf32>
    %88 = vector.shape_cast %87 : vector<1x16x8xf32> to vector<16x8xf32>
    %89 = tpu.concatenate %82, %84, %86, %88 in 1 : vector<16x8xf32>, vector<16x8xf32>, vector<16x8xf32>, vector<16x8xf32> -> vector<16x32xf32>
    %c0_21 = arith.constant 0 : index
    %c0_22 = arith.constant 0 : index
    %c0_23 = arith.constant 0 : index
    %90 = vector.load %arg4[%c0_21, %c0_22, %c0_23] : memref<2x32x32xf32, #tpu.memory_space<vmem>>, vector<1x32x32xf32>
    %91 = vector.shape_cast %90 : vector<1x32x32xf32> to vector<32x32xf32>
    %cst_24 = arith.constant dense<0.000000e+00> : vector<16x32xf32>
    %92 = tpu.matmul %89, %91, %cst_24 {dimension_numbers = #tpu.dot_dimension_numbers<[1], [0], [0], [1], [0, 0, 1, 1], [], []>} : vector<16x32xf32>, vector<32x32xf32>, vector<16x32xf32> -> vector<16x32xf32>
    %93 = vector.broadcast %31 : vector<1x32xf32> to vector<16x32xf32>
    %94 = arith.addf %92, %93 : vector<16x32xf32>
    %95 = arith.addf %24, %94 : vector<16x32xf32>
    %96 = vector.extract_strided_slice %29 {offsets = [4, 0], sizes = [1, 32], strides = [1, 1]} : vector<8x128xf32> to vector<1x32xf32>
    %97 = vector.extract_strided_slice %29 {offsets = [5, 0], sizes = [1, 32], strides = [1, 1]} : vector<8x128xf32> to vector<1x32xf32>
    %cst_25 = arith.constant dense<0.000000e+00> : vector<16xf32>
    %98 = vector.multi_reduction <add>, %95, %cst_25 [1] : vector<16x32xf32> to vector<16xf32>
    %99 = vector.shape_cast %98 : vector<16xf32> to vector<16x1xf32>
    %cst_26 = arith.constant 3.125000e-02 : f32
    %100 = vector.broadcast %cst_26 : f32 to vector<16x1xf32>
    %101 = arith.mulf %99, %100 : vector<16x1xf32>
    %102 = arith.mulf %95, %95 : vector<16x32xf32>
    %cst_27 = arith.constant dense<0.000000e+00> : vector<16xf32>
    %103 = vector.multi_reduction <add>, %102, %cst_27 [1] : vector<16x32xf32> to vector<16xf32>
    %104 = vector.shape_cast %103 : vector<16xf32> to vector<16x1xf32>
    %cst_28 = arith.constant 3.125000e-02 : f32
    %105 = vector.broadcast %cst_28 : f32 to vector<16x1xf32>
    %106 = arith.mulf %104, %105 : vector<16x1xf32>
    %107 = arith.mulf %101, %101 : vector<16x1xf32>
    %108 = arith.subf %106, %107 : vector<16x1xf32>
    %109 = vector.broadcast %101 : vector<16x1xf32> to vector<16x32xf32>
    %110 = arith.subf %95, %109 : vector<16x32xf32>
    %cst_29 = arith.constant 9.99999996E-13 : f32
    %111 = vector.broadcast %cst_29 : f32 to vector<16x1xf32>
    %112 = arith.addf %108, %111 : vector<16x1xf32>
    %113 = math.rsqrt %112 : vector<16x1xf32>
    %114 = vector.broadcast %113 : vector<16x1xf32> to vector<16x32xf32>
    %115 = arith.mulf %110, %114 : vector<16x32xf32>
    %116 = vector.broadcast %96 : vector<1x32xf32> to vector<16x32xf32>
    %117 = arith.mulf %115, %116 : vector<16x32xf32>
    %118 = vector.broadcast %97 : vector<1x32xf32> to vector<16x32xf32>
    %119 = arith.addf %117, %118 : vector<16x32xf32>
    %c0_30 = arith.constant 0 : index
    %c0_31 = arith.constant 0 : index
    %c0_32 = arith.constant 0 : index
    %120 = vector.load %arg5[%c0_30, %c0_31, %c0_32] : memref<2x32x128xf32, #tpu.memory_space<vmem>>, vector<1x32x128xf32>
    %121 = vector.shape_cast %120 : vector<1x32x128xf32> to vector<32x128xf32>
    %cst_33 = arith.constant dense<0.000000e+00> : vector<16x128xf32>
    %122 = tpu.matmul %119, %121, %cst_33 {dimension_numbers = #tpu.dot_dimension_numbers<[1], [0], [0], [1], [0, 0, 1, 1], [], []>} : vector<16x32xf32>, vector<32x128xf32>, vector<16x128xf32> -> vector<16x128xf32>
    %123 = vector.broadcast %32 : vector<1x128xf32> to vector<16x128xf32>
    %124 = arith.addf %122, %123 : vector<16x128xf32>
    %125 = arith.mulf %124, %124 : vector<16x128xf32>
    %126 = arith.mulf %124, %125 : vector<16x128xf32>
    %cst_34 = arith.constant 4.471500e-02 : f32
    %127 = vector.broadcast %cst_34 : f32 to vector<16x128xf32>
    %128 = arith.mulf %127, %126 : vector<16x128xf32>
    %129 = arith.addf %124, %128 : vector<16x128xf32>
    %cst_35 = arith.constant 0.797884583 : f32
    %130 = vector.broadcast %cst_35 : f32 to vector<16x128xf32>
    %131 = arith.mulf %130, %129 : vector<16x128xf32>
    %132 = math.tanh %131 : vector<16x128xf32>
    %cst_36 = arith.constant 1.000000e+00 : f32
    %133 = vector.broadcast %cst_36 : f32 to vector<16x128xf32>
    %134 = arith.addf %133, %132 : vector<16x128xf32>
    %cst_37 = arith.constant 5.000000e-01 : f32
    %135 = vector.broadcast %cst_37 : f32 to vector<16x128xf32>
    %136 = arith.mulf %135, %134 : vector<16x128xf32>
    %137 = arith.mulf %124, %136 : vector<16x128xf32>
    %c0_38 = arith.constant 0 : index
    %c0_39 = arith.constant 0 : index
    %c0_40 = arith.constant 0 : index
    %138 = vector.load %arg6[%c0_38, %c0_39, %c0_40] : memref<2x128x32xf32, #tpu.memory_space<vmem>>, vector<1x128x32xf32>
    %139 = vector.shape_cast %138 : vector<1x128x32xf32> to vector<128x32xf32>
    %cst_41 = arith.constant dense<0.000000e+00> : vector<16x32xf32>
    %140 = tpu.matmul %137, %139, %cst_41 {dimension_numbers = #tpu.dot_dimension_numbers<[1], [0], [0], [1], [0, 0, 1, 1], [], []>} : vector<16x128xf32>, vector<128x32xf32>, vector<16x32xf32> -> vector<16x32xf32>
    %141 = vector.broadcast %33 : vector<1x32xf32> to vector<16x32xf32>
    %142 = arith.addf %140, %141 : vector<16x32xf32>
    %143 = arith.addf %119, %142 : vector<16x32xf32>
    %144 = vector.extract_strided_slice %29 {offsets = [6, 0], sizes = [1, 32], strides = [1, 1]} : vector<8x128xf32> to vector<1x32xf32>
    %145 = vector.extract_strided_slice %29 {offsets = [7, 0], sizes = [1, 32], strides = [1, 1]} : vector<8x128xf32> to vector<1x32xf32>
    %cst_42 = arith.constant dense<0.000000e+00> : vector<16xf32>
    %146 = vector.multi_reduction <add>, %143, %cst_42 [1] : vector<16x32xf32> to vector<16xf32>
    %147 = vector.shape_cast %146 : vector<16xf32> to vector<16x1xf32>
    %cst_43 = arith.constant 3.125000e-02 : f32
    %148 = vector.broadcast %cst_43 : f32 to vector<16x1xf32>
    %149 = arith.mulf %147, %148 : vector<16x1xf32>
    %150 = arith.mulf %143, %143 : vector<16x32xf32>
    %cst_44 = arith.constant dense<0.000000e+00> : vector<16xf32>
    %151 = vector.multi_reduction <add>, %150, %cst_44 [1] : vector<16x32xf32> to vector<16xf32>
    %152 = vector.shape_cast %151 : vector<16xf32> to vector<16x1xf32>
    %cst_45 = arith.constant 3.125000e-02 : f32
    %153 = vector.broadcast %cst_45 : f32 to vector<16x1xf32>
    %154 = arith.mulf %152, %153 : vector<16x1xf32>
    %155 = arith.mulf %149, %149 : vector<16x1xf32>
    %156 = arith.subf %154, %155 : vector<16x1xf32>
    %157 = vector.broadcast %149 : vector<16x1xf32> to vector<16x32xf32>
    %158 = arith.subf %143, %157 : vector<16x32xf32>
    %cst_46 = arith.constant 9.99999996E-13 : f32
    %159 = vector.broadcast %cst_46 : f32 to vector<16x1xf32>
    %160 = arith.addf %156, %159 : vector<16x1xf32>
    %161 = math.rsqrt %160 : vector<16x1xf32>
    %162 = vector.broadcast %161 : vector<16x1xf32> to vector<16x32xf32>
    %163 = arith.mulf %158, %162 : vector<16x32xf32>
    %164 = vector.broadcast %144 : vector<1x32xf32> to vector<16x32xf32>
    %165 = arith.mulf %163, %164 : vector<16x32xf32>
    %166 = vector.broadcast %145 : vector<1x32xf32> to vector<16x32xf32>
    %167 = arith.addf %165, %166 : vector<16x32xf32>
    %c1_47 = arith.constant 1 : index
    %c0_48 = arith.constant 0 : index
    %c0_49 = arith.constant 0 : index
    %168 = vector.load %arg7[%c1_47, %c0_48, %c0_49] : memref<2x8x128xf32, #tpu.memory_space<vmem>>, vector<1x8x128xf32>
    %169 = vector.shape_cast %168 : vector<1x8x128xf32> to vector<8x128xf32>
    %170 = vector.extract_strided_slice %169 {offsets = [0, 0], sizes = [1, 96], strides = [1, 1]} : vector<8x128xf32> to vector<1x96xf32>
    %171 = vector.extract_strided_slice %169 {offsets = [1, 0], sizes = [1, 32], strides = [1, 1]} : vector<8x128xf32> to vector<1x32xf32>
    %172 = vector.extract_strided_slice %169 {offsets = [2, 0], sizes = [1, 128], strides = [1, 1]} : vector<8x128xf32> to vector<1x128xf32>
    %173 = vector.extract_strided_slice %169 {offsets = [3, 0], sizes = [1, 32], strides = [1, 1]} : vector<8x128xf32> to vector<1x32xf32>
    %c1_50 = arith.constant 1 : index
    %c0_51 = arith.constant 0 : index
    %c0_52 = arith.constant 0 : index
    %174 = vector.load %arg3[%c1_50, %c0_51, %c0_52] : memref<2x32x96xf32, #tpu.memory_space<vmem>>, vector<1x32x96xf32>
    %175 = vector.shape_cast %174 : vector<1x32x96xf32> to vector<32x96xf32>
    %cst_53 = arith.constant dense<0.000000e+00> : vector<16x96xf32>
    %176 = tpu.matmul %167, %175, %cst_53 {dimension_numbers = #tpu.dot_dimension_numbers<[1], [0], [0], [1], [0, 0, 1, 1], [], []>} : vector<16x32xf32>, vector<32x96xf32>, vector<16x96xf32> -> vector<16x96xf32>
    %177 = vector.broadcast %170 : vector<1x96xf32> to vector<16x96xf32>
    %178 = arith.addf %176, %177 : vector<16x96xf32>
    %179 = vector.extract_strided_slice %178 {offsets = [0, 0], sizes = [16, 32], strides = [1, 1]} : vector<16x96xf32> to vector<16x32xf32>
    %180 = vector.extract_strided_slice %179 {offsets = [0, 0], sizes = [16, 8], strides = [1, 1]} : vector<16x32xf32> to vector<16x8xf32>
    %181 = vector.extract_strided_slice %179 {offsets = [0, 8], sizes = [16, 8], strides = [1, 1]} : vector<16x32xf32> to vector<16x8xf32>
    %182 = vector.extract_strided_slice %179 {offsets = [0, 16], sizes = [16, 8], strides = [1, 1]} : vector<16x32xf32> to vector<16x8xf32>
    %183 = vector.extract_strided_slice %179 {offsets = [0, 24], sizes = [16, 8], strides = [1, 1]} : vector<16x32xf32> to vector<16x8xf32>
    %184 = vector.shape_cast %180 : vector<16x8xf32> to vector<1x16x8xf32>
    %185 = vector.shape_cast %181 : vector<16x8xf32> to vector<1x16x8xf32>
    %186 = vector.shape_cast %182 : vector<16x8xf32> to vector<1x16x8xf32>
    %187 = vector.shape_cast %183 : vector<16x8xf32> to vector<1x16x8xf32>
    %188 = tpu.concatenate %184, %185, %186, %187 in 0 : vector<1x16x8xf32>, vector<1x16x8xf32>, vector<1x16x8xf32>, vector<1x16x8xf32> -> vector<4x16x8xf32>
    %189 = vector.extract_strided_slice %178 {offsets = [0, 32], sizes = [16, 32], strides = [1, 1]} : vector<16x96xf32> to vector<16x32xf32>
    %190 = vector.extract_strided_slice %189 {offsets = [0, 0], sizes = [16, 8], strides = [1, 1]} : vector<16x32xf32> to vector<16x8xf32>
    %191 = vector.extract_strided_slice %189 {offsets = [0, 8], sizes = [16, 8], strides = [1, 1]} : vector<16x32xf32> to vector<16x8xf32>
    %192 = vector.extract_strided_slice %189 {offsets = [0, 16], sizes = [16, 8], strides = [1, 1]} : vector<16x32xf32> to vector<16x8xf32>
    %193 = vector.extract_strided_slice %189 {offsets = [0, 24], sizes = [16, 8], strides = [1, 1]} : vector<16x32xf32> to vector<16x8xf32>
    %194 = vector.shape_cast %190 : vector<16x8xf32> to vector<1x16x8xf32>
    %195 = vector.shape_cast %191 : vector<16x8xf32> to vector<1x16x8xf32>
    %196 = vector.shape_cast %192 : vector<16x8xf32> to vector<1x16x8xf32>
    %197 = vector.shape_cast %193 : vector<16x8xf32> to vector<1x16x8xf32>
    %198 = tpu.concatenate %194, %195, %196, %197 in 0 : vector<1x16x8xf32>, vector<1x16x8xf32>, vector<1x16x8xf32>, vector<1x16x8xf32> -> vector<4x16x8xf32>
    %199 = vector.extract_strided_slice %178 {offsets = [0, 64], sizes = [16, 32], strides = [1, 1]} : vector<16x96xf32> to vector<16x32xf32>
    %200 = vector.extract_strided_slice %199 {offsets = [0, 0], sizes = [16, 8], strides = [1, 1]} : vector<16x32xf32> to vector<16x8xf32>
    %201 = vector.extract_strided_slice %199 {offsets = [0, 8], sizes = [16, 8], strides = [1, 1]} : vector<16x32xf32> to vector<16x8xf32>
    %202 = vector.extract_strided_slice %199 {offsets = [0, 16], sizes = [16, 8], strides = [1, 1]} : vector<16x32xf32> to vector<16x8xf32>
    %203 = vector.extract_strided_slice %199 {offsets = [0, 24], sizes = [16, 8], strides = [1, 1]} : vector<16x32xf32> to vector<16x8xf32>
    %204 = vector.shape_cast %200 : vector<16x8xf32> to vector<1x16x8xf32>
    %205 = vector.shape_cast %201 : vector<16x8xf32> to vector<1x16x8xf32>
    %206 = vector.shape_cast %202 : vector<16x8xf32> to vector<1x16x8xf32>
    %207 = vector.shape_cast %203 : vector<16x8xf32> to vector<1x16x8xf32>
    %208 = tpu.concatenate %204, %205, %206, %207 in 0 : vector<1x16x8xf32>, vector<1x16x8xf32>, vector<1x16x8xf32>, vector<1x16x8xf32> -> vector<4x16x8xf32>
    "tpu.trace_start"() <{level = 10 : i32, message = "hqd,hkd->hqk"}> : () -> ()
    %cst_54 = arith.constant dense<0.000000e+00> : vector<4x16x16xf32>
    %209 = tpu.matmul %188, %198, %cst_54 {dimension_numbers = #tpu.dot_dimension_numbers<[2], [2], [1], [1], [0, 0, 0, 1, 1, 1], [0], [0]>} : vector<4x16x8xf32>, vector<4x16x8xf32>, vector<4x16x16xf32> -> vector<4x16x16xf32>
    "tpu.trace_stop"() : () -> ()
    %210 = arith.addf %209, %27 : vector<4x16x16xf32>
    %cst_55 = arith.constant dense<0xFF800000> : vector<4x16xf32>
    %211 = vector.multi_reduction <maximumf>, %210, %cst_55 [2] : vector<4x16x16xf32> to vector<4x16xf32>
    %212 = vector.shape_cast %211 : vector<4x16xf32> to vector<4x16x1xf32>
    %213 = vector.broadcast %212 : vector<4x16x1xf32> to vector<4x16x16xf32>
    %214 = arith.subf %210, %213 : vector<4x16x16xf32>
    %215 = math.exp %214 : vector<4x16x16xf32>
    %cst_56 = arith.constant dense<0.000000e+00> : vector<4x16xf32>
    %216 = vector.multi_reduction <add>, %215, %cst_56 [2] : vector<4x16x16xf32> to vector<4x16xf32>
    %217 = vector.shape_cast %216 : vector<4x16xf32> to vector<4x16x1xf32>
    %218 = vector.broadcast %217 : vector<4x16x1xf32> to vector<4x16x16xf32>
    %219 = arith.divf %215, %218 : vector<4x16x16xf32>
    "tpu.trace_start"() <{level = 10 : i32, message = "hqk,hkd->hqd"}> : () -> ()
    %cst_57 = arith.constant dense<0.000000e+00> : vector<4x16x8xf32>
    %220 = tpu.matmul %219, %208, %cst_57 {dimension_numbers = #tpu.dot_dimension_numbers<[2], [1], [1], [2], [0, 0, 0, 1, 1, 2], [0], [0]>} : vector<4x16x16xf32>, vector<4x16x8xf32>, vector<4x16x8xf32> -> vector<4x16x8xf32>
    "tpu.trace_stop"() : () -> ()
    %221 = vector.extract_strided_slice %220 {offsets = [0, 0, 0], sizes = [1, 16, 8], strides = [1, 1, 1]} : vector<4x16x8xf32> to vector<1x16x8xf32>
    %222 = vector.shape_cast %221 : vector<1x16x8xf32> to vector<16x8xf32>
    %223 = vector.extract_strided_slice %220 {offsets = [1, 0, 0], sizes = [1, 16, 8], strides = [1, 1, 1]} : vector<4x16x8xf32> to vector<1x16x8xf32>
    %224 = vector.shape_cast %223 : vector<1x16x8xf32> to vector<16x8xf32>
    %225 = vector.extract_strided_slice %220 {offsets = [2, 0, 0], sizes = [1, 16, 8], strides = [1, 1, 1]} : vector<4x16x8xf32> to vector<1x16x8xf32>
    %226 = vector.shape_cast %225 : vector<1x16x8xf32> to vector<16x8xf32>
    %227 = vector.extract_strided_slice %220 {offsets = [3, 0, 0], sizes = [1, 16, 8], strides = [1, 1, 1]} : vector<4x16x8xf32> to vector<1x16x8xf32>
    %228 = vector.shape_cast %227 : vector<1x16x8xf32> to vector<16x8xf32>
    %229 = tpu.concatenate %222, %224, %226, %228 in 1 : vector<16x8xf32>, vector<16x8xf32>, vector<16x8xf32>, vector<16x8xf32> -> vector<16x32xf32>
    %c1_58 = arith.constant 1 : index
    %c0_59 = arith.constant 0 : index
    %c0_60 = arith.constant 0 : index
    %230 = vector.load %arg4[%c1_58, %c0_59, %c0_60] : memref<2x32x32xf32, #tpu.memory_space<vmem>>, vector<1x32x32xf32>
    %231 = vector.shape_cast %230 : vector<1x32x32xf32> to vector<32x32xf32>
    %cst_61 = arith.constant dense<0.000000e+00> : vector<16x32xf32>
    %232 = tpu.matmul %229, %231, %cst_61 {dimension_numbers = #tpu.dot_dimension_numbers<[1], [0], [0], [1], [0, 0, 1, 1], [], []>} : vector<16x32xf32>, vector<32x32xf32>, vector<16x32xf32> -> vector<16x32xf32>
    %233 = vector.broadcast %171 : vector<1x32xf32> to vector<16x32xf32>
    %234 = arith.addf %232, %233 : vector<16x32xf32>
    %235 = arith.addf %167, %234 : vector<16x32xf32>
    %236 = vector.extract_strided_slice %169 {offsets = [4, 0], sizes = [1, 32], strides = [1, 1]} : vector<8x128xf32> to vector<1x32xf32>
    %237 = vector.extract_strided_slice %169 {offsets = [5, 0], sizes = [1, 32], strides = [1, 1]} : vector<8x128xf32> to vector<1x32xf32>
    %cst_62 = arith.constant dense<0.000000e+00> : vector<16xf32>
    %238 = vector.multi_reduction <add>, %235, %cst_62 [1] : vector<16x32xf32> to vector<16xf32>
    %239 = vector.shape_cast %238 : vector<16xf32> to vector<16x1xf32>
    %cst_63 = arith.constant 3.125000e-02 : f32
    %240 = vector.broadcast %cst_63 : f32 to vector<16x1xf32>
    %241 = arith.mulf %239, %240 : vector<16x1xf32>
    %242 = arith.mulf %235, %235 : vector<16x32xf32>
    %cst_64 = arith.constant dense<0.000000e+00> : vector<16xf32>
    %243 = vector.multi_reduction <add>, %242, %cst_64 [1] : vector<16x32xf32> to vector<16xf32>
    %244 = vector.shape_cast %243 : vector<16xf32> to vector<16x1xf32>
    %cst_65 = arith.constant 3.125000e-02 : f32
    %245 = vector.broadcast %cst_65 : f32 to vector<16x1xf32>
    %246 = arith.mulf %244, %245 : vector<16x1xf32>
    %247 = arith.mulf %241, %241 : vector<16x1xf32>
    %248 = arith.subf %246, %247 : vector<16x1xf32>
    %249 = vector.broadcast %241 : vector<16x1xf32> to vector<16x32xf32>
    %250 = arith.subf %235, %249 : vector<16x32xf32>
    %cst_66 = arith.constant 9.99999996E-13 : f32
    %251 = vector.broadcast %cst_66 : f32 to vector<16x1xf32>
    %252 = arith.addf %248, %251 : vector<16x1xf32>
    %253 = math.rsqrt %252 : vector<16x1xf32>
    %254 = vector.broadcast %253 : vector<16x1xf32> to vector<16x32xf32>
    %255 = arith.mulf %250, %254 : vector<16x32xf32>
    %256 = vector.broadcast %236 : vector<1x32xf32> to vector<16x32xf32>
    %257 = arith.mulf %255, %256 : vector<16x32xf32>
    %258 = vector.broadcast %237 : vector<1x32xf32> to vector<16x32xf32>
    %259 = arith.addf %257, %258 : vector<16x32xf32>
    %c1_67 = arith.constant 1 : index
    %c0_68 = arith.constant 0 : index
    %c0_69 = arith.constant 0 : index
    %260 = vector.load %arg5[%c1_67, %c0_68, %c0_69] : memref<2x32x128xf32, #tpu.memory_space<vmem>>, vector<1x32x128xf32>
    %261 = vector.shape_cast %260 : vector<1x32x128xf32> to vector<32x128xf32>
    %cst_70 = arith.constant dense<0.000000e+00> : vector<16x128xf32>
    %262 = tpu.matmul %259, %261, %cst_70 {dimension_numbers = #tpu.dot_dimension_numbers<[1], [0], [0], [1], [0, 0, 1, 1], [], []>} : vector<16x32xf32>, vector<32x128xf32>, vector<16x128xf32> -> vector<16x128xf32>
    %263 = vector.broadcast %172 : vector<1x128xf32> to vector<16x128xf32>
    %264 = arith.addf %262, %263 : vector<16x128xf32>
    %265 = arith.mulf %264, %264 : vector<16x128xf32>
    %266 = arith.mulf %264, %265 : vector<16x128xf32>
    %cst_71 = arith.constant 4.471500e-02 : f32
    %267 = vector.broadcast %cst_71 : f32 to vector<16x128xf32>
    %268 = arith.mulf %267, %266 : vector<16x128xf32>
    %269 = arith.addf %264, %268 : vector<16x128xf32>
    %cst_72 = arith.constant 0.797884583 : f32
    %270 = vector.broadcast %cst_72 : f32 to vector<16x128xf32>
    %271 = arith.mulf %270, %269 : vector<16x128xf32>
    %272 = math.tanh %271 : vector<16x128xf32>
    %cst_73 = arith.constant 1.000000e+00 : f32
    %273 = vector.broadcast %cst_73 : f32 to vector<16x128xf32>
    %274 = arith.addf %273, %272 : vector<16x128xf32>
    %cst_74 = arith.constant 5.000000e-01 : f32
    %275 = vector.broadcast %cst_74 : f32 to vector<16x128xf32>
    %276 = arith.mulf %275, %274 : vector<16x128xf32>
    %277 = arith.mulf %264, %276 : vector<16x128xf32>
    %c1_75 = arith.constant 1 : index
    %c0_76 = arith.constant 0 : index
    %c0_77 = arith.constant 0 : index
    %278 = vector.load %arg6[%c1_75, %c0_76, %c0_77] : memref<2x128x32xf32, #tpu.memory_space<vmem>>, vector<1x128x32xf32>
    %279 = vector.shape_cast %278 : vector<1x128x32xf32> to vector<128x32xf32>
    %cst_78 = arith.constant dense<0.000000e+00> : vector<16x32xf32>
    %280 = tpu.matmul %277, %279, %cst_78 {dimension_numbers = #tpu.dot_dimension_numbers<[1], [0], [0], [1], [0, 0, 1, 1], [], []>} : vector<16x128xf32>, vector<128x32xf32>, vector<16x32xf32> -> vector<16x32xf32>
    %281 = vector.broadcast %173 : vector<1x32xf32> to vector<16x32xf32>
    %282 = arith.addf %280, %281 : vector<16x32xf32>
    %283 = arith.addf %259, %282 : vector<16x32xf32>
    %284 = vector.extract_strided_slice %169 {offsets = [6, 0], sizes = [1, 32], strides = [1, 1]} : vector<8x128xf32> to vector<1x32xf32>
    %285 = vector.extract_strided_slice %169 {offsets = [7, 0], sizes = [1, 32], strides = [1, 1]} : vector<8x128xf32> to vector<1x32xf32>
    %cst_79 = arith.constant dense<0.000000e+00> : vector<16xf32>
    %286 = vector.multi_reduction <add>, %283, %cst_79 [1] : vector<16x32xf32> to vector<16xf32>
    %287 = vector.shape_cast %286 : vector<16xf32> to vector<16x1xf32>
    %cst_80 = arith.constant 3.125000e-02 : f32
    %288 = vector.broadcast %cst_80 : f32 to vector<16x1xf32>
    %289 = arith.mulf %287, %288 : vector<16x1xf32>
    %290 = arith.mulf %283, %283 : vector<16x32xf32>
    %cst_81 = arith.constant dense<0.000000e+00> : vector<16xf32>
    %291 = vector.multi_reduction <add>, %290, %cst_81 [1] : vector<16x32xf32> to vector<16xf32>
    %292 = vector.shape_cast %291 : vector<16xf32> to vector<16x1xf32>
    %cst_82 = arith.constant 3.125000e-02 : f32
    %293 = vector.broadcast %cst_82 : f32 to vector<16x1xf32>
    %294 = arith.mulf %292, %293 : vector<16x1xf32>
    %295 = arith.mulf %289, %289 : vector<16x1xf32>
    %296 = arith.subf %294, %295 : vector<16x1xf32>
    %297 = vector.broadcast %289 : vector<16x1xf32> to vector<16x32xf32>
    %298 = arith.subf %283, %297 : vector<16x32xf32>
    %cst_83 = arith.constant 9.99999996E-13 : f32
    %299 = vector.broadcast %cst_83 : f32 to vector<16x1xf32>
    %300 = arith.addf %296, %299 : vector<16x1xf32>
    %301 = math.rsqrt %300 : vector<16x1xf32>
    %302 = vector.broadcast %301 : vector<16x1xf32> to vector<16x32xf32>
    %303 = arith.mulf %298, %302 : vector<16x32xf32>
    %304 = vector.broadcast %284 : vector<1x32xf32> to vector<16x32xf32>
    %305 = arith.mulf %303, %304 : vector<16x32xf32>
    %306 = vector.broadcast %285 : vector<1x32xf32> to vector<16x32xf32>
    %307 = arith.addf %305, %306 : vector<16x32xf32>
    %c0_84 = arith.constant 0 : index
    %c0_85 = arith.constant 0 : index
    %308 = vector.load %arg8[%c0_84, %c0_85] : memref<32x128xf32, #tpu.memory_space<vmem>>, vector<32x128xf32>
    %cst_86 = arith.constant dense<0.000000e+00> : vector<16x128xf32>
    %309 = tpu.matmul %307, %308, %cst_86 {dimension_numbers = #tpu.dot_dimension_numbers<[1], [0], [0], [1], [0, 0, 1, 1], [], []>} : vector<16x32xf32>, vector<32x128xf32>, vector<16x128xf32> -> vector<16x128xf32>
    %c2 = arith.constant 2 : index
    %c0_87 = arith.constant 0 : index
    %310 = vector.load %arg2[%c2, %c0_87] : memref<8x128xf32, #tpu.memory_space<vmem>>, vector<1x128xf32>
    %311 = vector.broadcast %310 : vector<1x128xf32> to vector<16x128xf32>
    %312 = arith.addf %309, %311 : vector<16x128xf32>
    %c0_88 = arith.constant 0 : index
    %c0_89 = arith.constant 0 : index
    %313 = vector.load %arg9[%c0_88, %c0_89] : memref<16x128xf32, #tpu.memory_space<vmem>>, vector<16x128xf32>
    tpu.vector_store %arg9[%c0_88, %c0_89], %312 {strides = array<i32>} : memref<16x128xf32, #tpu.memory_space<vmem>>, vector<16x128xf32>,
    return
  }
}

</mosaic_0001>

<llo_original>
// kernel: tpu_custom_call.1
$region0: #{tpu_custom_call.1}
  #allocation0 [shape = 'u32[]', space=smem, size = 0x4, offset = 0x4, fixed_abs, tag = 'smem constant byte address 0x4 - core index']
  #allocation1 [shape = 'u32[144,128]{1,0:T(1,128)}', space=vmem, size = 0x12000, scoped, tag = 'internal scratch']
  %s0 = inlined_call_operand.vmem [shape: f32[16,32], index: 0, kind: input, shape index: {}]
  %s1 = inlined_call_operand.vmem [shape: f32[16,16], index: 1, kind: input, shape index: {}]
  %s2 = inlined_call_operand.vmem [shape: f32[8,128], index: 2, kind: input, shape index: {}]
  %s3 = inlined_call_operand.vmem [shape: f32[2,32,96], index: 3, kind: input, shape index: {}]
  %s4 = inlined_call_operand.vmem [shape: f32[2,32,32], index: 4, kind: input, shape index: {}]
  %s5 = inlined_call_operand.vmem [shape: f32[2,32,128], index: 5, kind: input, shape index: {}]
  %s6 = inlined_call_operand.vmem [shape: f32[2,128,32], index: 6, kind: input, shape index: {}]
  %s7 = inlined_call_operand.vmem [shape: f32[2,8,128], index: 7, kind: input, shape index: {}]
  %s8 = inlined_call_operand.vmem [shape: f32[32,128], index: 8, kind: input, shape index: {}]
  %s9 = inlined_call_operand.hbm [shape: f32[16,128], index: 9, kind: output, shape index: {}]
  %s10 = sld [smem:[#allocation0]]
  $region46: #{tpu_custom_call.1} parent=0
    _
  %s12 = ssub.s32 1, %s10
  %s13 = scalar_select 0, %s12, %s10
  $region1: #{tpu_custom_call.1} parent=0
    #allocation2 [shape = 'u8[8192]{0}', space=vmem, size = 0x2000, scoped, tag = 'output window, operand 0, single buffered']
    #allocation3 [shape = 's32[1]{0}', space=sflag, size = 0x4, scoped, tag = 'scoped memory for tpu_custom_call.1']
    %14 = vsyncpa [#allocation3], 0
    // Predicated region
    $region2: #{tpu_custom_call.1} parent=1 // pred_check
      _
    $region3: #{tpu_custom_call.1} parent=1 // pred_check_branch
      %16 = sbr.rel (0) target = $region5
    $region4: #{tpu_custom_call.1} parent=1 // pred_region
      _
    $region5: #{tpu_custom_call.1} parent=1 // pred_fallthru
      _
    // Predicated region
    $region6: #{tpu_custom_call.1} parent=1 // pred_check
      _
    $region7: #{tpu_custom_call.1} parent=1 // pred_check_branch
      %18 = sbr.rel (0) target = $region9
    $region8: #{tpu_custom_call.1} parent=1 // pred_region
      _
    $region9: #{tpu_custom_call.1} parent=1 // pred_fallthru
      _
    // Predicated region
    $region10: #{tpu_custom_call.1} parent=1 // pred_check
      _
    $region11: #{tpu_custom_call.1} parent=1 // pred_check_branch
      %20 = sbr.rel (0) target = $region13
    $region12: #{tpu_custom_call.1} parent=1 // pred_region
      _
    $region13: #{tpu_custom_call.1} parent=1 // pred_fallthru
      _
    // Predicated region
    $region14: #{tpu_custom_call.1} parent=1 // pred_check
      _
    $region15: #{tpu_custom_call.1} parent=1 // pred_check_branch
      %22 = sbr.rel (0) target = $region17
    $region16: #{tpu_custom_call.1} parent=1 // pred_region
      _
    $region17: #{tpu_custom_call.1} parent=1 // pred_fallthru
      _
    // Predicated region
    $region18: #{tpu_custom_call.1} parent=1 // pred_check
      _
    $region19: #{tpu_custom_call.1} parent=1 // pred_check_branch
      %24 = sbr.rel (0) target = $region21
    $region20: #{tpu_custom_call.1} parent=1 // pred_region
      _
    $region21: #{tpu_custom_call.1} parent=1 // pred_fallthru
      _
    // Predicated region
    $region22: #{tpu_custom_call.1} parent=1 // pred_check
      _
    $region23: #{tpu_custom_call.1} parent=1 // pred_check_branch
      %26 = sbr.rel (0) target = $region25
    $region24: #{tpu_custom_call.1} parent=1 // pred_region
      _
    $region25: #{tpu_custom_call.1} parent=1 // pred_fallthru
      _
    // Predicated region
    $region26: #{tpu_custom_call.1} parent=1 // pred_check
      _
    $region27: #{tpu_custom_call.1} parent=1 // pred_check_branch
      %28 = sbr.rel (0) target = $region29
    $region28: #{tpu_custom_call.1} parent=1 // pred_region
      _
    $region29: #{tpu_custom_call.1} parent=1 // pred_fallthru
      _
    // Predicated region
    $region30: #{tpu_custom_call.1} parent=1 // pred_check
      _
    $region31: #{tpu_custom_call.1} parent=1 // pred_check_branch
      %30 = sbr.rel (0) target = $region33
    $region32: #{tpu_custom_call.1} parent=1 // pred_region
      _
    $region33: #{tpu_custom_call.1} parent=1 // pred_fallthru
      _
    // Predicated region
    $region34: #{tpu_custom_call.1} parent=1 // pred_check
      _
    $region35: #{tpu_custom_call.1} parent=1 // pred_check_branch
      %32 = sbr.rel (0) target = $region37
    $region36: #{tpu_custom_call.1} parent=1 // pred_region
      _
    $region37: #{tpu_custom_call.1} parent=1 // pred_fallthru
      _
    %v33 = vld [vmem:[%s0] sm:$0xff]
    %v34 = vld [vmem:[%s0 + $0x8] sm:$0xff]
    %v35 = vld [vmem:[%s2] sm:$0x1]
    %v36 = vld [vmem:[%s2 + $0x1] sm:$0x1]
    %vm37 = vcmask 261120
    %v38 = vsel %vm37, %v33, 0.0
    %39 = vadd.xlane.f32.xlu0 %v38
    %v40 = vpop.xlane.xlu0 %39
    %v41 = vsel %vm37, %v34, 0.0
    %42 = vadd.xlane.f32.xlu0 %v41
    %v43 = vpop.xlane.xlu0 %42
    %v44 = vmul.f32 %v40, 0.03125
    %v45 = vmul.f32 %v43, 0.03125
    %v46 = vmul.f32 %v33, %v33
    %v47 = vmul.f32 %v34, %v34
    %v48 = vsel %vm37, %v46, 0.0
    %49 = vadd.xlane.f32.xlu0 %v48
    %v50 = vpop.xlane.xlu0 %49
    %v51 = vsel %vm37, %v47, 0.0
    %52 = vadd.xlane.f32.xlu0 %v51
    %v53 = vpop.xlane.xlu0 %52
    %v54 = vmul.f32 %v50, 0.03125
    %v55 = vmul.f32 %v53, 0.03125
    %v56 = vmul.f32 %v44, %v44
    %v57 = vmul.f32 %v45, %v45
    %v58 = vsub.f32 %v54, %v56
    %v59 = vsub.f32 %v55, %v57
    %v60 = vsub.f32 %v33, %v44
    %v61 = vsub.f32 %v34, %v45
    %v62 = vadd.f32 %v58, 1e-12
    %v63 = vadd.f32 %v59, 1e-12
    %v64 = vrsqrt.pop %v62
    %v65 = vrsqrt.pop %v63
    %v66 = vmul.f32 %v60, %v64
    %v67 = vmul.f32 %v61, %v65
    %v68 = vlaneseq
    %v69 = vshrl.u32 %v68, 7
    %v70 = vsub.s32 0, %v69
    %v71 = vrot.slane %v35, %v70
    %v72 = vmul.f32 %v66, %v71
    %v73 = vmul.f32 %v67, %v71
    %v74 = vlaneseq
    %v75 = vshrl.u32 %v74, 7
    %v76 = vsub.s32 0, %v75
    %v77 = vrot.slane %v36, %v76
    %v78 = vadd.f32 %v72, %v77
    %v79 = vadd.f32 %v73, %v77
    %v80 = vld [vmem:[%s1] sm:$0xff]
    %v81 = vld [vmem:[%s1 + $0x8] sm:$0xff]
    %v82 = vld [vmem:[%s7] sm:$0xff]
    %v83 = vld [vmem:[%s3] sm:$0xff]
    %v84 = vld [vmem:[%s3 + $0x8] sm:$0xff]
    %v85 = vld [vmem:[%s3 + $0x10] sm:$0xff]
    %v86 = vld [vmem:[%s3 + $0x18] sm:$0xff]
    %v87 = vlaneseq
    %v88 = vshrl.u32 %v87, 7
    %v89 = vsub.s32 0, %v88
    %v90 = vrot.slane %v82, %v89
    %v92 = vsel %vm37, %v78, 0
    %v95 = vsel %vm37, %v79, 0
    %97 = vmatprep.subr.mxu0 0.0
    %98 = vmatpush1.msra.mxu0 0.0
    %99 = vmatprep.subr.mxu0 0.0
    %100 = vmatpush1.msra.mxu0 0.0
    %101 = vmatprep.subr.mxu0 0.0
    %102 = vmatpush1.msra.mxu0 0.0
    %103 = vmatprep.subr.mxu0 0.0
    %104 = vmatpush1.msra.mxu0 0.0
    %105 = vmatprep.subr.mxu0 0.0
    %106 = vmatpush1.msra.mxu0 0.0
    %107 = vmatprep.subr.mxu0 0.0
    %108 = vmatpush1.msra.mxu0 0.0
    %109 = vmatprep.subr.mxu0 0.0
    %110 = vmatpush1.msra.mxu0 0.0
    %111 = vmatprep.subr.mxu0 0.0
    %112 = vmatpush1.msra.mxu0 0.0
    %113 = vmatprep.subr.mxu0 0.0
    %114 = vmatpush1.msra.mxu0 0.0
    %115 = vmatprep.subr.mxu0 0.0
    %116 = vmatpush1.msra.mxu0 0.0
    %117 = vmatprep.subr.mxu0 0.0
    %118 = vmatpush1.msra.mxu0 0.0
    %119 = vmatprep.subr.mxu0 0.0
    %120 = vmatpush1.msra.mxu0 0.0
    %121 = vmatprep.subr.mxu0 0.0
    %122 = vmatpush1.msra.mxu0 %v86
    %123 = vmatprep.subr.mxu0 0.0
    %124 = vmatpush1.msra.mxu0 %v85
    %125 = vmatprep.subr.mxu0 0.0
    %126 = vmatpush1.msra.mxu0 %v84
    %127 = vmatprep.subr.mxu0 0.0
    %128 = vmatpush1.msra.mxu0 %v83
    %129 = vmatprep.subr.mxu0 0.0
    %130 = vmatpush2.msra.mxu0 0.0
    %131 = vmatprep.subr.mxu0 0.0
    %132 = vmatpush2.msra.mxu0 0.0
    %133 = vmatprep.subr.mxu0 0.0
    %134 = vmatpush2.msra.mxu0 0.0
    %135 = vmatprep.subr.mxu0 0.0
    %136 = vmatpush2.msra.mxu0 0.0
    %137 = vmatprep.subr.mxu0 0.0
    %138 = vmatpush2.msra.mxu0 0.0
    %139 = vmatprep.subr.mxu0 0.0
    %140 = vmatpush2.msra.mxu0 0.0
    %141 = vmatprep.subr.mxu0 0.0
    %142 = vmatpush2.msra.mxu0 0.0
    %143 = vmatprep.subr.mxu0 0.0
    %144 = vmatpush2.msra.mxu0 0.0
    %145 = vmatprep.subr.mxu0 0.0
    %146 = vmatpush2.msra.mxu0 0.0
    %147 = vmatprep.subr.mxu0 0.0
    %148 = vmatpush2.msra.mxu0 0.0
    %149 = vmatprep.subr.mxu0 0.0
    %150 = vmatpush2.msra.mxu0 0.0
    %151 = vmatprep.subr.mxu0 0.0
    %152 = vmatpush2.msra.mxu0 0.0
    %153 = vmatprep.subr.mxu0 0.0
    %154 = vmatpush2.msra.mxu0 0.0
    %155 = vmatprep.subr.mxu0 0.0
    %156 = vmatpush2.msra.mxu0 0.0
    %157 = vmatprep.subr.mxu0 0.0
    %158 = vmatpush2.msra.mxu0 0.0
    %159 = vmatprep.subr.mxu0 0.0
    %160 = vmatpush2.msra.mxu0 0.0
    %161 = vmatprep.mubr.f32.mxu0 0.0
    %162 = vmatmul.mubr.f32.gmra.mxu0 %v92
    %v163 = vpop.f32.mrf.mxu0
    %v164 = vadd.f32 %v90, %v163
    %v165 = vpop.f32.mrf.mxu0
    %166 = vmatprep.mubr.f32.mxu0 0.0
    %167 = vmatmul.mubr.f32.gmra.mxu0 %v95
    %v168 = vpop.f32.mrf.mxu0
    %v169 = vadd.f32 %v90, %v168
    %v170 = vpop.f32.mrf.mxu0
    %171 = vdwg.mxu0
    %174 = vrot.lane.b32.xlu0 %v164, 120
    %v175 = vpop.permute.xlu0 %174
    %176 = vrot.lane.b32.xlu0 %v169, 120
    %v177 = vpop.permute.xlu0 %176
    %178 = vrot.lane.b32.xlu0 %v164, 112
    %v179 = vpop.permute.xlu0 %178
    %180 = vrot.lane.b32.xlu0 %v169, 112
    %v181 = vpop.permute.xlu0 %180
    %182 = vrot.lane.b32.xlu0 %v164, 104
    %v183 = vpop.permute.xlu0 %182
    %184 = vrot.lane.b32.xlu0 %v169, 104
    %v185 = vpop.permute.xlu0 %184
    %186 = vrot.lane.b32.xlu0 %v164, 96
    %v187 = vpop.permute.xlu0 %186
    %188 = vrot.lane.b32.xlu0 %v169, 96
    %v189 = vpop.permute.xlu0 %188
    %vm190 = vcmask 64512
    %v191 = vsel %vm190, %v164, 0
    %v193 = vsel %vm190, %v169, 0
    %v195 = vsel %vm190, %v187, 0
    %v197 = vsel %vm190, %v189, 0
    %199 = vmatprep.subr.mxu0 0.0
    %200 = vmatpush1.xpose.msra.mxu0 0.0
    %201 = vmatprep.subr.mxu0 0.0
    %202 = vmatpush1.xpose.msra.mxu0 0.0
    %203 = vmatprep.subr.mxu0 0.0
    %204 = vmatpush1.xpose.msra.mxu0 0.0
    %205 = vmatprep.subr.mxu0 0.0
    %206 = vmatpush1.xpose.msra.mxu0 0.0
    %207 = vmatprep.subr.mxu0 0.0
    %208 = vmatpush1.xpose.msra.mxu0 0.0
    %209 = vmatprep.subr.mxu0 0.0
    %210 = vmatpush1.xpose.msra.mxu0 0.0
    %211 = vmatprep.subr.mxu0 0.0
    %212 = vmatpush1.xpose.msra.mxu0 0.0
    %213 = vmatprep.subr.mxu0 0.0
    %214 = vmatpush1.xpose.msra.mxu0 0.0
    %215 = vmatprep.subr.mxu0 0.0
    %216 = vmatpush1.xpose.msra.mxu0 0.0
    %217 = vmatprep.subr.mxu0 0.0
    %218 = vmatpush1.xpose.msra.mxu0 0.0
    %219 = vmatprep.subr.mxu0 0.0
    %220 = vmatpush1.xpose.msra.mxu0 0.0
    %221 = vmatprep.subr.mxu0 0.0
    %222 = vmatpush1.xpose.msra.mxu0 0.0
    %223 = vmatprep.subr.mxu0 0.0
    %224 = vmatpush1.xpose.msra.mxu0 0.0
    %225 = vmatprep.subr.mxu0 0.0
    %226 = vmatpush1.xpose.msra.mxu0 0.0
    %227 = vmatprep.subr.mxu0 0.0
    %228 = vmatpush1.xpose.msra.mxu0 %v197
    %229 = vmatprep.subr.mxu0 0.0
    %230 = vmatpush1.xpose.msra.mxu0 %v195
    %231 = vmatprep.subr.mxu0 0.0
    %232 = vmatpush2.xpose.msra.mxu0 0.0
    %233 = vmatprep.subr.mxu0 0.0
    %234 = vmatpush2.xpose.msra.mxu0 0.0
    %235 = vmatprep.subr.mxu0 0.0
    %236 = vmatpush2.xpose.msra.mxu0 0.0
    %237 = vmatprep.subr.mxu0 0.0
    %238 = vmatpush2.xpose.msra.mxu0 0.0
    %239 = vmatprep.subr.mxu0 0.0
    %240 = vmatpush2.xpose.msra.mxu0 0.0
    %241 = vmatprep.subr.mxu0 0.0
    %242 = vmatpush2.xpose.msra.mxu0 0.0
    %243 = vmatprep.subr.mxu0 0.0
    %244 = vmatpush2.xpose.msra.mxu0 0.0
    %245 = vmatprep.subr.mxu0 0.0
    %246 = vmatpush2.xpose.msra.mxu0 0.0
    %247 = vmatprep.subr.mxu0 0.0
    %248 = vmatpush2.xpose.msra.mxu0 0.0
    %249 = vmatprep.subr.mxu0 0.0
    %250 = vmatpush2.xpose.msra.mxu0 0.0
    %251 = vmatprep.subr.mxu0 0.0
    %252 = vmatpush2.xpose.msra.mxu0 0.0
    %253 = vmatprep.subr.mxu0 0.0
    %254 = vmatpush2.xpose.msra.mxu0 0.0
    %255 = vmatprep.subr.mxu0 0.0
    %256 = vmatpush2.xpose.msra.mxu0 0.0
    %257 = vmatprep.subr.mxu0 0.0
    %258 = vmatpush2.xpose.msra.mxu0 0.0
    %259 = vmatprep.subr.mxu0 0.0
    %260 = vmatpush2.xpose.msra.mxu0 0.0
    %261 = vmatprep.subr.mxu0 0.0
    %262 = vmatpush2.xpose.msra.mxu0 0.0
    %263 = vmatprep.mubr.f32.mxu0 0.0
    %264 = vmatmul.mubr.f32.gmra.mxu0 %v191
    %v265 = vpop.f32.mrf.mxu0
    %v266 = vadd.f32 %v80, %v265
    %v267 = vpop.f32.mrf.mxu0
    %268 = vmatprep.mubr.f32.mxu0 0.0
    %269 = vmatmul.mubr.f32.gmra.mxu0 %v193
    %v270 = vpop.f32.mrf.mxu0
    %v271 = vadd.f32 %v81, %v270
    %v272 = vpop.f32.mrf.mxu0
    %273 = vdwg.mxu0
    %274 = vrot.lane.b32.xlu0 %v175, 96
    %v275 = vpop.permute.xlu0 %274
    %276 = vrot.lane.b32.xlu0 %v177, 96
    %v277 = vpop.permute.xlu0 %276
    %v278 = vsel %vm190, %v175, 0
    %v280 = vsel %vm190, %v177, 0
    %v282 = vsel %vm190, %v275, 0
    %v284 = vsel %vm190, %v277, 0
    %286 = vmatprep.subr.mxu0 0.0
    %287 = vmatpush1.xpose.msra.mxu0 0.0
    %288 = vmatprep.subr.mxu0 0.0
    %289 = vmatpush1.xpose.msra.mxu0 0.0
    %290 = vmatprep.subr.mxu0 0.0
    %291 = vmatpush1.xpose.msra.mxu0 0.0
    %292 = vmatprep.subr.mxu0 0.0
    %293 = vmatpush1.xpose.msra.mxu0 0.0
    %294 = vmatprep.subr.mxu0 0.0
    %295 = vmatpush1.xpose.msra.mxu0 0.0
    %296 = vmatprep.subr.mxu0 0.0
    %297 = vmatpush1.xpose.msra.mxu0 0.0
    %298 = vmatprep.subr.mxu0 0.0
    %299 = vmatpush1.xpose.msra.mxu0 0.0
    %300 = vmatprep.subr.mxu0 0.0
    %301 = vmatpush1.xpose.msra.mxu0 0.0
    %302 = vmatprep.subr.mxu0 0.0
    %303 = vmatpush1.xpose.msra.mxu0 0.0
    %304 = vmatprep.subr.mxu0 0.0
    %305 = vmatpush1.xpose.msra.mxu0 0.0
    %306 = vmatprep.subr.mxu0 0.0
    %307 = vmatpush1.xpose.msra.mxu0 0.0
    %308 = vmatprep.subr.mxu0 0.0
    %309 = vmatpush1.xpose.msra.mxu0 0.0
    %310 = vmatprep.subr.mxu0 0.0
    %311 = vmatpush1.xpose.msra.mxu0 0.0
    %312 = vmatprep.subr.mxu0 0.0
    %313 = vmatpush1.xpose.msra.mxu0 0.0
    %314 = vmatprep.subr.mxu0 0.0
    %315 = vmatpush1.xpose.msra.mxu0 %v284
    %316 = vmatprep.subr.mxu0 0.0
    %317 = vmatpush1.xpose.msra.mxu0 %v282
    %318 = vmatprep.subr.mxu0 0.0
    %319 = vmatpush2.xpose.msra.mxu0 0.0
    %320 = vmatprep.subr.mxu0 0.0
    %321 = vmatpush2.xpose.msra.mxu0 0.0
    %322 = vmatprep.subr.mxu0 0.0
    %323 = vmatpush2.xpose.msra.mxu0 0.0
    %324 = vmatprep.subr.mxu0 0.0
    %325 = vmatpush2.xpose.msra.mxu0 0.0
    %326 = vmatprep.subr.mxu0 0.0
    %327 = vmatpush2.xpose.msra.mxu0 0.0
    %328 = vmatprep.subr.mxu0 0.0
    %329 = vmatpush2.xpose.msra.mxu0 0.0
    %330 = vmatprep.subr.mxu0 0.0
    %331 = vmatpush2.xpose.msra.mxu0 0.0
    %332 = vmatprep.subr.mxu0 0.0
    %333 = vmatpush2.xpose.msra.mxu0 0.0
    %334 = vmatprep.subr.mxu0 0.0
    %335 = vmatpush2.xpose.msra.mxu0 0.0
    %336 = vmatprep.subr.mxu0 0.0
    %337 = vmatpush2.xpose.msra.mxu0 0.0
    %338 = vmatprep.subr.mxu0 0.0
    %339 = vmatpush2.xpose.msra.mxu0 0.0
    %340 = vmatprep.subr.mxu0 0.0
    %341 = vmatpush2.xpose.msra.mxu0 0.0
    %342 = vmatprep.subr.mxu0 0.0
    %343 = vmatpush2.xpose.msra.mxu0 0.0
    %344 = vmatprep.subr.mxu0 0.0
    %345 = vmatpush2.xpose.msra.mxu0 0.0
    %346 = vmatprep.subr.mxu0 0.0
    %347 = vmatpush2.xpose.msra.mxu0 0.0
    %348 = vmatprep.subr.mxu0 0.0
    %349 = vmatpush2.xpose.msra.mxu0 0.0
    %350 = vmatprep.mubr.f32.mxu0 0.0
    %351 = vmatmul.mubr.f32.gmra.mxu0 %v278
    %v352 = vpop.f32.mrf.mxu0
    %v353 = vadd.f32 %v80, %v352
    %v354 = vpop.f32.mrf.mxu0
    %355 = vmatprep.mubr.f32.mxu0 0.0
    %356 = vmatmul.mubr.f32.gmra.mxu0 %v280
    %v357 = vpop.f32.mrf.mxu0
    %v358 = vadd.f32 %v81, %v357
    %v359 = vpop.f32.mrf.mxu0
    %360 = vdwg.mxu0
    %361 = vrot.lane.b32.xlu0 %v179, 96
    %v362 = vpop.permute.xlu0 %361
    %363 = vrot.lane.b32.xlu0 %v181, 96
    %v364 = vpop.permute.xlu0 %363
    %v365 = vsel %vm190, %v179, 0
    %v367 = vsel %vm190, %v181, 0
    %v369 = vsel %vm190, %v362, 0
    %v371 = vsel %vm190, %v364, 0
    %373 = vmatprep.subr.mxu0 0.0
    %374 = vmatpush1.xpose.msra.mxu0 0.0
    %375 = vmatprep.subr.mxu0 0.0
    %376 = vmatpush1.xpose.msra.mxu0 0.0
    %377 = vmatprep.subr.mxu0 0.0
    %378 = vmatpush1.xpose.msra.mxu0 0.0
    %379 = vmatprep.subr.mxu0 0.0
    %380 = vmatpush1.xpose.msra.mxu0 0.0
    %381 = vmatprep.subr.mxu0 0.0
    %382 = vmatpush1.xpose.msra.mxu0 0.0
    %383 = vmatprep.subr.mxu0 0.0
    %384 = vmatpush1.xpose.msra.mxu0 0.0
    %385 = vmatprep.subr.mxu0 0.0
    %386 = vmatpush1.xpose.msra.mxu0 0.0
    %387 = vmatprep.subr.mxu0 0.0
    %388 = vmatpush1.xpose.msra.mxu0 0.0
    %389 = vmatprep.subr.mxu0 0.0
    %390 = vmatpush1.xpose.msra.mxu0 0.0
    %391 = vmatprep.subr.mxu0 0.0
    %392 = vmatpush1.xpose.msra.mxu0 0.0
    %393 = vmatprep.subr.mxu0 0.0
    %394 = vmatpush1.xpose.msra.mxu0 0.0
    %395 = vmatprep.subr.mxu0 0.0
    %396 = vmatpush1.xpose.msra.mxu0 0.0
    %397 = vmatprep.subr.mxu0 0.0
    %398 = vmatpush1.xpose.msra.mxu0 0.0
    %399 = vmatprep.subr.mxu0 0.0
    %400 = vmatpush1.xpose.msra.mxu0 0.0
    %401 = vmatprep.subr.mxu0 0.0
    %402 = vmatpush1.xpose.msra.mxu0 %v371
    %403 = vmatprep.subr.mxu0 0.0
    %404 = vmatpush1.xpose.msra.mxu0 %v369
    %405 = vmatprep.subr.mxu0 0.0
    %406 = vmatpush2.xpose.msra.mxu0 0.0
    %407 = vmatprep.subr.mxu0 0.0
    %408 = vmatpush2.xpose.msra.mxu0 0.0
    %409 = vmatprep.subr.mxu0 0.0
    %410 = vmatpush2.xpose.msra.mxu0 0.0
    %411 = vmatprep.subr.mxu0 0.0
    %412 = vmatpush2.xpose.msra.mxu0 0.0
    %413 = vmatprep.subr.mxu0 0.0
    %414 = vmatpush2.xpose.msra.mxu0 0.0
    %415 = vmatprep.subr.mxu0 0.0
    %416 = vmatpush2.xpose.msra.mxu0 0.0
    %417 = vmatprep.subr.mxu0 0.0
    %418 = vmatpush2.xpose.msra.mxu0 0.0
    %419 = vmatprep.subr.mxu0 0.0
    %420 = vmatpush2.xpose.msra.mxu0 0.0
    %421 = vmatprep.subr.mxu0 0.0
    %422 = vmatpush2.xpose.msra.mxu0 0.0
    %423 = vmatprep.subr.mxu0 0.0
    %424 = vmatpush2.xpose.msra.mxu0 0.0
    %425 = vmatprep.subr.mxu0 0.0
    %426 = vmatpush2.xpose.msra.mxu0 0.0
    %427 = vmatprep.subr.mxu0 0.0
    %428 = vmatpush2.xpose.msra.mxu0 0.0
    %429 = vmatprep.subr.mxu0 0.0
    %430 = vmatpush2.xpose.msra.mxu0 0.0
    %431 = vmatprep.subr.mxu0 0.0
    %432 = vmatpush2.xpose.msra.mxu0 0.0
    %433 = vmatprep.subr.mxu0 0.0
    %434 = vmatpush2.xpose.msra.mxu0 0.0
    %435 = vmatprep.subr.mxu0 0.0
    %436 = vmatpush2.xpose.msra.mxu0 0.0
    %437 = vmatprep.mubr.f32.mxu0 0.0
    %438 = vmatmul.mubr.f32.gmra.mxu0 %v365
    %v439 = vpop.f32.mrf.mxu0
    %v440 = vadd.f32 %v80, %v439
    %v441 = vpop.f32.mrf.mxu0
    %442 = vmatprep.mubr.f32.mxu0 0.0
    %443 = vmatmul.mubr.f32.gmra.mxu0 %v367
    %v444 = vpop.f32.mrf.mxu0
    %v445 = vadd.f32 %v81, %v444
    %v446 = vpop.f32.mrf.mxu0
    %447 = vdwg.mxu0
    %448 = vrot.lane.b32.xlu0 %v183, 96
    %v449 = vpop.permute.xlu0 %448
    %450 = vrot.lane.b32.xlu0 %v185, 96
    %v451 = vpop.permute.xlu0 %450
    %v452 = vsel %vm190, %v183, 0
    %v454 = vsel %vm190, %v185, 0
    %v456 = vsel %vm190, %v449, 0
    %v458 = vsel %vm190, %v451, 0
    %460 = vmatprep.subr.mxu0 0.0
    %461 = vmatpush1.xpose.msra.mxu0 0.0
    %462 = vmatprep.subr.mxu0 0.0
    %463 = vmatpush1.xpose.msra.mxu0 0.0
    %464 = vmatprep.subr.mxu0 0.0
    %465 = vmatpush1.xpose.msra.mxu0 0.0
    %466 = vmatprep.subr.mxu0 0.0
    %467 = vmatpush1.xpose.msra.mxu0 0.0
    %468 = vmatprep.subr.mxu0 0.0
    %469 = vmatpush1.xpose.msra.mxu0 0.0
    %470 = vmatprep.subr.mxu0 0.0
    %471 = vmatpush1.xpose.msra.mxu0 0.0
    %472 = vmatprep.subr.mxu0 0.0
    %473 = vmatpush1.xpose.msra.mxu0 0.0
    %474 = vmatprep.subr.mxu0 0.0
    %475 = vmatpush1.xpose.msra.mxu0 0.0
    %476 = vmatprep.subr.mxu0 0.0
    %477 = vmatpush1.xpose.msra.mxu0 0.0
    %478 = vmatprep.subr.mxu0 0.0
    %479 = vmatpush1.xpose.msra.mxu0 0.0
    %480 = vmatprep.subr.mxu0 0.0
    %481 = vmatpush1.xpose.msra.mxu0 0.0
    %482 = vmatprep.subr.mxu0 0.0
    %483 = vmatpush1.xpose.msra.mxu0 0.0
    %484 = vmatprep.subr.mxu0 0.0
    %485 = vmatpush1.xpose.msra.mxu0 0.0
    %486 = vmatprep.subr.mxu0 0.0
    %487 = vmatpush1.xpose.msra.mxu0 0.0
    %488 = vmatprep.subr.mxu0 0.0
    %489 = vmatpush1.xpose.msra.mxu0 %v458
    %490 = vmatprep.subr.mxu0 0.0
    %491 = vmatpush1.xpose.msra.mxu0 %v456
    %492 = vmatprep.subr.mxu0 0.0
    %493 = vmatpush2.xpose.msra.mxu0 0.0
    %494 = vmatprep.subr.mxu0 0.0
    %495 = vmatpush2.xpose.msra.mxu0 0.0
    %496 = vmatprep.subr.mxu0 0.0
    %497 = vmatpush2.xpose.msra.mxu0 0.0
    %498 = vmatprep.subr.mxu0 0.0
    %499 = vmatpush2.xpose.msra.mxu0 0.0
    %500 = vmatprep.subr.mxu0 0.0
    %501 = vmatpush2.xpose.msra.mxu0 0.0
    %502 = vmatprep.subr.mxu0 0.0
    %503 = vmatpush2.xpose.msra.mxu0 0.0
    %504 = vmatprep.subr.mxu0 0.0
    %505 = vmatpush2.xpose.msra.mxu0 0.0
    %506 = vmatprep.subr.mxu0 0.0
    %507 = vmatpush2.xpose.msra.mxu0 0.0
    %508 = vmatprep.subr.mxu0 0.0
    %509 = vmatpush2.xpose.msra.mxu0 0.0
    %510 = vmatprep.subr.mxu0 0.0
    %511 = vmatpush2.xpose.msra.mxu0 0.0
    %512 = vmatprep.subr.mxu0 0.0
    %513 = vmatpush2.xpose.msra.mxu0 0.0
    %514 = vmatprep.subr.mxu0 0.0
    %515 = vmatpush2.xpose.msra.mxu0 0.0
    %516 = vmatprep.subr.mxu0 0.0
    %517 = vmatpush2.xpose.msra.mxu0 0.0
    %518 = vmatprep.subr.mxu0 0.0
    %519 = vmatpush2.xpose.msra.mxu0 0.0
    %520 = vmatprep.subr.mxu0 0.0
    %521 = vmatpush2.xpose.msra.mxu0 0.0
    %522 = vmatprep.subr.mxu0 0.0
    %523 = vmatpush2.xpose.msra.mxu0 0.0
    %524 = vmatprep.mubr.f32.mxu0 0.0
    %525 = vmatmul.mubr.f32.gmra.mxu0 %v452
    %v526 = vpop.f32.mrf.mxu0
    %v527 = vadd.f32 %v80, %v526
    %v528 = vpop.f32.mrf.mxu0
    %529 = vmatprep.mubr.f32.mxu0 0.0
    %530 = vmatmul.mubr.f32.gmra.mxu0 %v454
    %v531 = vpop.f32.mrf.mxu0
    %v532 = vadd.f32 %v81, %v531
    %v533 = vpop.f32.mrf.mxu0
    %534 = vdwg.mxu0
    %vm535 = vcmask 130048
    %v536 = vsel %vm535, %v266, -inf
    %537 = vmax.xlane.f32.xlu0 %v536
    %v538 = vpop.xlane.xlu0 %537
    %v539 = vsel %vm535, %v271, -inf
    %540 = vmax.xlane.f32.xlu0 %v539
    %v541 = vpop.xlane.xlu0 %540
    %v542 = vsel %vm535, %v353, -inf
    %543 = vmax.xlane.f32.xlu0 %v542
    %v544 = vpop.xlane.xlu0 %543
    %v545 = vsel %vm535, %v358, -inf
    %546 = vmax.xlane.f32.xlu0 %v545
    %v547 = vpop.xlane.xlu0 %546
    %v548 = vsel %vm535, %v440, -inf
    %549 = vmax.xlane.f32.xlu0 %v548
    %v550 = vpop.xlane.xlu0 %549
    %v551 = vsel %vm535, %v445, -inf
    %552 = vmax.xlane.f32.xlu0 %v551
    %v553 = vpop.xlane.xlu0 %552
    %v554 = vsel %vm535, %v527, -inf
    %555 = vmax.xlane.f32.xlu0 %v554
    %v556 = vpop.xlane.xlu0 %555
    %v557 = vsel %vm535, %v532, -inf
    %558 = vmax.xlane.f32.xlu0 %v557
    %v559 = vpop.xlane.xlu0 %558
    %v560 = vsub.f32 %v266, %v538
    %v561 = vsub.f32 %v271, %v541
    %v562 = vsub.f32 %v353, %v544
    %v563 = vsub.f32 %v358, %v547
    %v564 = vsub.f32 %v440, %v550
    %v565 = vsub.f32 %v445, %v553
    %v566 = vsub.f32 %v527, %v556
    %v567 = vsub.f32 %v532, %v559
    %v568 = vmul.f32 %v560, 1.442695
    %v569 = vpow.pop %v568
    %v570 = vmul.f32 %v561, 1.442695
    %v571 = vpow.pop %v570
    %v572 = vmul.f32 %v562, 1.442695
    %v573 = vpow.pop %v572
    %v574 = vmul.f32 %v563, 1.442695
    %v575 = vpow.pop %v574
    %v576 = vmul.f32 %v564, 1.442695
    %v577 = vpow.pop %v576
    %v578 = vmul.f32 %v565, 1.442695
    %v579 = vpow.pop %v578
    %v580 = vmul.f32 %v566, 1.442695
    %v581 = vpow.pop %v580
    %v582 = vmul.f32 %v567, 1.442695
    %v583 = vpow.pop %v582
    %v584 = vsel %vm535, %v569, 0.0
    %585 = vadd.xlane.f32.xlu0 %v584
    %v586 = vpop.xlane.xlu0 %585
    %v587 = vsel %vm535, %v571, 0.0
    %588 = vadd.xlane.f32.xlu0 %v587
    %v589 = vpop.xlane.xlu0 %588
    %v590 = vsel %vm535, %v573, 0.0
    %591 = vadd.xlane.f32.xlu0 %v590
    %v592 = vpop.xlane.xlu0 %591
    %v593 = vsel %vm535, %v575, 0.0
    %594 = vadd.xlane.f32.xlu0 %v593
    %v595 = vpop.xlane.xlu0 %594
    %v596 = vsel %vm535, %v577, 0.0
    %597 = vadd.xlane.f32.xlu0 %v596
    %v598 = vpop.xlane.xlu0 %597
    %v599 = vsel %vm535, %v579, 0.0
    %600 = vadd.xlane.f32.xlu0 %v599
    %v601 = vpop.xlane.xlu0 %600
    %v602 = vsel %vm535, %v581, 0.0
    %603 = vadd.xlane.f32.xlu0 %v602
    %v604 = vpop.xlane.xlu0 %603
    %v605 = vsel %vm535, %v583, 0.0
    %606 = vadd.xlane.f32.xlu0 %v605
    %v607 = vpop.xlane.xlu0 %606
    %v608 = vrcp.pop %v586
    %v609 = vmul.f32 %v569, %v608
    %v610 = vrcp.pop %v589
    %v611 = vmul.f32 %v571, %v610
    %v612 = vrcp.pop %v592
    %v613 = vmul.f32 %v573, %v612
    %v614 = vrcp.pop %v595
    %v615 = vmul.f32 %v575, %v614
    %v616 = vrcp.pop %v598
    %v617 = vmul.f32 %v577, %v616
    %v618 = vrcp.pop %v601
    %v619 = vmul.f32 %v579, %v618
    %v620 = vrcp.pop %v604
    %v621 = vmul.f32 %v581, %v620
    %v622 = vrcp.pop %v607
    %v623 = vmul.f32 %v583, %v622
    %624 = vrot.lane.b32.xlu0 %v164, 64
    %v625 = vpop.permute.xlu0 %624
    %626 = vrot.lane.b32.xlu0 %v169, 64
    %v627 = vpop.permute.xlu0 %626
    %v631 = vsel %vm535, %v609, 0
    %v634 = vsel %vm535, %v611, 0
    %636 = vmatprep.subr.mxu0 0.0
    %637 = vmatpush1.msra.mxu0 0.0
    %638 = vmatprep.subr.mxu0 0.0
    %639 = vmatpush1.msra.mxu0 0.0
    %640 = vmatprep.subr.mxu0 0.0
    %641 = vmatpush1.msra.mxu0 0.0
    %642 = vmatprep.subr.mxu0 0.0
    %643 = vmatpush1.msra.mxu0 0.0
    %644 = vmatprep.subr.mxu0 0.0
    %645 = vmatpush1.msra.mxu0 0.0
    %646 = vmatprep.subr.mxu0 0.0
    %647 = vmatpush1.msra.mxu0 0.0
    %648 = vmatprep.subr.mxu0 0.0
    %649 = vmatpush1.msra.mxu0 0.0
    %650 = vmatprep.subr.mxu0 0.0
    %651 = vmatpush1.msra.mxu0 0.0
    %652 = vmatprep.subr.mxu0 0.0
    %653 = vmatpush1.msra.mxu0 0.0
    %654 = vmatprep.subr.mxu0 0.0
    %655 = vmatpush1.msra.mxu0 0.0
    %656 = vmatprep.subr.mxu0 0.0
    %657 = vmatpush1.msra.mxu0 0.0
    %658 = vmatprep.subr.mxu0 0.0
    %659 = vmatpush1.msra.mxu0 0.0
    %660 = vmatprep.subr.mxu0 0.0
    %661 = vmatpush1.msra.mxu0 0.0
    %662 = vmatprep.subr.mxu0 0.0
    %663 = vmatpush1.msra.mxu0 0.0
    %664 = vmatprep.subr.mxu0 0.0
    %665 = vmatpush1.msra.mxu0 %v627
    %666 = vmatprep.subr.mxu0 0.0
    %667 = vmatpush1.msra.mxu0 %v625
    %668 = vmatprep.subr.mxu0 0.0
    %669 = vmatpush2.msra.mxu0 0.0
    %670 = vmatprep.subr.mxu0 0.0
    %671 = vmatpush2.msra.mxu0 0.0
    %672 = vmatprep.subr.mxu0 0.0
    %673 = vmatpush2.msra.mxu0 0.0
    %674 = vmatprep.subr.mxu0 0.0
    %675 = vmatpush2.msra.mxu0 0.0
    %676 = vmatprep.subr.mxu0 0.0
    %677 = vmatpush2.msra.mxu0 0.0
    %678 = vmatprep.subr.mxu0 0.0
    %679 = vmatpush2.msra.mxu0 0.0
    %680 = vmatprep.subr.mxu0 0.0
    %681 = vmatpush2.msra.mxu0 0.0
    %682 = vmatprep.subr.mxu0 0.0
    %683 = vmatpush2.msra.mxu0 0.0
    %684 = vmatprep.subr.mxu0 0.0
    %685 = vmatpush2.msra.mxu0 0.0
    %686 = vmatprep.subr.mxu0 0.0
    %687 = vmatpush2.msra.mxu0 0.0
    %688 = vmatprep.subr.mxu0 0.0
    %689 = vmatpush2.msra.mxu0 0.0
    %690 = vmatprep.subr.mxu0 0.0
    %691 = vmatpush2.msra.mxu0 0.0
    %692 = vmatprep.subr.mxu0 0.0
    %693 = vmatpush2.msra.mxu0 0.0
    %694 = vmatprep.subr.mxu0 0.0
    %695 = vmatpush2.msra.mxu0 0.0
    %696 = vmatprep.subr.mxu0 0.0
    %697 = vmatpush2.msra.mxu0 0.0
    %698 = vmatprep.subr.mxu0 0.0
    %699 = vmatpush2.msra.mxu0 0.0
    %700 = vmatprep.mubr.f32.mxu0 0.0
    %701 = vmatmul.mubr.f32.gmra.mxu0 %v631
    %v702 = vpop.f32.mrf.mxu0
    %v703 = vadd.f32 0.0, %v702
    %v704 = vpop.f32.mrf.mxu0
    %705 = vmatprep.mubr.f32.mxu0 0.0
    %706 = vmatmul.mubr.f32.gmra.mxu0 %v634
    %v707 = vpop.f32.mrf.mxu0
    %v708 = vadd.f32 0.0, %v707
    %v709 = vpop.f32.mrf.mxu0
    %710 = vdwg.mxu0
    %711 = vrot.lane.b32.xlu0 %v175, 64
    %v712 = vpop.permute.xlu0 %711
    %713 = vrot.lane.b32.xlu0 %v177, 64
    %v714 = vpop.permute.xlu0 %713
    %v718 = vsel %vm535, %v613, 0
    %v721 = vsel %vm535, %v615, 0
    %723 = vmatprep.subr.mxu0 0.0
    %724 = vmatpush1.msra.mxu0 0.0
    %725 = vmatprep.subr.mxu0 0.0
    %726 = vmatpush1.msra.mxu0 0.0
    %727 = vmatprep.subr.mxu0 0.0
    %728 = vmatpush1.msra.mxu0 0.0
    %729 = vmatprep.subr.mxu0 0.0
    %730 = vmatpush1.msra.mxu0 0.0
    %731 = vmatprep.subr.mxu0 0.0
    %732 = vmatpush1.msra.mxu0 0.0
    %733 = vmatprep.subr.mxu0 0.0
    %734 = vmatpush1.msra.mxu0 0.0
    %735 = vmatprep.subr.mxu0 0.0
    %736 = vmatpush1.msra.mxu0 0.0
    %737 = vmatprep.subr.mxu0 0.0
    %738 = vmatpush1.msra.mxu0 0.0
    %739 = vmatprep.subr.mxu0 0.0
    %740 = vmatpush1.msra.mxu0 0.0
    %741 = vmatprep.subr.mxu0 0.0
    %742 = vmatpush1.msra.mxu0 0.0
    %743 = vmatprep.subr.mxu0 0.0
    %744 = vmatpush1.msra.mxu0 0.0
    %745 = vmatprep.subr.mxu0 0.0
    %746 = vmatpush1.msra.mxu0 0.0
    %747 = vmatprep.subr.mxu0 0.0
    %748 = vmatpush1.msra.mxu0 0.0
    %749 = vmatprep.subr.mxu0 0.0
    %750 = vmatpush1.msra.mxu0 0.0
    %751 = vmatprep.subr.mxu0 0.0
    %752 = vmatpush1.msra.mxu0 %v714
    %753 = vmatprep.subr.mxu0 0.0
    %754 = vmatpush1.msra.mxu0 %v712
    %755 = vmatprep.subr.mxu0 0.0
    %756 = vmatpush2.msra.mxu0 0.0
    %757 = vmatprep.subr.mxu0 0.0
    %758 = vmatpush2.msra.mxu0 0.0
    %759 = vmatprep.subr.mxu0 0.0
    %760 = vmatpush2.msra.mxu0 0.0
    %761 = vmatprep.subr.mxu0 0.0
    %762 = vmatpush2.msra.mxu0 0.0
    %763 = vmatprep.subr.mxu0 0.0
    %764 = vmatpush2.msra.mxu0 0.0
    %765 = vmatprep.subr.mxu0 0.0
    %766 = vmatpush2.msra.mxu0 0.0
    %767 = vmatprep.subr.mxu0 0.0
    %768 = vmatpush2.msra.mxu0 0.0
    %769 = vmatprep.subr.mxu0 0.0
    %770 = vmatpush2.msra.mxu0 0.0
    %771 = vmatprep.subr.mxu0 0.0
    %772 = vmatpush2.msra.mxu0 0.0
    %773 = vmatprep.subr.mxu0 0.0
    %774 = vmatpush2.msra.mxu0 0.0
    %775 = vmatprep.subr.mxu0 0.0
    %776 = vmatpush2.msra.mxu0 0.0
    %777 = vmatprep.subr.mxu0 0.0
    %778 = vmatpush2.msra.mxu0 0.0
    %779 = vmatprep.subr.mxu0 0.0
    %780 = vmatpush2.msra.mxu0 0.0
    %781 = vmatprep.subr.mxu0 0.0
    %782 = vmatpush2.msra.mxu0 0.0
    %783 = vmatprep.subr.mxu0 0.0
    %784 = vmatpush2.msra.mxu0 0.0
    %785 = vmatprep.subr.mxu0 0.0
    %786 = vmatpush2.msra.mxu0 0.0
    %787 = vmatprep.mubr.f32.mxu0 0.0
    %788 = vmatmul.mubr.f32.gmra.mxu0 %v718
    %v789 = vpop.f32.mrf.mxu0
    %v790 = vadd.f32 0.0, %v789
    %v791 = vpop.f32.mrf.mxu0
    %792 = vmatprep.mubr.f32.mxu0 0.0
    %793 = vmatmul.mubr.f32.gmra.mxu0 %v721
    %v794 = vpop.f32.mrf.mxu0
    %v795 = vadd.f32 0.0, %v794
    %v796 = vpop.f32.mrf.mxu0
    %797 = vdwg.mxu0
    %798 = vrot.lane.b32.xlu0 %v179, 64
    %v799 = vpop.permute.xlu0 %798
    %800 = vrot.lane.b32.xlu0 %v181, 64
    %v801 = vpop.permute.xlu0 %800
    %v805 = vsel %vm535, %v617, 0
    %v808 = vsel %vm535, %v619, 0
    %810 = vmatprep.subr.mxu0 0.0
    %811 = vmatpush1.msra.mxu0 0.0
    %812 = vmatprep.subr.mxu0 0.0
    %813 = vmatpush1.msra.mxu0 0.0
    %814 = vmatprep.subr.mxu0 0.0
    %815 = vmatpush1.msra.mxu0 0.0
    %816 = vmatprep.subr.mxu0 0.0
    %817 = vmatpush1.msra.mxu0 0.0
    %818 = vmatprep.subr.mxu0 0.0
    %819 = vmatpush1.msra.mxu0 0.0
    %820 = vmatprep.subr.mxu0 0.0
    %821 = vmatpush1.msra.mxu0 0.0
    %822 = vmatprep.subr.mxu0 0.0
    %823 = vmatpush1.msra.mxu0 0.0
    %824 = vmatprep.subr.mxu0 0.0
    %825 = vmatpush1.msra.mxu0 0.0
    %826 = vmatprep.subr.mxu0 0.0
    %827 = vmatpush1.msra.mxu0 0.0
    %828 = vmatprep.subr.mxu0 0.0
    %829 = vmatpush1.msra.mxu0 0.0
    %830 = vmatprep.subr.mxu0 0.0
    %831 = vmatpush1.msra.mxu0 0.0
    %832 = vmatprep.subr.mxu0 0.0
    %833 = vmatpush1.msra.mxu0 0.0
    %834 = vmatprep.subr.mxu0 0.0
    %835 = vmatpush1.msra.mxu0 0.0
    %836 = vmatprep.subr.mxu0 0.0
    %837 = vmatpush1.msra.mxu0 0.0
    %838 = vmatprep.subr.mxu0 0.0
    %839 = vmatpush1.msra.mxu0 %v801
    %840 = vmatprep.subr.mxu0 0.0
    %841 = vmatpush1.msra.mxu0 %v799
    %842 = vmatprep.subr.mxu0 0.0
    %843 = vmatpush2.msra.mxu0 0.0
    %844 = vmatprep.subr.mxu0 0.0
    %845 = vmatpush2.msra.mxu0 0.0
    %846 = vmatprep.subr.mxu0 0.0
    %847 = vmatpush2.msra.mxu0 0.0
    %848 = vmatprep.subr.mxu0 0.0
    %849 = vmatpush2.msra.mxu0 0.0
    %850 = vmatprep.subr.mxu0 0.0
    %851 = vmatpush2.msra.mxu0 0.0
    %852 = vmatprep.subr.mxu0 0.0
    %853 = vmatpush2.msra.mxu0 0.0
    %854 = vmatprep.subr.mxu0 0.0
    %855 = vmatpush2.msra.mxu0 0.0
    %856 = vmatprep.subr.mxu0 0.0
    %857 = vmatpush2.msra.mxu0 0.0
    %858 = vmatprep.subr.mxu0 0.0
    %859 = vmatpush2.msra.mxu0 0.0
    %860 = vmatprep.subr.mxu0 0.0
    %861 = vmatpush2.msra.mxu0 0.0
    %862 = vmatprep.subr.mxu0 0.0
    %863 = vmatpush2.msra.mxu0 0.0
    %864 = vmatprep.subr.mxu0 0.0
    %865 = vmatpush2.msra.mxu0 0.0
    %866 = vmatprep.subr.mxu0 0.0
    %867 = vmatpush2.msra.mxu0 0.0
    %868 = vmatprep.subr.mxu0 0.0
    %869 = vmatpush2.msra.mxu0 0.0
    %870 = vmatprep.subr.mxu0 0.0
    %871 = vmatpush2.msra.mxu0 0.0
    %872 = vmatprep.subr.mxu0 0.0
    %873 = vmatpush2.msra.mxu0 0.0
    %874 = vmatprep.mubr.f32.mxu0 0.0
    %875 = vmatmul.mubr.f32.gmra.mxu0 %v805
    %v876 = vpop.f32.mrf.mxu0
    %v877 = vadd.f32 0.0, %v876
    %v878 = vpop.f32.mrf.mxu0
    %879 = vmatprep.mubr.f32.mxu0 0.0
    %880 = vmatmul.mubr.f32.gmra.mxu0 %v808
    %v881 = vpop.f32.mrf.mxu0
    %v882 = vadd.f32 0.0, %v881
    %v883 = vpop.f32.mrf.mxu0
    %884 = vdwg.mxu0
    %885 = vrot.lane.b32.xlu0 %v183, 64
    %v886 = vpop.permute.xlu0 %885
    %887 = vrot.lane.b32.xlu0 %v185, 64
    %v888 = vpop.permute.xlu0 %887
    %v892 = vsel %vm535, %v621, 0
    %v895 = vsel %vm535, %v623, 0
    %897 = vmatprep.subr.mxu0 0.0
    %898 = vmatpush1.msra.mxu0 0.0
    %899 = vmatprep.subr.mxu0 0.0
    %900 = vmatpush1.msra.mxu0 0.0
    %901 = vmatprep.subr.mxu0 0.0
    %902 = vmatpush1.msra.mxu0 0.0
    %903 = vmatprep.subr.mxu0 0.0
    %904 = vmatpush1.msra.mxu0 0.0
    %905 = vmatprep.subr.mxu0 0.0
    %906 = vmatpush1.msra.mxu0 0.0
    %907 = vmatprep.subr.mxu0 0.0
    %908 = vmatpush1.msra.mxu0 0.0
    %909 = vmatprep.subr.mxu0 0.0
    %910 = vmatpush1.msra.mxu0 0.0
    %911 = vmatprep.subr.mxu0 0.0
    %912 = vmatpush1.msra.mxu0 0.0
    %913 = vmatprep.subr.mxu0 0.0
    %914 = vmatpush1.msra.mxu0 0.0
    %915 = vmatprep.subr.mxu0 0.0
    %916 = vmatpush1.msra.mxu0 0.0
    %917 = vmatprep.subr.mxu0 0.0
    %918 = vmatpush1.msra.mxu0 0.0
    %919 = vmatprep.subr.mxu0 0.0
    %920 = vmatpush1.msra.mxu0 0.0
    %921 = vmatprep.subr.mxu0 0.0
    %922 = vmatpush1.msra.mxu0 0.0
    %923 = vmatprep.subr.mxu0 0.0
    %924 = vmatpush1.msra.mxu0 0.0
    %925 = vmatprep.subr.mxu0 0.0
    %926 = vmatpush1.msra.mxu0 %v888
    %927 = vmatprep.subr.mxu0 0.0
    %928 = vmatpush1.msra.mxu0 %v886
    %929 = vmatprep.subr.mxu0 0.0
    %930 = vmatpush2.msra.mxu0 0.0
    %931 = vmatprep.subr.mxu0 0.0
    %932 = vmatpush2.msra.mxu0 0.0
    %933 = vmatprep.subr.mxu0 0.0
    %934 = vmatpush2.msra.mxu0 0.0
    %935 = vmatprep.subr.mxu0 0.0
    %936 = vmatpush2.msra.mxu0 0.0
    %937 = vmatprep.subr.mxu0 0.0
    %938 = vmatpush2.msra.mxu0 0.0
    %939 = vmatprep.subr.mxu0 0.0
    %940 = vmatpush2.msra.mxu0 0.0
    %941 = vmatprep.subr.mxu0 0.0
    %942 = vmatpush2.msra.mxu0 0.0
    %943 = vmatprep.subr.mxu0 0.0
    %944 = vmatpush2.msra.mxu0 0.0
    %945 = vmatprep.subr.mxu0 0.0
    %946 = vmatpush2.msra.mxu0 0.0
    %947 = vmatprep.subr.mxu0 0.0
    %948 = vmatpush2.msra.mxu0 0.0
    %949 = vmatprep.subr.mxu0 0.0
    %950 = vmatpush2.msra.mxu0 0.0
    %951 = vmatprep.subr.mxu0 0.0
    %952 = vmatpush2.msra.mxu0 0.0
    %953 = vmatprep.subr.mxu0 0.0
    %954 = vmatpush2.msra.mxu0 0.0
    %955 = vmatprep.subr.mxu0 0.0
    %956 = vmatpush2.msra.mxu0 0.0
    %957 = vmatprep.subr.mxu0 0.0
    %958 = vmatpush2.msra.mxu0 0.0
    %959 = vmatprep.subr.mxu0 0.0
    %960 = vmatpush2.msra.mxu0 0.0
    %961 = vmatprep.mubr.f32.mxu0 0.0
    %962 = vmatmul.mubr.f32.gmra.mxu0 %v892
    %v963 = vpop.f32.mrf.mxu0
    %v964 = vadd.f32 0.0, %v963
    %v965 = vpop.f32.mrf.mxu0
    %966 = vmatprep.mubr.f32.mxu0 0.0
    %967 = vmatmul.mubr.f32.gmra.mxu0 %v895
    %v968 = vpop.f32.mrf.mxu0
    %v969 = vadd.f32 0.0, %v968
    %v970 = vpop.f32.mrf.mxu0
    %971 = vdwg.mxu0
    %974 = vrot.lane.b32.xlu0 %v790, 8
    %v975 = vpop.permute.xlu0 %974
    %976 = vrot.lane.b32.xlu0 %v795, 8
    %v977 = vpop.permute.xlu0 %976
    %982 = vrot.lane.b32.xlu0 %v877, 16
    %v983 = vpop.permute.xlu0 %982
    %984 = vrot.lane.b32.xlu0 %v882, 16
    %v985 = vpop.permute.xlu0 %984
    %990 = vrot.lane.b32.xlu0 %v964, 24
    %v991 = vpop.permute.xlu0 %990
    %992 = vrot.lane.b32.xlu0 %v969, 24
    %v993 = vpop.permute.xlu0 %992
    %v996 = vsel %vm190, %v703, %v975
    %v997 = vsel %vm190, %v708, %v977
    %v998 = vsel %vm535, %v996, %v983
    %v999 = vsel %vm535, %v997, %v985
    %vm1000 = vcmask 195584
    %v1001 = vsel %vm1000, %v998, %v991
    %v1002 = vsel %vm1000, %v999, %v993
    %v1003 = vld [vmem:[%s4] sm:$0xff]
    %v1004 = vld [vmem:[%s4 + $0x8] sm:$0xff]
    %v1005 = vld [vmem:[%s4 + $0x10] sm:$0xff]
    %v1006 = vld [vmem:[%s4 + $0x18] sm:$0xff]
    %v1007 = vlaneseq
    %v1008 = vshrl.u32 %v1007, 7
    %v1009 = vsub.s32 1, %v1008
    %v1010 = vrot.slane %v82, %v1009
    %v1012 = vsel %vm37, %v1001, 0
    %v1015 = vsel %vm37, %v1002, 0
    %1017 = vmatprep.subr.mxu0 0.0
    %1018 = vmatpush1.msra.mxu0 0.0
    %1019 = vmatprep.subr.mxu0 0.0
    %1020 = vmatpush1.msra.mxu0 0.0
    %1021 = vmatprep.subr.mxu0 0.0
    %1022 = vmatpush1.msra.mxu0 0.0
    %1023 = vmatprep.subr.mxu0 0.0
    %1024 = vmatpush1.msra.mxu0 0.0
    %1025 = vmatprep.subr.mxu0 0.0
    %1026 = vmatpush1.msra.mxu0 0.0
    %1027 = vmatprep.subr.mxu0 0.0
    %1028 = vmatpush1.msra.mxu0 0.0
    %1029 = vmatprep.subr.mxu0 0.0
    %1030 = vmatpush1.msra.mxu0 0.0
    %1031 = vmatprep.subr.mxu0 0.0
    %1032 = vmatpush1.msra.mxu0 0.0
    %1033 = vmatprep.subr.mxu0 0.0
    %1034 = vmatpush1.msra.mxu0 0.0
    %1035 = vmatprep.subr.mxu0 0.0
    %1036 = vmatpush1.msra.mxu0 0.0
    %1037 = vmatprep.subr.mxu0 0.0
    %1038 = vmatpush1.msra.mxu0 0.0
    %1039 = vmatprep.subr.mxu0 0.0
    %1040 = vmatpush1.msra.mxu0 0.0
    %1041 = vmatprep.subr.mxu0 0.0
    %1042 = vmatpush1.msra.mxu0 %v1006
    %1043 = vmatprep.subr.mxu0 0.0
    %1044 = vmatpush1.msra.mxu0 %v1005
    %1045 = vmatprep.subr.mxu0 0.0
    %1046 = vmatpush1.msra.mxu0 %v1004
    %1047 = vmatprep.subr.mxu0 0.0
    %1048 = vmatpush1.msra.mxu0 %v1003
    %1049 = vmatprep.subr.mxu0 0.0
    %1050 = vmatpush2.msra.mxu0 0.0
    %1051 = vmatprep.subr.mxu0 0.0
    %1052 = vmatpush2.msra.mxu0 0.0
    %1053 = vmatprep.subr.mxu0 0.0
    %1054 = vmatpush2.msra.mxu0 0.0
    %1055 = vmatprep.subr.mxu0 0.0
    %1056 = vmatpush2.msra.mxu0 0.0
    %1057 = vmatprep.subr.mxu0 0.0
    %1058 = vmatpush2.msra.mxu0 0.0
    %1059 = vmatprep.subr.mxu0 0.0
    %1060 = vmatpush2.msra.mxu0 0.0
    %1061 = vmatprep.subr.mxu0 0.0
    %1062 = vmatpush2.msra.mxu0 0.0
    %1063 = vmatprep.subr.mxu0 0.0
    %1064 = vmatpush2.msra.mxu0 0.0
    %1065 = vmatprep.subr.mxu0 0.0
    %1066 = vmatpush2.msra.mxu0 0.0
    %1067 = vmatprep.subr.mxu0 0.0
    %1068 = vmatpush2.msra.mxu0 0.0
    %1069 = vmatprep.subr.mxu0 0.0
    %1070 = vmatpush2.msra.mxu0 0.0
    %1071 = vmatprep.subr.mxu0 0.0
    %1072 = vmatpush2.msra.mxu0 0.0
    %1073 = vmatprep.subr.mxu0 0.0
    %1074 = vmatpush2.msra.mxu0 0.0
    %1075 = vmatprep.subr.mxu0 0.0
    %1076 = vmatpush2.msra.mxu0 0.0
    %1077 = vmatprep.subr.mxu0 0.0
    %1078 = vmatpush2.msra.mxu0 0.0
    %1079 = vmatprep.subr.mxu0 0.0
    %1080 = vmatpush2.msra.mxu0 0.0
    %1081 = vmatprep.mubr.f32.mxu0 0.0
    %1082 = vmatmul.mubr.f32.gmra.mxu0 %v1012
    %v1083 = vpop.f32.mrf.mxu0
    %v1084 = vadd.f32 %v1010, %v1083
    %v1085 = vpop.f32.mrf.mxu0
    %1086 = vmatprep.mubr.f32.mxu0 0.0
    %1087 = vmatmul.mubr.f32.gmra.mxu0 %v1015
    %v1088 = vpop.f32.mrf.mxu0
    %v1089 = vadd.f32 %v1010, %v1088
    %v1090 = vpop.f32.mrf.mxu0
    %1091 = vdwg.mxu0
    %v1092 = vadd.f32 %v78, %v1084
    %v1093 = vadd.f32 %v79, %v1089
    %v1094 = vsel %vm37, %v1092, 0.0
    %1095 = vadd.xlane.f32.xlu0 %v1094
    %v1096 = vpop.xlane.xlu0 %1095
    %v1097 = vsel %vm37, %v1093, 0.0
    %1098 = vadd.xlane.f32.xlu0 %v1097
    %v1099 = vpop.xlane.xlu0 %1098
    %v1100 = vmul.f32 %v1096, 0.03125
    %v1101 = vmul.f32 %v1099, 0.03125
    %v1102 = vmul.f32 %v1092, %v1092
    %v1103 = vmul.f32 %v1093, %v1093
    %v1104 = vsel %vm37, %v1102, 0.0
    %1105 = vadd.xlane.f32.xlu0 %v1104
    %v1106 = vpop.xlane.xlu0 %1105
    %v1107 = vsel %vm37, %v1103, 0.0
    %1108 = vadd.xlane.f32.xlu0 %v1107
    %v1109 = vpop.xlane.xlu0 %1108
    %v1110 = vmul.f32 %v1106, 0.03125
    %v1111 = vmul.f32 %v1109, 0.03125
    %v1112 = vmul.f32 %v1100, %v1100
    %v1113 = vmul.f32 %v1101, %v1101
    %v1114 = vsub.f32 %v1110, %v1112
    %v1115 = vsub.f32 %v1111, %v1113
    %v1116 = vsub.f32 %v1092, %v1100
    %v1117 = vsub.f32 %v1093, %v1101
    %v1118 = vadd.f32 %v1114, 1e-12
    %v1119 = vadd.f32 %v1115, 1e-12
    %v1120 = vrsqrt.pop %v1118
    %v1121 = vrsqrt.pop %v1119
    %v1122 = vmul.f32 %v1116, %v1120
    %v1123 = vmul.f32 %v1117, %v1121
    %v1124 = vlaneseq
    %v1125 = vshrl.u32 %v1124, 7
    %v1126 = vsub.s32 4, %v1125
    %v1127 = vrot.slane %v82, %v1126
    %v1128 = vmul.f32 %v1122, %v1127
    %v1129 = vmul.f32 %v1123, %v1127
    %v1130 = vlaneseq
    %v1131 = vshrl.u32 %v1130, 7
    %v1132 = vsub.s32 5, %v1131
    %v1133 = vrot.slane %v82, %v1132
    %v1134 = vadd.f32 %v1128, %v1133
    %v1135 = vadd.f32 %v1129, %v1133
    %v1136 = vld [vmem:[%s5] sm:$0xff]
    %v1137 = vld [vmem:[%s5 + $0x8] sm:$0xff]
    %v1138 = vld [vmem:[%s5 + $0x10] sm:$0xff]
    %v1139 = vld [vmem:[%s5 + $0x18] sm:$0xff]
    %v1140 = vlaneseq
    %v1141 = vshrl.u32 %v1140, 7
    %v1142 = vsub.s32 2, %v1141
    %v1143 = vrot.slane %v82, %v1142
    %v1145 = vsel %vm37, %v1134, 0
    %v1148 = vsel %vm37, %v1135, 0
    %1150 = vmatprep.subr.mxu0 0.0
    %1151 = vmatpush1.msra.mxu0 0.0
    %1152 = vmatprep.subr.mxu0 0.0
    %1153 = vmatpush1.msra.mxu0 0.0
    %1154 = vmatprep.subr.mxu0 0.0
    %1155 = vmatpush1.msra.mxu0 0.0
    %1156 = vmatprep.subr.mxu0 0.0
    %1157 = vmatpush1.msra.mxu0 0.0
    %1158 = vmatprep.subr.mxu0 0.0
    %1159 = vmatpush1.msra.mxu0 0.0
    %1160 = vmatprep.subr.mxu0 0.0
    %1161 = vmatpush1.msra.mxu0 0.0
    %1162 = vmatprep.subr.mxu0 0.0
    %1163 = vmatpush1.msra.mxu0 0.0
    %1164 = vmatprep.subr.mxu0 0.0
    %1165 = vmatpush1.msra.mxu0 0.0
    %1166 = vmatprep.subr.mxu0 0.0
    %1167 = vmatpush1.msra.mxu0 0.0
    %1168 = vmatprep.subr.mxu0 0.0
    %1169 = vmatpush1.msra.mxu0 0.0
    %1170 = vmatprep.subr.mxu0 0.0
    %1171 = vmatpush1.msra.mxu0 0.0
    %1172 = vmatprep.subr.mxu0 0.0
    %1173 = vmatpush1.msra.mxu0 0.0
    %1174 = vmatprep.subr.mxu0 0.0
    %1175 = vmatpush1.msra.mxu0 %v1139
    %1176 = vmatprep.subr.mxu0 0.0
    %1177 = vmatpush1.msra.mxu0 %v1138
    %1178 = vmatprep.subr.mxu0 0.0
    %1179 = vmatpush1.msra.mxu0 %v1137
    %1180 = vmatprep.subr.mxu0 0.0
    %1181 = vmatpush1.msra.mxu0 %v1136
    %1182 = vmatprep.subr.mxu0 0.0
    %1183 = vmatpush2.msra.mxu0 0.0
    %1184 = vmatprep.subr.mxu0 0.0
    %1185 = vmatpush2.msra.mxu0 0.0
    %1186 = vmatprep.subr.mxu0 0.0
    %1187 = vmatpush2.msra.mxu0 0.0
    %1188 = vmatprep.subr.mxu0 0.0
    %1189 = vmatpush2.msra.mxu0 0.0
    %1190 = vmatprep.subr.mxu0 0.0
    %1191 = vmatpush2.msra.mxu0 0.0
    %1192 = vmatprep.subr.mxu0 0.0
    %1193 = vmatpush2.msra.mxu0 0.0
    %1194 = vmatprep.subr.mxu0 0.0
    %1195 = vmatpush2.msra.mxu0 0.0
    %1196 = vmatprep.subr.mxu0 0.0
    %1197 = vmatpush2.msra.mxu0 0.0
    %1198 = vmatprep.subr.mxu0 0.0
    %1199 = vmatpush2.msra.mxu0 0.0
    %1200 = vmatprep.subr.mxu0 0.0
    %1201 = vmatpush2.msra.mxu0 0.0
    %1202 = vmatprep.subr.mxu0 0.0
    %1203 = vmatpush2.msra.mxu0 0.0
    %1204 = vmatprep.subr.mxu0 0.0
    %1205 = vmatpush2.msra.mxu0 0.0
    %1206 = vmatprep.subr.mxu0 0.0
    %1207 = vmatpush2.msra.mxu0 0.0
    %1208 = vmatprep.subr.mxu0 0.0
    %1209 = vmatpush2.msra.mxu0 0.0
    %1210 = vmatprep.subr.mxu0 0.0
    %1211 = vmatpush2.msra.mxu0 0.0
    %1212 = vmatprep.subr.mxu0 0.0
    %1213 = vmatpush2.msra.mxu0 0.0
    %1214 = vmatprep.mubr.f32.mxu0 0.0
    %1215 = vmatmul.mubr.f32.gmra.mxu0 %v1145
    %v1216 = vpop.f32.mrf.mxu0
    %v1217 = vadd.f32 %v1143, %v1216
    %v1218 = vpop.f32.mrf.mxu0
    %1219 = vmatprep.mubr.f32.mxu0 0.0
    %1220 = vmatmul.mubr.f32.gmra.mxu0 %v1148
    %v1221 = vpop.f32.mrf.mxu0
    %v1222 = vadd.f32 %v1143, %v1221
    %v1223 = vpop.f32.mrf.mxu0
    %1224 = vdwg.mxu0
    %v1225 = vmul.f32 %v1217, %v1217
    %v1226 = vmul.f32 %v1222, %v1222
    %v1227 = vmul.f32 %v1217, %v1225
    %v1228 = vmul.f32 %v1222, %v1226
    %v1229 = vmul.f32 %v1227, 0.044715
    %v1230 = vmul.f32 %v1228, 0.044715
    %v1231 = vadd.f32 %v1217, %v1229
    %v1232 = vadd.f32 %v1222, %v1230
    %v1233 = vmul.f32 %v1231, 0.7978846
    %v1234 = vmul.f32 %v1232, 0.7978846
    %v1235 = vtanh.pop %v1233
    %v1236 = vtanh.pop %v1234
    %v1237 = vadd.f32 %v1235, 1.0
    %v1238 = vadd.f32 %v1236, 1.0
    %v1239 = vmul.f32 %v1237, 0.5
    %v1240 = vmul.f32 %v1238, 0.5
    %v1241 = vmul.f32 %v1217, %v1239
    %v1242 = vmul.f32 %v1222, %v1240
    %v1243 = vld [vmem:[%s6] sm:$0xff]
    %v1244 = vld [vmem:[%s6 + $0x8] sm:$0xff]
    %v1245 = vld [vmem:[%s6 + $0x10] sm:$0xff]
    %v1246 = vld [vmem:[%s6 + $0x18] sm:$0xff]
    %v1247 = vld [vmem:[%s6 + $0x20] sm:$0xff]
    %v1248 = vld [vmem:[%s6 + $0x28] sm:$0xff]
    %v1249 = vld [vmem:[%s6 + $0x30] sm:$0xff]
    %v1250 = vld [vmem:[%s6 + $0x38] sm:$0xff]
    %v1251 = vld [vmem:[%s6 + $0x40] sm:$0xff]
    %v1252 = vld [vmem:[%s6 + $0x48] sm:$0xff]
    %v1253 = vld [vmem:[%s6 + $0x50] sm:$0xff]
    %v1254 = vld [vmem:[%s6 + $0x58] sm:$0xff]
    %v1255 = vld [vmem:[%s6 + $0x60] sm:$0xff]
    %v1256 = vld [vmem:[%s6 + $0x68] sm:$0xff]
    %v1257 = vld [vmem:[%s6 + $0x70] sm:$0xff]
    %v1258 = vld [vmem:[%s6 + $0x78] sm:$0xff]
    %v1259 = vlaneseq
    %v1260 = vshrl.u32 %v1259, 7
    %v1261 = vsub.s32 3, %v1260
    %v1262 = vrot.slane %v82, %v1261
    %1263 = vmatprep.subr.mxu0 0.0
    %1264 = vmatpush1.msra.mxu0 %v1258
    %1265 = vmatprep.subr.mxu0 0.0
    %1266 = vmatpush1.msra.mxu0 %v1257
    %1267 = vmatprep.subr.mxu0 0.0
    %1268 = vmatpush1.msra.mxu0 %v1256
    %1269 = vmatprep.subr.mxu0 0.0
    %1270 = vmatpush1.msra.mxu0 %v1255
    %1271 = vmatprep.subr.mxu0 0.0
    %1272 = vmatpush1.msra.mxu0 %v1254
    %1273 = vmatprep.subr.mxu0 0.0
    %1274 = vmatpush1.msra.mxu0 %v1253
    %1275 = vmatprep.subr.mxu0 0.0
    %1276 = vmatpush1.msra.mxu0 %v1252
    %1277 = vmatprep.subr.mxu0 0.0
    %1278 = vmatpush1.msra.mxu0 %v1251
    %1279 = vmatprep.subr.mxu0 0.0
    %1280 = vmatpush1.msra.mxu0 %v1250
    %1281 = vmatprep.subr.mxu0 0.0
    %1282 = vmatpush1.msra.mxu0 %v1249
    %1283 = vmatprep.subr.mxu0 0.0
    %1284 = vmatpush1.msra.mxu0 %v1248
    %1285 = vmatprep.subr.mxu0 0.0
    %1286 = vmatpush1.msra.mxu0 %v1247
    %1287 = vmatprep.subr.mxu0 0.0
    %1288 = vmatpush1.msra.mxu0 %v1246
    %1289 = vmatprep.subr.mxu0 0.0
    %1290 = vmatpush1.msra.mxu0 %v1245
    %1291 = vmatprep.subr.mxu0 0.0
    %1292 = vmatpush1.msra.mxu0 %v1244
    %1293 = vmatprep.subr.mxu0 0.0
    %1294 = vmatpush1.msra.mxu0 %v1243
    %1295 = vmatprep.subr.mxu0 0.0
    %1296 = vmatpush2.msra.mxu0 0.0
    %1297 = vmatprep.subr.mxu0 0.0
    %1298 = vmatpush2.msra.mxu0 0.0
    %1299 = vmatprep.subr.mxu0 0.0
    %1300 = vmatpush2.msra.mxu0 0.0
    %1301 = vmatprep.subr.mxu0 0.0
    %1302 = vmatpush2.msra.mxu0 0.0
    %1303 = vmatprep.subr.mxu0 0.0
    %1304 = vmatpush2.msra.mxu0 0.0
    %1305 = vmatprep.subr.mxu0 0.0
    %1306 = vmatpush2.msra.mxu0 0.0
    %1307 = vmatprep.subr.mxu0 0.0
    %1308 = vmatpush2.msra.mxu0 0.0
    %1309 = vmatprep.subr.mxu0 0.0
    %1310 = vmatpush2.msra.mxu0 0.0
    %1311 = vmatprep.subr.mxu0 0.0
    %1312 = vmatpush2.msra.mxu0 0.0
    %1313 = vmatprep.subr.mxu0 0.0
    %1314 = vmatpush2.msra.mxu0 0.0
    %1315 = vmatprep.subr.mxu0 0.0
    %1316 = vmatpush2.msra.mxu0 0.0
    %1317 = vmatprep.subr.mxu0 0.0
    %1318 = vmatpush2.msra.mxu0 0.0
    %1319 = vmatprep.subr.mxu0 0.0
    %1320 = vmatpush2.msra.mxu0 0.0
    %1321 = vmatprep.subr.mxu0 0.0
    %1322 = vmatpush2.msra.mxu0 0.0
    %1323 = vmatprep.subr.mxu0 0.0
    %1324 = vmatpush2.msra.mxu0 0.0
    %1325 = vmatprep.subr.mxu0 0.0
    %1326 = vmatpush2.msra.mxu0 0.0
    %1327 = vmatprep.mubr.f32.mxu0 0.0
    %1328 = vmatmul.mubr.f32.gmra.mxu0 %v1241
    %v1329 = vpop.f32.mrf.mxu0
    %v1330 = vadd.f32 %v1262, %v1329
    %v1331 = vpop.f32.mrf.mxu0
    %1332 = vmatprep.mubr.f32.mxu0 0.0
    %1333 = vmatmul.mubr.f32.gmra.mxu0 %v1242
    %v1334 = vpop.f32.mrf.mxu0
    %v1335 = vadd.f32 %v1262, %v1334
    %v1336 = vpop.f32.mrf.mxu0
    %1337 = vdwg.mxu0
    %v1338 = vadd.f32 %v1134, %v1330
    %v1339 = vadd.f32 %v1135, %v1335
    %v1340 = vsel %vm37, %v1338, 0.0
    %1341 = vadd.xlane.f32.xlu0 %v1340
    %v1342 = vpop.xlane.xlu0 %1341
    %v1343 = vsel %vm37, %v1339, 0.0
    %1344 = vadd.xlane.f32.xlu0 %v1343
    %v1345 = vpop.xlane.xlu0 %1344
    %v1346 = vmul.f32 %v1342, 0.03125
    %v1347 = vmul.f32 %v1345, 0.03125
    %v1348 = vmul.f32 %v1338, %v1338
    %v1349 = vmul.f32 %v1339, %v1339
    %v1350 = vsel %vm37, %v1348, 0.0
    %1351 = vadd.xlane.f32.xlu0 %v1350
    %v1352 = vpop.xlane.xlu0 %1351
    %v1353 = vsel %vm37, %v1349, 0.0
    %1354 = vadd.xlane.f32.xlu0 %v1353
    %v1355 = vpop.xlane.xlu0 %1354
    %v1356 = vmul.f32 %v1352, 0.03125
    %v1357 = vmul.f32 %v1355, 0.03125
    %v1358 = vmul.f32 %v1346, %v1346
    %v1359 = vmul.f32 %v1347, %v1347
    %v1360 = vsub.f32 %v1356, %v1358
    %v1361 = vsub.f32 %v1357, %v1359
    %v1362 = vsub.f32 %v1338, %v1346
    %v1363 = vsub.f32 %v1339, %v1347
    %v1364 = vadd.f32 %v1360, 1e-12
    %v1365 = vadd.f32 %v1361, 1e-12
    %v1366 = vrsqrt.pop %v1364
    %v1367 = vrsqrt.pop %v1365
    %v1368 = vmul.f32 %v1362, %v1366
    %v1369 = vmul.f32 %v1363, %v1367
    %v1370 = vlaneseq
    %v1371 = vshrl.u32 %v1370, 7
    %v1372 = vsub.s32 6, %v1371
    %v1373 = vrot.slane %v82, %v1372
    %v1374 = vmul.f32 %v1368, %v1373
    %v1375 = vmul.f32 %v1369, %v1373
    %v1376 = vlaneseq
    %v1377 = vshrl.u32 %v1376, 7
    %v1378 = vsub.s32 7, %v1377
    %v1379 = vrot.slane %v82, %v1378
    %v1380 = vadd.f32 %v1374, %v1379
    %v1381 = vadd.f32 %v1375, %v1379
    %s1382 = scalar_lea.vmem %s7, 8
    %v1383 = vld [vmem:[%s1382] sm:$0xff]
    %s1384 = scalar_lea.vmem %s3, 32
    %v1385 = vld [vmem:[%s1384] sm:$0xff]
    %v1386 = vld [vmem:[%s1384 + $0x8] sm:$0xff]
    %v1387 = vld [vmem:[%s1384 + $0x10] sm:$0xff]
    %v1388 = vld [vmem:[%s1384 + $0x18] sm:$0xff]
    %v1389 = vlaneseq
    %v1390 = vshrl.u32 %v1389, 7
    %v1391 = vsub.s32 0, %v1390
    %v1392 = vrot.slane %v1383, %v1391
    %v1394 = vsel %vm37, %v1380, 0
    %v1397 = vsel %vm37, %v1381, 0
    %1399 = vmatprep.subr.mxu0 0.0
    %1400 = vmatpush1.msra.mxu0 0.0
    %1401 = vmatprep.subr.mxu0 0.0
    %1402 = vmatpush1.msra.mxu0 0.0
    %1403 = vmatprep.subr.mxu0 0.0
    %1404 = vmatpush1.msra.mxu0 0.0
    %1405 = vmatprep.subr.mxu0 0.0
    %1406 = vmatpush1.msra.mxu0 0.0
    %1407 = vmatprep.subr.mxu0 0.0
    %1408 = vmatpush1.msra.mxu0 0.0
    %1409 = vmatprep.subr.mxu0 0.0
    %1410 = vmatpush1.msra.mxu0 0.0
    %1411 = vmatprep.subr.mxu0 0.0
    %1412 = vmatpush1.msra.mxu0 0.0
    %1413 = vmatprep.subr.mxu0 0.0
    %1414 = vmatpush1.msra.mxu0 0.0
    %1415 = vmatprep.subr.mxu0 0.0
    %1416 = vmatpush1.msra.mxu0 0.0
    %1417 = vmatprep.subr.mxu0 0.0
    %1418 = vmatpush1.msra.mxu0 0.0
    %1419 = vmatprep.subr.mxu0 0.0
    %1420 = vmatpush1.msra.mxu0 0.0
    %1421 = vmatprep.subr.mxu0 0.0
    %1422 = vmatpush1.msra.mxu0 0.0
    %1423 = vmatprep.subr.mxu0 0.0
    %1424 = vmatpush1.msra.mxu0 %v1388
    %1425 = vmatprep.subr.mxu0 0.0
    %1426 = vmatpush1.msra.mxu0 %v1387
    %1427 = vmatprep.subr.mxu0 0.0
    %1428 = vmatpush1.msra.mxu0 %v1386
    %1429 = vmatprep.subr.mxu0 0.0
    %1430 = vmatpush1.msra.mxu0 %v1385
    %1431 = vmatprep.subr.mxu0 0.0
    %1432 = vmatpush2.msra.mxu0 0.0
    %1433 = vmatprep.subr.mxu0 0.0
    %1434 = vmatpush2.msra.mxu0 0.0
    %1435 = vmatprep.subr.mxu0 0.0
    %1436 = vmatpush2.msra.mxu0 0.0
    %1437 = vmatprep.subr.mxu0 0.0
    %1438 = vmatpush2.msra.mxu0 0.0
    %1439 = vmatprep.subr.mxu0 0.0
    %1440 = vmatpush2.msra.mxu0 0.0
    %1441 = vmatprep.subr.mxu0 0.0
    %1442 = vmatpush2.msra.mxu0 0.0
    %1443 = vmatprep.subr.mxu0 0.0
    %1444 = vmatpush2.msra.mxu0 0.0
    %1445 = vmatprep.subr.mxu0 0.0
    %1446 = vmatpush2.msra.mxu0 0.0
    %1447 = vmatprep.subr.mxu0 0.0
    %1448 = vmatpush2.msra.mxu0 0.0
    %1449 = vmatprep.subr.mxu0 0.0
    %1450 = vmatpush2.msra.mxu0 0.0
    %1451 = vmatprep.subr.mxu0 0.0
    %1452 = vmatpush2.msra.mxu0 0.0
    %1453 = vmatprep.subr.mxu0 0.0
    %1454 = vmatpush2.msra.mxu0 0.0
    %1455 = vmatprep.subr.mxu0 0.0
    %1456 = vmatpush2.msra.mxu0 0.0
    %1457 = vmatprep.subr.mxu0 0.0
    %1458 = vmatpush2.msra.mxu0 0.0
    %1459 = vmatprep.subr.mxu0 0.0
    %1460 = vmatpush2.msra.mxu0 0.0
    %1461 = vmatprep.subr.mxu0 0.0
    %1462 = vmatpush2.msra.mxu0 0.0
    %1463 = vmatprep.mubr.f32.mxu0 0.0
    %1464 = vmatmul.mubr.f32.gmra.mxu0 %v1394
    %v1465 = vpop.f32.mrf.mxu0
    %v1466 = vadd.f32 %v1392, %v1465
    %v1467 = vpop.f32.mrf.mxu0
    %1468 = vmatprep.mubr.f32.mxu0 0.0
    %1469 = vmatmul.mubr.f32.gmra.mxu0 %v1397
    %v1470 = vpop.f32.mrf.mxu0
    %v1471 = vadd.f32 %v1392, %v1470
    %v1472 = vpop.f32.mrf.mxu0
    %1473 = vdwg.mxu0
    %1476 = vrot.lane.b32.xlu0 %v1466, 120
    %v1477 = vpop.permute.xlu0 %1476
    %1478 = vrot.lane.b32.xlu0 %v1471, 120
    %v1479 = vpop.permute.xlu0 %1478
    %1480 = vrot.lane.b32.xlu0 %v1466, 112
    %v1481 = vpop.permute.xlu0 %1480
    %1482 = vrot.lane.b32.xlu0 %v1471, 112
    %v1483 = vpop.permute.xlu0 %1482
    %1484 = vrot.lane.b32.xlu0 %v1466, 104
    %v1485 = vpop.permute.xlu0 %1484
    %1486 = vrot.lane.b32.xlu0 %v1471, 104
    %v1487 = vpop.permute.xlu0 %1486
    %1488 = vrot.lane.b32.xlu0 %v1466, 96
    %v1489 = vpop.permute.xlu0 %1488
    %1490 = vrot.lane.b32.xlu0 %v1471, 96
    %v1491 = vpop.permute.xlu0 %1490
    %v1492 = vsel %vm190, %v1466, 0
    %v1494 = vsel %vm190, %v1471, 0
    %v1496 = vsel %vm190, %v1489, 0
    %v1498 = vsel %vm190, %v1491, 0
    %1500 = vmatprep.subr.mxu0 0.0
    %1501 = vmatpush1.xpose.msra.mxu0 0.0
    %1502 = vmatprep.subr.mxu0 0.0
    %1503 = vmatpush1.xpose.msra.mxu0 0.0
    %1504 = vmatprep.subr.mxu0 0.0
    %1505 = vmatpush1.xpose.msra.mxu0 0.0
    %1506 = vmatprep.subr.mxu0 0.0
    %1507 = vmatpush1.xpose.msra.mxu0 0.0
    %1508 = vmatprep.subr.mxu0 0.0
    %1509 = vmatpush1.xpose.msra.mxu0 0.0
    %1510 = vmatprep.subr.mxu0 0.0
    %1511 = vmatpush1.xpose.msra.mxu0 0.0
    %1512 = vmatprep.subr.mxu0 0.0
    %1513 = vmatpush1.xpose.msra.mxu0 0.0
    %1514 = vmatprep.subr.mxu0 0.0
    %1515 = vmatpush1.xpose.msra.mxu0 0.0
    %1516 = vmatprep.subr.mxu0 0.0
    %1517 = vmatpush1.xpose.msra.mxu0 0.0
    %1518 = vmatprep.subr.mxu0 0.0
    %1519 = vmatpush1.xpose.msra.mxu0 0.0
    %1520 = vmatprep.subr.mxu0 0.0
    %1521 = vmatpush1.xpose.msra.mxu0 0.0
    %1522 = vmatprep.subr.mxu0 0.0
    %1523 = vmatpush1.xpose.msra.mxu0 0.0
    %1524 = vmatprep.subr.mxu0 0.0
    %1525 = vmatpush1.xpose.msra.mxu0 0.0
    %1526 = vmatprep.subr.mxu0 0.0
    %1527 = vmatpush1.xpose.msra.mxu0 0.0
    %1528 = vmatprep.subr.mxu0 0.0
    %1529 = vmatpush1.xpose.msra.mxu0 %v1498
    %1530 = vmatprep.subr.mxu0 0.0
    %1531 = vmatpush1.xpose.msra.mxu0 %v1496
    %1532 = vmatprep.subr.mxu0 0.0
    %1533 = vmatpush2.xpose.msra.mxu0 0.0
    %1534 = vmatprep.subr.mxu0 0.0
    %1535 = vmatpush2.xpose.msra.mxu0 0.0
    %1536 = vmatprep.subr.mxu0 0.0
    %1537 = vmatpush2.xpose.msra.mxu0 0.0
    %1538 = vmatprep.subr.mxu0 0.0
    %1539 = vmatpush2.xpose.msra.mxu0 0.0
    %1540 = vmatprep.subr.mxu0 0.0
    %1541 = vmatpush2.xpose.msra.mxu0 0.0
    %1542 = vmatprep.subr.mxu0 0.0
    %1543 = vmatpush2.xpose.msra.mxu0 0.0
    %1544 = vmatprep.subr.mxu0 0.0
    %1545 = vmatpush2.xpose.msra.mxu0 0.0
    %1546 = vmatprep.subr.mxu0 0.0
    %1547 = vmatpush2.xpose.msra.mxu0 0.0
    %1548 = vmatprep.subr.mxu0 0.0
    %1549 = vmatpush2.xpose.msra.mxu0 0.0
    %1550 = vmatprep.subr.mxu0 0.0
    %1551 = vmatpush2.xpose.msra.mxu0 0.0
    %1552 = vmatprep.subr.mxu0 0.0
    %1553 = vmatpush2.xpose.msra.mxu0 0.0
    %1554 = vmatprep.subr.mxu0 0.0
    %1555 = vmatpush2.xpose.msra.mxu0 0.0
    %1556 = vmatprep.subr.mxu0 0.0
    %1557 = vmatpush2.xpose.msra.mxu0 0.0
    %1558 = vmatprep.subr.mxu0 0.0
    %1559 = vmatpush2.xpose.msra.mxu0 0.0
    %1560 = vmatprep.subr.mxu0 0.0
    %1561 = vmatpush2.xpose.msra.mxu0 0.0
    %1562 = vmatprep.subr.mxu0 0.0
    %1563 = vmatpush2.xpose.msra.mxu0 0.0
    %1564 = vmatprep.mubr.f32.mxu0 0.0
    %1565 = vmatmul.mubr.f32.gmra.mxu0 %v1492
    %v1566 = vpop.f32.mrf.mxu0
    %v1567 = vadd.f32 %v80, %v1566
    %v1568 = vpop.f32.mrf.mxu0
    %1569 = vmatprep.mubr.f32.mxu0 0.0
    %1570 = vmatmul.mubr.f32.gmra.mxu0 %v1494
    %v1571 = vpop.f32.mrf.mxu0
    %v1572 = vadd.f32 %v81, %v1571
    %v1573 = vpop.f32.mrf.mxu0
    %1574 = vdwg.mxu0
    %1575 = vrot.lane.b32.xlu0 %v1477, 96
    %v1576 = vpop.permute.xlu0 %1575
    %1577 = vrot.lane.b32.xlu0 %v1479, 96
    %v1578 = vpop.permute.xlu0 %1577
    %v1579 = vsel %vm190, %v1477, 0
    %v1581 = vsel %vm190, %v1479, 0
    %v1583 = vsel %vm190, %v1576, 0
    %v1585 = vsel %vm190, %v1578, 0
    %1587 = vmatprep.subr.mxu0 0.0
    %1588 = vmatpush1.xpose.msra.mxu0 0.0
    %1589 = vmatprep.subr.mxu0 0.0
    %1590 = vmatpush1.xpose.msra.mxu0 0.0
    %1591 = vmatprep.subr.mxu0 0.0
    %1592 = vmatpush1.xpose.msra.mxu0 0.0
    %1593 = vmatprep.subr.mxu0 0.0
    %1594 = vmatpush1.xpose.msra.mxu0 0.0
    %1595 = vmatprep.subr.mxu0 0.0
    %1596 = vmatpush1.xpose.msra.mxu0 0.0
    %1597 = vmatprep.subr.mxu0 0.0
    %1598 = vmatpush1.xpose.msra.mxu0 0.0
    %1599 = vmatprep.subr.mxu0 0.0
    %1600 = vmatpush1.xpose.msra.mxu0 0.0
    %1601 = vmatprep.subr.mxu0 0.0
    %1602 = vmatpush1.xpose.msra.mxu0 0.0
    %1603 = vmatprep.subr.mxu0 0.0
    %1604 = vmatpush1.xpose.msra.mxu0 0.0
    %1605 = vmatprep.subr.mxu0 0.0
    %1606 = vmatpush1.xpose.msra.mxu0 0.0
    %1607 = vmatprep.subr.mxu0 0.0
    %1608 = vmatpush1.xpose.msra.mxu0 0.0
    %1609 = vmatprep.subr.mxu0 0.0
    %1610 = vmatpush1.xpose.msra.mxu0 0.0
    %1611 = vmatprep.subr.mxu0 0.0
    %1612 = vmatpush1.xpose.msra.mxu0 0.0
    %1613 = vmatprep.subr.mxu0 0.0
    %1614 = vmatpush1.xpose.msra.mxu0 0.0
    %1615 = vmatprep.subr.mxu0 0.0
    %1616 = vmatpush1.xpose.msra.mxu0 %v1585
    %1617 = vmatprep.subr.mxu0 0.0
    %1618 = vmatpush1.xpose.msra.mxu0 %v1583
    %1619 = vmatprep.subr.mxu0 0.0
    %1620 = vmatpush2.xpose.msra.mxu0 0.0
    %1621 = vmatprep.subr.mxu0 0.0
    %1622 = vmatpush2.xpose.msra.mxu0 0.0
    %1623 = vmatprep.subr.mxu0 0.0
    %1624 = vmatpush2.xpose.msra.mxu0 0.0
    %1625 = vmatprep.subr.mxu0 0.0
    %1626 = vmatpush2.xpose.msra.mxu0 0.0
    %1627 = vmatprep.subr.mxu0 0.0
    %1628 = vmatpush2.xpose.msra.mxu0 0.0
    %1629 = vmatprep.subr.mxu0 0.0
    %1630 = vmatpush2.xpose.msra.mxu0 0.0
    %1631 = vmatprep.subr.mxu0 0.0
    %1632 = vmatpush2.xpose.msra.mxu0 0.0
    %1633 = vmatprep.subr.mxu0 0.0
    %1634 = vmatpush2.xpose.msra.mxu0 0.0
    %1635 = vmatprep.subr.mxu0 0.0
    %1636 = vmatpush2.xpose.msra.mxu0 0.0
    %1637 = vmatprep.subr.mxu0 0.0
    %1638 = vmatpush2.xpose.msra.mxu0 0.0
    %1639 = vmatprep.subr.mxu0 0.0
    %1640 = vmatpush2.xpose.msra.mxu0 0.0
    %1641 = vmatprep.subr.mxu0 0.0
    %1642 = vmatpush2.xpose.msra.mxu0 0.0
    %1643 = vmatprep.subr.mxu0 0.0
    %1644 = vmatpush2.xpose.msra.mxu0 0.0
    %1645 = vmatprep.subr.mxu0 0.0
    %1646 = vmatpush2.xpose.msra.mxu0 0.0
    %1647 = vmatprep.subr.mxu0 0.0
    %1648 = vmatpush2.xpose.msra.mxu0 0.0
    %1649 = vmatprep.subr.mxu0 0.0
    %1650 = vmatpush2.xpose.msra.mxu0 0.0
    %1651 = vmatprep.mubr.f32.mxu0 0.0
    %1652 = vmatmul.mubr.f32.gmra.mxu0 %v1579
    %v1653 = vpop.f32.mrf.mxu0
    %v1654 = vadd.f32 %v80, %v1653
    %v1655 = vpop.f32.mrf.mxu0
    %1656 = vmatprep.mubr.f32.mxu0 0.0
    %1657 = vmatmul.mubr.f32.gmra.mxu0 %v1581
    %v1658 = vpop.f32.mrf.mxu0
    %v1659 = vadd.f32 %v81, %v1658
    %v1660 = vpop.f32.mrf.mxu0
    %1661 = vdwg.mxu0
    %1662 = vrot.lane.b32.xlu0 %v1481, 96
    %v1663 = vpop.permute.xlu0 %1662
    %1664 = vrot.lane.b32.xlu0 %v1483, 96
    %v1665 = vpop.permute.xlu0 %1664
    %v1666 = vsel %vm190, %v1481, 0
    %v1668 = vsel %vm190, %v1483, 0
    %v1670 = vsel %vm190, %v1663, 0
    %v1672 = vsel %vm190, %v1665, 0
    %1674 = vmatprep.subr.mxu0 0.0
    %1675 = vmatpush1.xpose.msra.mxu0 0.0
    %1676 = vmatprep.subr.mxu0 0.0
    %1677 = vmatpush1.xpose.msra.mxu0 0.0
    %1678 = vmatprep.subr.mxu0 0.0
    %1679 = vmatpush1.xpose.msra.mxu0 0.0
    %1680 = vmatprep.subr.mxu0 0.0
    %1681 = vmatpush1.xpose.msra.mxu0 0.0
    %1682 = vmatprep.subr.mxu0 0.0
    %1683 = vmatpush1.xpose.msra.mxu0 0.0
    %1684 = vmatprep.subr.mxu0 0.0
    %1685 = vmatpush1.xpose.msra.mxu0 0.0
    %1686 = vmatprep.subr.mxu0 0.0
    %1687 = vmatpush1.xpose.msra.mxu0 0.0
    %1688 = vmatprep.subr.mxu0 0.0
    %1689 = vmatpush1.xpose.msra.mxu0 0.0
    %1690 = vmatprep.subr.mxu0 0.0
    %1691 = vmatpush1.xpose.msra.mxu0 0.0
    %1692 = vmatprep.subr.mxu0 0.0
    %1693 = vmatpush1.xpose.msra.mxu0 0.0
    %1694 = vmatprep.subr.mxu0 0.0
    %1695 = vmatpush1.xpose.msra.mxu0 0.0
    %1696 = vmatprep.subr.mxu0 0.0
    %1697 = vmatpush1.xpose.msra.mxu0 0.0
    %1698 = vmatprep.subr.mxu0 0.0
    %1699 = vmatpush1.xpose.msra.mxu0 0.0
    %1700 = vmatprep.subr.mxu0 0.0
    %1701 = vmatpush1.xpose.msra.mxu0 0.0
    %1702 = vmatprep.subr.mxu0 0.0
    %1703 = vmatpush1.xpose.msra.mxu0 %v1672
    %1704 = vmatprep.subr.mxu0 0.0
    %1705 = vmatpush1.xpose.msra.mxu0 %v1670
    %1706 = vmatprep.subr.mxu0 0.0
    %1707 = vmatpush2.xpose.msra.mxu0 0.0
    %1708 = vmatprep.subr.mxu0 0.0
    %1709 = vmatpush2.xpose.msra.mxu0 0.0
    %1710 = vmatprep.subr.mxu0 0.0
    %1711 = vmatpush2.xpose.msra.mxu0 0.0
    %1712 = vmatprep.subr.mxu0 0.0
    %1713 = vmatpush2.xpose.msra.mxu0 0.0
    %1714 = vmatprep.subr.mxu0 0.0
    %1715 = vmatpush2.xpose.msra.mxu0 0.0
    %1716 = vmatprep.subr.mxu0 0.0
    %1717 = vmatpush2.xpose.msra.mxu0 0.0
    %1718 = vmatprep.subr.mxu0 0.0
    %1719 = vmatpush2.xpose.msra.mxu0 0.0
    %1720 = vmatprep.subr.mxu0 0.0
    %1721 = vmatpush2.xpose.msra.mxu0 0.0
    %1722 = vmatprep.subr.mxu0 0.0
    %1723 = vmatpush2.xpose.msra.mxu0 0.0
    %1724 = vmatprep.subr.mxu0 0.0
    %1725 = vmatpush2.xpose.msra.mxu0 0.0
    %1726 = vmatprep.subr.mxu0 0.0
    %1727 = vmatpush2.xpose.msra.mxu0 0.0
    %1728 = vmatprep.subr.mxu0 0.0
    %1729 = vmatpush2.xpose.msra.mxu0 0.0
    %1730 = vmatprep.subr.mxu0 0.0
    %1731 = vmatpush2.xpose.msra.mxu0 0.0
    %1732 = vmatprep.subr.mxu0 0.0
    %1733 = vmatpush2.xpose.msra.mxu0 0.0
    %1734 = vmatprep.subr.mxu0 0.0
    %1735 = vmatpush2.xpose.msra.mxu0 0.0
    %1736 = vmatprep.subr.mxu0 0.0
    %1737 = vmatpush2.xpose.msra.mxu0 0.0
    %1738 = vmatprep.mubr.f32.mxu0 0.0
    %1739 = vmatmul.mubr.f32.gmra.mxu0 %v1666
    %v1740 = vpop.f32.mrf.mxu0
    %v1741 = vadd.f32 %v80, %v1740
    %v1742 = vpop.f32.mrf.mxu0
    %1743 = vmatprep.mubr.f32.mxu0 0.0
    %1744 = vmatmul.mubr.f32.gmra.mxu0 %v1668
    %v1745 = vpop.f32.mrf.mxu0
    %v1746 = vadd.f32 %v81, %v1745
    %v1747 = vpop.f32.mrf.mxu0
    %1748 = vdwg.mxu0
    %1749 = vrot.lane.b32.xlu0 %v1485, 96
    %v1750 = vpop.permute.xlu0 %1749
    %1751 = vrot.lane.b32.xlu0 %v1487, 96
    %v1752 = vpop.permute.xlu0 %1751
    %v1753 = vsel %vm190, %v1485, 0
    %v1755 = vsel %vm190, %v1487, 0
    %v1757 = vsel %vm190, %v1750, 0
    %v1759 = vsel %vm190, %v1752, 0
    %1761 = vmatprep.subr.mxu0 0.0
    %1762 = vmatpush1.xpose.msra.mxu0 0.0
    %1763 = vmatprep.subr.mxu0 0.0
    %1764 = vmatpush1.xpose.msra.mxu0 0.0
    %1765 = vmatprep.subr.mxu0 0.0
    %1766 = vmatpush1.xpose.msra.mxu0 0.0
    %1767 = vmatprep.subr.mxu0 0.0
    %1768 = vmatpush1.xpose.msra.mxu0 0.0
    %1769 = vmatprep.subr.mxu0 0.0
    %1770 = vmatpush1.xpose.msra.mxu0 0.0
    %1771 = vmatprep.subr.mxu0 0.0
    %1772 = vmatpush1.xpose.msra.mxu0 0.0
    %1773 = vmatprep.subr.mxu0 0.0
    %1774 = vmatpush1.xpose.msra.mxu0 0.0
    %1775 = vmatprep.subr.mxu0 0.0
    %1776 = vmatpush1.xpose.msra.mxu0 0.0
    %1777 = vmatprep.subr.mxu0 0.0
    %1778 = vmatpush1.xpose.msra.mxu0 0.0
    %1779 = vmatprep.subr.mxu0 0.0
    %1780 = vmatpush1.xpose.msra.mxu0 0.0
    %1781 = vmatprep.subr.mxu0 0.0
    %1782 = vmatpush1.xpose.msra.mxu0 0.0
    %1783 = vmatprep.subr.mxu0 0.0
    %1784 = vmatpush1.xpose.msra.mxu0 0.0
    %1785 = vmatprep.subr.mxu0 0.0
    %1786 = vmatpush1.xpose.msra.mxu0 0.0
    %1787 = vmatprep.subr.mxu0 0.0
    %1788 = vmatpush1.xpose.msra.mxu0 0.0
    %1789 = vmatprep.subr.mxu0 0.0
    %1790 = vmatpush1.xpose.msra.mxu0 %v1759
    %1791 = vmatprep.subr.mxu0 0.0
    %1792 = vmatpush1.xpose.msra.mxu0 %v1757
    %1793 = vmatprep.subr.mxu0 0.0
    %1794 = vmatpush2.xpose.msra.mxu0 0.0
    %1795 = vmatprep.subr.mxu0 0.0
    %1796 = vmatpush2.xpose.msra.mxu0 0.0
    %1797 = vmatprep.subr.mxu0 0.0
    %1798 = vmatpush2.xpose.msra.mxu0 0.0
    %1799 = vmatprep.subr.mxu0 0.0
    %1800 = vmatpush2.xpose.msra.mxu0 0.0
    %1801 = vmatprep.subr.mxu0 0.0
    %1802 = vmatpush2.xpose.msra.mxu0 0.0
    %1803 = vmatprep.subr.mxu0 0.0
    %1804 = vmatpush2.xpose.msra.mxu0 0.0
    %1805 = vmatprep.subr.mxu0 0.0
    %1806 = vmatpush2.xpose.msra.mxu0 0.0
    %1807 = vmatprep.subr.mxu0 0.0
    %1808 = vmatpush2.xpose.msra.mxu0 0.0
    %1809 = vmatprep.subr.mxu0 0.0
    %1810 = vmatpush2.xpose.msra.mxu0 0.0
    %1811 = vmatprep.subr.mxu0 0.0
    %1812 = vmatpush2.xpose.msra.mxu0 0.0
    %1813 = vmatprep.subr.mxu0 0.0
    %1814 = vmatpush2.xpose.msra.mxu0 0.0
    %1815 = vmatprep.subr.mxu0 0.0
    %1816 = vmatpush2.xpose.msra.mxu0 0.0
    %1817 = vmatprep.subr.mxu0 0.0
    %1818 = vmatpush2.xpose.msra.mxu0 0.0
    %1819 = vmatprep.subr.mxu0 0.0
    %1820 = vmatpush2.xpose.msra.mxu0 0.0
    %1821 = vmatprep.subr.mxu0 0.0
    %1822 = vmatpush2.xpose.msra.mxu0 0.0
    %1823 = vmatprep.subr.mxu0 0.0
    %1824 = vmatpush2.xpose.msra.mxu0 0.0
    %1825 = vmatprep.mubr.f32.mxu0 0.0
    %1826 = vmatmul.mubr.f32.gmra.mxu0 %v1753
    %v1827 = vpop.f32.mrf.mxu0
    %v1828 = vadd.f32 %v80, %v1827
    %v1829 = vpop.f32.mrf.mxu0
    %1830 = vmatprep.mubr.f32.mxu0 0.0
    %1831 = vmatmul.mubr.f32.gmra.mxu0 %v1755
    %v1832 = vpop.f32.mrf.mxu0
    %v1833 = vadd.f32 %v81, %v1832
    %v1834 = vpop.f32.mrf.mxu0
    %1835 = vdwg.mxu0
    %v1836 = vsel %vm535, %v1567, -inf
    %1837 = vmax.xlane.f32.xlu0 %v1836
    %v1838 = vpop.xlane.xlu0 %1837
    %v1839 = vsel %vm535, %v1572, -inf
    %1840 = vmax.xlane.f32.xlu0 %v1839
    %v1841 = vpop.xlane.xlu0 %1840
    %v1842 = vsel %vm535, %v1654, -inf
    %1843 = vmax.xlane.f32.xlu0 %v1842
    %v1844 = vpop.xlane.xlu0 %1843
    %v1845 = vsel %vm535, %v1659, -inf
    %1846 = vmax.xlane.f32.xlu0 %v1845
    %v1847 = vpop.xlane.xlu0 %1846
    %v1848 = vsel %vm535, %v1741, -inf
    %1849 = vmax.xlane.f32.xlu0 %v1848
    %v1850 = vpop.xlane.xlu0 %1849
    %v1851 = vsel %vm535, %v1746, -inf
    %1852 = vmax.xlane.f32.xlu0 %v1851
    %v1853 = vpop.xlane.xlu0 %1852
    %v1854 = vsel %vm535, %v1828, -inf
    %1855 = vmax.xlane.f32.xlu0 %v1854
    %v1856 = vpop.xlane.xlu0 %1855
    %v1857 = vsel %vm535, %v1833, -inf
    %1858 = vmax.xlane.f32.xlu0 %v1857
    %v1859 = vpop.xlane.xlu0 %1858
    %v1860 = vsub.f32 %v1567, %v1838
    %v1861 = vsub.f32 %v1572, %v1841
    %v1862 = vsub.f32 %v1654, %v1844
    %v1863 = vsub.f32 %v1659, %v1847
    %v1864 = vsub.f32 %v1741, %v1850
    %v1865 = vsub.f32 %v1746, %v1853
    %v1866 = vsub.f32 %v1828, %v1856
    %v1867 = vsub.f32 %v1833, %v1859
    %v1868 = vmul.f32 %v1860, 1.442695
    %v1869 = vpow.pop %v1868
    %v1870 = vmul.f32 %v1861, 1.442695
    %v1871 = vpow.pop %v1870
    %v1872 = vmul.f32 %v1862, 1.442695
    %v1873 = vpow.pop %v1872
    %v1874 = vmul.f32 %v1863, 1.442695
    %v1875 = vpow.pop %v1874
    %v1876 = vmul.f32 %v1864, 1.442695
    %v1877 = vpow.pop %v1876
    %v1878 = vmul.f32 %v1865, 1.442695
    %v1879 = vpow.pop %v1878
    %v1880 = vmul.f32 %v1866, 1.442695
    %v1881 = vpow.pop %v1880
    %v1882 = vmul.f32 %v1867, 1.442695
    %v1883 = vpow.pop %v1882
    %v1884 = vsel %vm535, %v1869, 0.0
    %1885 = vadd.xlane.f32.xlu0 %v1884
    %v1886 = vpop.xlane.xlu0 %1885
    %v1887 = vsel %vm535, %v1871, 0.0
    %1888 = vadd.xlane.f32.xlu0 %v1887
    %v1889 = vpop.xlane.xlu0 %1888
    %v1890 = vsel %vm535, %v1873, 0.0
    %1891 = vadd.xlane.f32.xlu0 %v1890
    %v1892 = vpop.xlane.xlu0 %1891
    %v1893 = vsel %vm535, %v1875, 0.0
    %1894 = vadd.xlane.f32.xlu0 %v1893
    %v1895 = vpop.xlane.xlu0 %1894
    %v1896 = vsel %vm535, %v1877, 0.0
    %1897 = vadd.xlane.f32.xlu0 %v1896
    %v1898 = vpop.xlane.xlu0 %1897
    %v1899 = vsel %vm535, %v1879, 0.0
    %1900 = vadd.xlane.f32.xlu0 %v1899
    %v1901 = vpop.xlane.xlu0 %1900
    %v1902 = vsel %vm535, %v1881, 0.0
    %1903 = vadd.xlane.f32.xlu0 %v1902
    %v1904 = vpop.xlane.xlu0 %1903
    %v1905 = vsel %vm535, %v1883, 0.0
    %1906 = vadd.xlane.f32.xlu0 %v1905
    %v1907 = vpop.xlane.xlu0 %1906
    %v1908 = vrcp.pop %v1886
    %v1909 = vmul.f32 %v1869, %v1908
    %v1910 = vrcp.pop %v1889
    %v1911 = vmul.f32 %v1871, %v1910
    %v1912 = vrcp.pop %v1892
    %v1913 = vmul.f32 %v1873, %v1912
    %v1914 = vrcp.pop %v1895
    %v1915 = vmul.f32 %v1875, %v1914
    %v1916 = vrcp.pop %v1898
    %v1917 = vmul.f32 %v1877, %v1916
    %v1918 = vrcp.pop %v1901
    %v1919 = vmul.f32 %v1879, %v1918
    %v1920 = vrcp.pop %v1904
    %v1921 = vmul.f32 %v1881, %v1920
    %v1922 = vrcp.pop %v1907
    %v1923 = vmul.f32 %v1883, %v1922
    %1924 = vrot.lane.b32.xlu0 %v1466, 64
    %v1925 = vpop.permute.xlu0 %1924
    %1926 = vrot.lane.b32.xlu0 %v1471, 64
    %v1927 = vpop.permute.xlu0 %1926
    %v1931 = vsel %vm535, %v1909, 0
    %v1934 = vsel %vm535, %v1911, 0
    %1936 = vmatprep.subr.mxu0 0.0
    %1937 = vmatpush1.msra.mxu0 0.0
    %1938 = vmatprep.subr.mxu0 0.0
    %1939 = vmatpush1.msra.mxu0 0.0
    %1940 = vmatprep.subr.mxu0 0.0
    %1941 = vmatpush1.msra.mxu0 0.0
    %1942 = vmatprep.subr.mxu0 0.0
    %1943 = vmatpush1.msra.mxu0 0.0
    %1944 = vmatprep.subr.mxu0 0.0
    %1945 = vmatpush1.msra.mxu0 0.0
    %1946 = vmatprep.subr.mxu0 0.0
    %1947 = vmatpush1.msra.mxu0 0.0
    %1948 = vmatprep.subr.mxu0 0.0
    %1949 = vmatpush1.msra.mxu0 0.0
    %1950 = vmatprep.subr.mxu0 0.0
    %1951 = vmatpush1.msra.mxu0 0.0
    %1952 = vmatprep.subr.mxu0 0.0
    %1953 = vmatpush1.msra.mxu0 0.0
    %1954 = vmatprep.subr.mxu0 0.0
    %1955 = vmatpush1.msra.mxu0 0.0
    %1956 = vmatprep.subr.mxu0 0.0
    %1957 = vmatpush1.msra.mxu0 0.0
    %1958 = vmatprep.subr.mxu0 0.0
    %1959 = vmatpush1.msra.mxu0 0.0
    %1960 = vmatprep.subr.mxu0 0.0
    %1961 = vmatpush1.msra.mxu0 0.0
    %1962 = vmatprep.subr.mxu0 0.0
    %1963 = vmatpush1.msra.mxu0 0.0
    %1964 = vmatprep.subr.mxu0 0.0
    %1965 = vmatpush1.msra.mxu0 %v1927
    %1966 = vmatprep.subr.mxu0 0.0
    %1967 = vmatpush1.msra.mxu0 %v1925
    %1968 = vmatprep.subr.mxu0 0.0
    %1969 = vmatpush2.msra.mxu0 0.0
    %1970 = vmatprep.subr.mxu0 0.0
    %1971 = vmatpush2.msra.mxu0 0.0
    %1972 = vmatprep.subr.mxu0 0.0
    %1973 = vmatpush2.msra.mxu0 0.0
    %1974 = vmatprep.subr.mxu0 0.0
    %1975 = vmatpush2.msra.mxu0 0.0
    %1976 = vmatprep.subr.mxu0 0.0
    %1977 = vmatpush2.msra.mxu0 0.0
    %1978 = vmatprep.subr.mxu0 0.0
    %1979 = vmatpush2.msra.mxu0 0.0
    %1980 = vmatprep.subr.mxu0 0.0
    %1981 = vmatpush2.msra.mxu0 0.0
    %1982 = vmatprep.subr.mxu0 0.0
    %1983 = vmatpush2.msra.mxu0 0.0
    %1984 = vmatprep.subr.mxu0 0.0
    %1985 = vmatpush2.msra.mxu0 0.0
    %1986 = vmatprep.subr.mxu0 0.0
    %1987 = vmatpush2.msra.mxu0 0.0
    %1988 = vmatprep.subr.mxu0 0.0
    %1989 = vmatpush2.msra.mxu0 0.0
    %1990 = vmatprep.subr.mxu0 0.0
    %1991 = vmatpush2.msra.mxu0 0.0
    %1992 = vmatprep.subr.mxu0 0.0
    %1993 = vmatpush2.msra.mxu0 0.0
    %1994 = vmatprep.subr.mxu0 0.0
    %1995 = vmatpush2.msra.mxu0 0.0
    %1996 = vmatprep.subr.mxu0 0.0
    %1997 = vmatpush2.msra.mxu0 0.0
    %1998 = vmatprep.subr.mxu0 0.0
    %1999 = vmatpush2.msra.mxu0 0.0
    %2000 = vmatprep.mubr.f32.mxu0 0.0
    %2001 = vmatmul.mubr.f32.gmra.mxu0 %v1931
    %v2002 = vpop.f32.mrf.mxu0
    %v2003 = vadd.f32 0.0, %v2002
    %v2004 = vpop.f32.mrf.mxu0
    %2005 = vmatprep.mubr.f32.mxu0 0.0
    %2006 = vmatmul.mubr.f32.gmra.mxu0 %v1934
    %v2007 = vpop.f32.mrf.mxu0
    %v2008 = vadd.f32 0.0, %v2007
    %v2009 = vpop.f32.mrf.mxu0
    %2010 = vdwg.mxu0
    %2011 = vrot.lane.b32.xlu0 %v1477, 64
    %v2012 = vpop.permute.xlu0 %2011
    %2013 = vrot.lane.b32.xlu0 %v1479, 64
    %v2014 = vpop.permute.xlu0 %2013
    %v2018 = vsel %vm535, %v1913, 0
    %v2021 = vsel %vm535, %v1915, 0
    %2023 = vmatprep.subr.mxu0 0.0
    %2024 = vmatpush1.msra.mxu0 0.0
    %2025 = vmatprep.subr.mxu0 0.0
    %2026 = vmatpush1.msra.mxu0 0.0
    %2027 = vmatprep.subr.mxu0 0.0
    %2028 = vmatpush1.msra.mxu0 0.0
    %2029 = vmatprep.subr.mxu0 0.0
    %2030 = vmatpush1.msra.mxu0 0.0
    %2031 = vmatprep.subr.mxu0 0.0
    %2032 = vmatpush1.msra.mxu0 0.0
    %2033 = vmatprep.subr.mxu0 0.0
    %2034 = vmatpush1.msra.mxu0 0.0
    %2035 = vmatprep.subr.mxu0 0.0
    %2036 = vmatpush1.msra.mxu0 0.0
    %2037 = vmatprep.subr.mxu0 0.0
    %2038 = vmatpush1.msra.mxu0 0.0
    %2039 = vmatprep.subr.mxu0 0.0
    %2040 = vmatpush1.msra.mxu0 0.0
    %2041 = vmatprep.subr.mxu0 0.0
    %2042 = vmatpush1.msra.mxu0 0.0
    %2043 = vmatprep.subr.mxu0 0.0
    %2044 = vmatpush1.msra.mxu0 0.0
    %2045 = vmatprep.subr.mxu0 0.0
    %2046 = vmatpush1.msra.mxu0 0.0
    %2047 = vmatprep.subr.mxu0 0.0
    %2048 = vmatpush1.msra.mxu0 0.0
    %2049 = vmatprep.subr.mxu0 0.0
    %2050 = vmatpush1.msra.mxu0 0.0
    %2051 = vmatprep.subr.mxu0 0.0
    %2052 = vmatpush1.msra.mxu0 %v2014
    %2053 = vmatprep.subr.mxu0 0.0
    %2054 = vmatpush1.msra.mxu0 %v2012
    %2055 = vmatprep.subr.mxu0 0.0
    %2056 = vmatpush2.msra.mxu0 0.0
    %2057 = vmatprep.subr.mxu0 0.0
    %2058 = vmatpush2.msra.mxu0 0.0
    %2059 = vmatprep.subr.mxu0 0.0
    %2060 = vmatpush2.msra.mxu0 0.0
    %2061 = vmatprep.subr.mxu0 0.0
    %2062 = vmatpush2.msra.mxu0 0.0
    %2063 = vmatprep.subr.mxu0 0.0
    %2064 = vmatpush2.msra.mxu0 0.0
    %2065 = vmatprep.subr.mxu0 0.0
    %2066 = vmatpush2.msra.mxu0 0.0
    %2067 = vmatprep.subr.mxu0 0.0
    %2068 = vmatpush2.msra.mxu0 0.0
    %2069 = vmatprep.subr.mxu0 0.0
    %2070 = vmatpush2.msra.mxu0 0.0
    %2071 = vmatprep.subr.mxu0 0.0
    %2072 = vmatpush2.msra.mxu0 0.0
    %2073 = vmatprep.subr.mxu0 0.0
    %2074 = vmatpush2.msra.mxu0 0.0
    %2075 = vmatprep.subr.mxu0 0.0
    %2076 = vmatpush2.msra.mxu0 0.0
    %2077 = vmatprep.subr.mxu0 0.0
    %2078 = vmatpush2.msra.mxu0 0.0
    %2079 = vmatprep.subr.mxu0 0.0
    %2080 = vmatpush2.msra.mxu0 0.0
    %2081 = vmatprep.subr.mxu0 0.0
    %2082 = vmatpush2.msra.mxu0 0.0
    %2083 = vmatprep.subr.mxu0 0.0
    %2084 = vmatpush2.msra.mxu0 0.0
    %2085 = vmatprep.subr.mxu0 0.0
    %2086 = vmatpush2.msra.mxu0 0.0
    %2087 = vmatprep.mubr.f32.mxu0 0.0
    %2088 = vmatmul.mubr.f32.gmra.mxu0 %v2018
    %v2089 = vpop.f32.mrf.mxu0
    %v2090 = vadd.f32 0.0, %v2089
    %v2091 = vpop.f32.mrf.mxu0
    %2092 = vmatprep.mubr.f32.mxu0 0.0
    %2093 = vmatmul.mubr.f32.gmra.mxu0 %v2021
    %v2094 = vpop.f32.mrf.mxu0
    %v2095 = vadd.f32 0.0, %v2094
    %v2096 = vpop.f32.mrf.mxu0
    %2097 = vdwg.mxu0
    %2098 = vrot.lane.b32.xlu0 %v1481, 64
    %v2099 = vpop.permute.xlu0 %2098
    %2100 = vrot.lane.b32.xlu0 %v1483, 64
    %v2101 = vpop.permute.xlu0 %2100
    %v2105 = vsel %vm535, %v1917, 0
    %v2108 = vsel %vm535, %v1919, 0
    %2110 = vmatprep.subr.mxu0 0.0
    %2111 = vmatpush1.msra.mxu0 0.0
    %2112 = vmatprep.subr.mxu0 0.0
    %2113 = vmatpush1.msra.mxu0 0.0
    %2114 = vmatprep.subr.mxu0 0.0
    %2115 = vmatpush1.msra.mxu0 0.0
    %2116 = vmatprep.subr.mxu0 0.0
    %2117 = vmatpush1.msra.mxu0 0.0
    %2118 = vmatprep.subr.mxu0 0.0
    %2119 = vmatpush1.msra.mxu0 0.0
    %2120 = vmatprep.subr.mxu0 0.0
    %2121 = vmatpush1.msra.mxu0 0.0
    %2122 = vmatprep.subr.mxu0 0.0
    %2123 = vmatpush1.msra.mxu0 0.0
    %2124 = vmatprep.subr.mxu0 0.0
    %2125 = vmatpush1.msra.mxu0 0.0
    %2126 = vmatprep.subr.mxu0 0.0
    %2127 = vmatpush1.msra.mxu0 0.0
    %2128 = vmatprep.subr.mxu0 0.0
    %2129 = vmatpush1.msra.mxu0 0.0
    %2130 = vmatprep.subr.mxu0 0.0
    %2131 = vmatpush1.msra.mxu0 0.0
    %2132 = vmatprep.subr.mxu0 0.0
    %2133 = vmatpush1.msra.mxu0 0.0
    %2134 = vmatprep.subr.mxu0 0.0
    %2135 = vmatpush1.msra.mxu0 0.0
    %2136 = vmatprep.subr.mxu0 0.0
    %2137 = vmatpush1.msra.mxu0 0.0
    %2138 = vmatprep.subr.mxu0 0.0
    %2139 = vmatpush1.msra.mxu0 %v2101
    %2140 = vmatprep.subr.mxu0 0.0
    %2141 = vmatpush1.msra.mxu0 %v2099
    %2142 = vmatprep.subr.mxu0 0.0
    %2143 = vmatpush2.msra.mxu0 0.0
    %2144 = vmatprep.subr.mxu0 0.0
    %2145 = vmatpush2.msra.mxu0 0.0
    %2146 = vmatprep.subr.mxu0 0.0
    %2147 = vmatpush2.msra.mxu0 0.0
    %2148 = vmatprep.subr.mxu0 0.0
    %2149 = vmatpush2.msra.mxu0 0.0
    %2150 = vmatprep.subr.mxu0 0.0
    %2151 = vmatpush2.msra.mxu0 0.0
    %2152 = vmatprep.subr.mxu0 0.0
    %2153 = vmatpush2.msra.mxu0 0.0
    %2154 = vmatprep.subr.mxu0 0.0
    %2155 = vmatpush2.msra.mxu0 0.0
    %2156 = vmatprep.subr.mxu0 0.0
    %2157 = vmatpush2.msra.mxu0 0.0
    %2158 = vmatprep.subr.mxu0 0.0
    %2159 = vmatpush2.msra.mxu0 0.0
    %2160 = vmatprep.subr.mxu0 0.0
    %2161 = vmatpush2.msra.mxu0 0.0
    %2162 = vmatprep.subr.mxu0 0.0
    %2163 = vmatpush2.msra.mxu0 0.0
    %2164 = vmatprep.subr.mxu0 0.0
    %2165 = vmatpush2.msra.mxu0 0.0
    %2166 = vmatprep.subr.mxu0 0.0
    %2167 = vmatpush2.msra.mxu0 0.0
    %2168 = vmatprep.subr.mxu0 0.0
    %2169 = vmatpush2.msra.mxu0 0.0
    %2170 = vmatprep.subr.mxu0 0.0
    %2171 = vmatpush2.msra.mxu0 0.0
    %2172 = vmatprep.subr.mxu0 0.0
    %2173 = vmatpush2.msra.mxu0 0.0
    %2174 = vmatprep.mubr.f32.mxu0 0.0
    %2175 = vmatmul.mubr.f32.gmra.mxu0 %v2105
    %v2176 = vpop.f32.mrf.mxu0
    %v2177 = vadd.f32 0.0, %v2176
    %v2178 = vpop.f32.mrf.mxu0
    %2179 = vmatprep.mubr.f32.mxu0 0.0
    %2180 = vmatmul.mubr.f32.gmra.mxu0 %v2108
    %v2181 = vpop.f32.mrf.mxu0
    %v2182 = vadd.f32 0.0, %v2181
    %v2183 = vpop.f32.mrf.mxu0
    %2184 = vdwg.mxu0
    %2185 = vrot.lane.b32.xlu0 %v1485, 64
    %v2186 = vpop.permute.xlu0 %2185
    %2187 = vrot.lane.b32.xlu0 %v1487, 64
    %v2188 = vpop.permute.xlu0 %2187
    %v2192 = vsel %vm535, %v1921, 0
    %v2195 = vsel %vm535, %v1923, 0
    %2197 = vmatprep.subr.mxu0 0.0
    %2198 = vmatpush1.msra.mxu0 0.0
    %2199 = vmatprep.subr.mxu0 0.0
    %2200 = vmatpush1.msra.mxu0 0.0
    %2201 = vmatprep.subr.mxu0 0.0
    %2202 = vmatpush1.msra.mxu0 0.0
    %2203 = vmatprep.subr.mxu0 0.0
    %2204 = vmatpush1.msra.mxu0 0.0
    %2205 = vmatprep.subr.mxu0 0.0
    %2206 = vmatpush1.msra.mxu0 0.0
    %2207 = vmatprep.subr.mxu0 0.0
    %2208 = vmatpush1.msra.mxu0 0.0
    %2209 = vmatprep.subr.mxu0 0.0
    %2210 = vmatpush1.msra.mxu0 0.0
    %2211 = vmatprep.subr.mxu0 0.0
    %2212 = vmatpush1.msra.mxu0 0.0
    %2213 = vmatprep.subr.mxu0 0.0
    %2214 = vmatpush1.msra.mxu0 0.0
    %2215 = vmatprep.subr.mxu0 0.0
    %2216 = vmatpush1.msra.mxu0 0.0
    %2217 = vmatprep.subr.mxu0 0.0
    %2218 = vmatpush1.msra.mxu0 0.0
    %2219 = vmatprep.subr.mxu0 0.0
    %2220 = vmatpush1.msra.mxu0 0.0
    %2221 = vmatprep.subr.mxu0 0.0
    %2222 = vmatpush1.msra.mxu0 0.0
    %2223 = vmatprep.subr.mxu0 0.0
    %2224 = vmatpush1.msra.mxu0 0.0
    %2225 = vmatprep.subr.mxu0 0.0
    %2226 = vmatpush1.msra.mxu0 %v2188
    %2227 = vmatprep.subr.mxu0 0.0
    %2228 = vmatpush1.msra.mxu0 %v2186
    %2229 = vmatprep.subr.mxu0 0.0
    %2230 = vmatpush2.msra.mxu0 0.0
    %2231 = vmatprep.subr.mxu0 0.0
    %2232 = vmatpush2.msra.mxu0 0.0
    %2233 = vmatprep.subr.mxu0 0.0
    %2234 = vmatpush2.msra.mxu0 0.0
    %2235 = vmatprep.subr.mxu0 0.0
    %2236 = vmatpush2.msra.mxu0 0.0
    %2237 = vmatprep.subr.mxu0 0.0
    %2238 = vmatpush2.msra.mxu0 0.0
    %2239 = vmatprep.subr.mxu0 0.0
    %2240 = vmatpush2.msra.mxu0 0.0
    %2241 = vmatprep.subr.mxu0 0.0
    %2242 = vmatpush2.msra.mxu0 0.0
    %2243 = vmatprep.subr.mxu0 0.0
    %2244 = vmatpush2.msra.mxu0 0.0
    %2245 = vmatprep.subr.mxu0 0.0
    %2246 = vmatpush2.msra.mxu0 0.0
    %2247 = vmatprep.subr.mxu0 0.0
    %2248 = vmatpush2.msra.mxu0 0.0
    %2249 = vmatprep.subr.mxu0 0.0
    %2250 = vmatpush2.msra.mxu0 0.0
    %2251 = vmatprep.subr.mxu0 0.0
    %2252 = vmatpush2.msra.mxu0 0.0
    %2253 = vmatprep.subr.mxu0 0.0
    %2254 = vmatpush2.msra.mxu0 0.0
    %2255 = vmatprep.subr.mxu0 0.0
    %2256 = vmatpush2.msra.mxu0 0.0
    %2257 = vmatprep.subr.mxu0 0.0
    %2258 = vmatpush2.msra.mxu0 0.0
    %2259 = vmatprep.subr.mxu0 0.0
    %2260 = vmatpush2.msra.mxu0 0.0
    %2261 = vmatprep.mubr.f32.mxu0 0.0
    %2262 = vmatmul.mubr.f32.gmra.mxu0 %v2192
    %v2263 = vpop.f32.mrf.mxu0
    %v2264 = vadd.f32 0.0, %v2263
    %v2265 = vpop.f32.mrf.mxu0
    %2266 = vmatprep.mubr.f32.mxu0 0.0
    %2267 = vmatmul.mubr.f32.gmra.mxu0 %v2195
    %v2268 = vpop.f32.mrf.mxu0
    %v2269 = vadd.f32 0.0, %v2268
    %v2270 = vpop.f32.mrf.mxu0
    %2271 = vdwg.mxu0
    %2274 = vrot.lane.b32.xlu0 %v2090, 8
    %v2275 = vpop.permute.xlu0 %2274
    %2276 = vrot.lane.b32.xlu0 %v2095, 8
    %v2277 = vpop.permute.xlu0 %2276
    %2282 = vrot.lane.b32.xlu0 %v2177, 16
    %v2283 = vpop.permute.xlu0 %2282
    %2284 = vrot.lane.b32.xlu0 %v2182, 16
    %v2285 = vpop.permute.xlu0 %2284
    %2290 = vrot.lane.b32.xlu0 %v2264, 24
    %v2291 = vpop.permute.xlu0 %2290
    %2292 = vrot.lane.b32.xlu0 %v2269, 24
    %v2293 = vpop.permute.xlu0 %2292
    %v2296 = vsel %vm190, %v2003, %v2275
    %v2297 = vsel %vm190, %v2008, %v2277
    %v2298 = vsel %vm535, %v2296, %v2283
    %v2299 = vsel %vm535, %v2297, %v2285
    %v2300 = vsel %vm1000, %v2298, %v2291
    %v2301 = vsel %vm1000, %v2299, %v2293
    %s2302 = scalar_lea.vmem %s4, 32
    %v2303 = vld [vmem:[%s2302] sm:$0xff]
    %v2304 = vld [vmem:[%s2302 + $0x8] sm:$0xff]
    %v2305 = vld [vmem:[%s2302 + $0x10] sm:$0xff]
    %v2306 = vld [vmem:[%s2302 + $0x18] sm:$0xff]
    %v2307 = vlaneseq
    %v2308 = vshrl.u32 %v2307, 7
    %v2309 = vsub.s32 1, %v2308
    %v2310 = vrot.slane %v1383, %v2309
    %v2312 = vsel %vm37, %v2300, 0
    %v2315 = vsel %vm37, %v2301, 0
    %2317 = vmatprep.subr.mxu0 0.0
    %2318 = vmatpush1.msra.mxu0 0.0
    %2319 = vmatprep.subr.mxu0 0.0
    %2320 = vmatpush1.msra.mxu0 0.0
    %2321 = vmatprep.subr.mxu0 0.0
    %2322 = vmatpush1.msra.mxu0 0.0
    %2323 = vmatprep.subr.mxu0 0.0
    %2324 = vmatpush1.msra.mxu0 0.0
    %2325 = vmatprep.subr.mxu0 0.0
    %2326 = vmatpush1.msra.mxu0 0.0
    %2327 = vmatprep.subr.mxu0 0.0
    %2328 = vmatpush1.msra.mxu0 0.0
    %2329 = vmatprep.subr.mxu0 0.0
    %2330 = vmatpush1.msra.mxu0 0.0
    %2331 = vmatprep.subr.mxu0 0.0
    %2332 = vmatpush1.msra.mxu0 0.0
    %2333 = vmatprep.subr.mxu0 0.0
    %2334 = vmatpush1.msra.mxu0 0.0
    %2335 = vmatprep.subr.mxu0 0.0
    %2336 = vmatpush1.msra.mxu0 0.0
    %2337 = vmatprep.subr.mxu0 0.0
    %2338 = vmatpush1.msra.mxu0 0.0
    %2339 = vmatprep.subr.mxu0 0.0
    %2340 = vmatpush1.msra.mxu0 0.0
    %2341 = vmatprep.subr.mxu0 0.0
    %2342 = vmatpush1.msra.mxu0 %v2306
    %2343 = vmatprep.subr.mxu0 0.0
    %2344 = vmatpush1.msra.mxu0 %v2305
    %2345 = vmatprep.subr.mxu0 0.0
    %2346 = vmatpush1.msra.mxu0 %v2304
    %2347 = vmatprep.subr.mxu0 0.0
    %2348 = vmatpush1.msra.mxu0 %v2303
    %2349 = vmatprep.subr.mxu0 0.0
    %2350 = vmatpush2.msra.mxu0 0.0
    %2351 = vmatprep.subr.mxu0 0.0
    %2352 = vmatpush2.msra.mxu0 0.0
    %2353 = vmatprep.subr.mxu0 0.0
    %2354 = vmatpush2.msra.mxu0 0.0
    %2355 = vmatprep.subr.mxu0 0.0
    %2356 = vmatpush2.msra.mxu0 0.0
    %2357 = vmatprep.subr.mxu0 0.0
    %2358 = vmatpush2.msra.mxu0 0.0
    %2359 = vmatprep.subr.mxu0 0.0
    %2360 = vmatpush2.msra.mxu0 0.0
    %2361 = vmatprep.subr.mxu0 0.0
    %2362 = vmatpush2.msra.mxu0 0.0
    %2363 = vmatprep.subr.mxu0 0.0
    %2364 = vmatpush2.msra.mxu0 0.0
    %2365 = vmatprep.subr.mxu0 0.0
    %2366 = vmatpush2.msra.mxu0 0.0
    %2367 = vmatprep.subr.mxu0 0.0
    %2368 = vmatpush2.msra.mxu0 0.0
    %2369 = vmatprep.subr.mxu0 0.0
    %2370 = vmatpush2.msra.mxu0 0.0
    %2371 = vmatprep.subr.mxu0 0.0
    %2372 = vmatpush2.msra.mxu0 0.0
    %2373 = vmatprep.subr.mxu0 0.0
    %2374 = vmatpush2.msra.mxu0 0.0
    %2375 = vmatprep.subr.mxu0 0.0
    %2376 = vmatpush2.msra.mxu0 0.0
    %2377 = vmatprep.subr.mxu0 0.0
    %2378 = vmatpush2.msra.mxu0 0.0
    %2379 = vmatprep.subr.mxu0 0.0
    %2380 = vmatpush2.msra.mxu0 0.0
    %2381 = vmatprep.mubr.f32.mxu0 0.0
    %2382 = vmatmul.mubr.f32.gmra.mxu0 %v2312
    %v2383 = vpop.f32.mrf.mxu0
    %v2384 = vadd.f32 %v2310, %v2383
    %v2385 = vpop.f32.mrf.mxu0
    %2386 = vmatprep.mubr.f32.mxu0 0.0
    %2387 = vmatmul.mubr.f32.gmra.mxu0 %v2315
    %v2388 = vpop.f32.mrf.mxu0
    %v2389 = vadd.f32 %v2310, %v2388
    %v2390 = vpop.f32.mrf.mxu0
    %2391 = vdwg.mxu0
    %v2392 = vadd.f32 %v1380, %v2384
    %v2393 = vadd.f32 %v1381, %v2389
    %v2394 = vsel %vm37, %v2392, 0.0
    %2395 = vadd.xlane.f32.xlu0 %v2394
    %v2396 = vpop.xlane.xlu0 %2395
    %v2397 = vsel %vm37, %v2393, 0.0
    %2398 = vadd.xlane.f32.xlu0 %v2397
    %v2399 = vpop.xlane.xlu0 %2398
    %v2400 = vmul.f32 %v2396, 0.03125
    %v2401 = vmul.f32 %v2399, 0.03125
    %v2402 = vmul.f32 %v2392, %v2392
    %v2403 = vmul.f32 %v2393, %v2393
    %v2404 = vsel %vm37, %v2402, 0.0
    %2405 = vadd.xlane.f32.xlu0 %v2404
    %v2406 = vpop.xlane.xlu0 %2405
    %v2407 = vsel %vm37, %v2403, 0.0
    %2408 = vadd.xlane.f32.xlu0 %v2407
    %v2409 = vpop.xlane.xlu0 %2408
    %v2410 = vmul.f32 %v2406, 0.03125
    %v2411 = vmul.f32 %v2409, 0.03125
    %v2412 = vmul.f32 %v2400, %v2400
    %v2413 = vmul.f32 %v2401, %v2401
    %v2414 = vsub.f32 %v2410, %v2412
    %v2415 = vsub.f32 %v2411, %v2413
    %v2416 = vsub.f32 %v2392, %v2400
    %v2417 = vsub.f32 %v2393, %v2401
    %v2418 = vadd.f32 %v2414, 1e-12
    %v2419 = vadd.f32 %v2415, 1e-12
    %v2420 = vrsqrt.pop %v2418
    %v2421 = vrsqrt.pop %v2419
    %v2422 = vmul.f32 %v2416, %v2420
    %v2423 = vmul.f32 %v2417, %v2421
    %v2424 = vlaneseq
    %v2425 = vshrl.u32 %v2424, 7
    %v2426 = vsub.s32 4, %v2425
    %v2427 = vrot.slane %v1383, %v2426
    %v2428 = vmul.f32 %v2422, %v2427
    %v2429 = vmul.f32 %v2423, %v2427
    %v2430 = vlaneseq
    %v2431 = vshrl.u32 %v2430, 7
    %v2432 = vsub.s32 5, %v2431
    %v2433 = vrot.slane %v1383, %v2432
    %v2434 = vadd.f32 %v2428, %v2433
    %v2435 = vadd.f32 %v2429, %v2433
    %s2436 = scalar_lea.vmem %s5, 32
    %v2437 = vld [vmem:[%s2436] sm:$0xff]
    %v2438 = vld [vmem:[%s2436 + $0x8] sm:$0xff]
    %v2439 = vld [vmem:[%s2436 + $0x10] sm:$0xff]
    %v2440 = vld [vmem:[%s2436 + $0x18] sm:$0xff]
    %v2441 = vlaneseq
    %v2442 = vshrl.u32 %v2441, 7
    %v2443 = vsub.s32 2, %v2442
    %v2444 = vrot.slane %v1383, %v2443
    %v2446 = vsel %vm37, %v2434, 0
    %v2449 = vsel %vm37, %v2435, 0
    %2451 = vmatprep.subr.mxu0 0.0
    %2452 = vmatpush1.msra.mxu0 0.0
    %2453 = vmatprep.subr.mxu0 0.0
    %2454 = vmatpush1.msra.mxu0 0.0
    %2455 = vmatprep.subr.mxu0 0.0
    %2456 = vmatpush1.msra.mxu0 0.0
    %2457 = vmatprep.subr.mxu0 0.0
    %2458 = vmatpush1.msra.mxu0 0.0
    %2459 = vmatprep.subr.mxu0 0.0
    %2460 = vmatpush1.msra.mxu0 0.0
    %2461 = vmatprep.subr.mxu0 0.0
    %2462 = vmatpush1.msra.mxu0 0.0
    %2463 = vmatprep.subr.mxu0 0.0
    %2464 = vmatpush1.msra.mxu0 0.0
    %2465 = vmatprep.subr.mxu0 0.0
    %2466 = vmatpush1.msra.mxu0 0.0
    %2467 = vmatprep.subr.mxu0 0.0
    %2468 = vmatpush1.msra.mxu0 0.0
    %2469 = vmatprep.subr.mxu0 0.0
    %2470 = vmatpush1.msra.mxu0 0.0
    %2471 = vmatprep.subr.mxu0 0.0
    %2472 = vmatpush1.msra.mxu0 0.0
    %2473 = vmatprep.subr.mxu0 0.0
    %2474 = vmatpush1.msra.mxu0 0.0
    %2475 = vmatprep.subr.mxu0 0.0
    %2476 = vmatpush1.msra.mxu0 %v2440
    %2477 = vmatprep.subr.mxu0 0.0
    %2478 = vmatpush1.msra.mxu0 %v2439
    %2479 = vmatprep.subr.mxu0 0.0
    %2480 = vmatpush1.msra.mxu0 %v2438
    %2481 = vmatprep.subr.mxu0 0.0
    %2482 = vmatpush1.msra.mxu0 %v2437
    %2483 = vmatprep.subr.mxu0 0.0
    %2484 = vmatpush2.msra.mxu0 0.0
    %2485 = vmatprep.subr.mxu0 0.0
    %2486 = vmatpush2.msra.mxu0 0.0
    %2487 = vmatprep.subr.mxu0 0.0
    %2488 = vmatpush2.msra.mxu0 0.0
    %2489 = vmatprep.subr.mxu0 0.0
    %2490 = vmatpush2.msra.mxu0 0.0
    %2491 = vmatprep.subr.mxu0 0.0
    %2492 = vmatpush2.msra.mxu0 0.0
    %2493 = vmatprep.subr.mxu0 0.0
    %2494 = vmatpush2.msra.mxu0 0.0
    %2495 = vmatprep.subr.mxu0 0.0
    %2496 = vmatpush2.msra.mxu0 0.0
    %2497 = vmatprep.subr.mxu0 0.0
    %2498 = vmatpush2.msra.mxu0 0.0
    %2499 = vmatprep.subr.mxu0 0.0
    %2500 = vmatpush2.msra.mxu0 0.0
    %2501 = vmatprep.subr.mxu0 0.0
    %2502 = vmatpush2.msra.mxu0 0.0
    %2503 = vmatprep.subr.mxu0 0.0
    %2504 = vmatpush2.msra.mxu0 0.0
    %2505 = vmatprep.subr.mxu0 0.0
    %2506 = vmatpush2.msra.mxu0 0.0
    %2507 = vmatprep.subr.mxu0 0.0
    %2508 = vmatpush2.msra.mxu0 0.0
    %2509 = vmatprep.subr.mxu0 0.0
    %2510 = vmatpush2.msra.mxu0 0.0
    %2511 = vmatprep.subr.mxu0 0.0
    %2512 = vmatpush2.msra.mxu0 0.0
    %2513 = vmatprep.subr.mxu0 0.0
    %2514 = vmatpush2.msra.mxu0 0.0
    %2515 = vmatprep.mubr.f32.mxu0 0.0
    %2516 = vmatmul.mubr.f32.gmra.mxu0 %v2446
    %v2517 = vpop.f32.mrf.mxu0
    %v2518 = vadd.f32 %v2444, %v2517
    %v2519 = vpop.f32.mrf.mxu0
    %2520 = vmatprep.mubr.f32.mxu0 0.0
    %2521 = vmatmul.mubr.f32.gmra.mxu0 %v2449
    %v2522 = vpop.f32.mrf.mxu0
    %v2523 = vadd.f32 %v2444, %v2522
    %v2524 = vpop.f32.mrf.mxu0
    %2525 = vdwg.mxu0
    %v2526 = vmul.f32 %v2518, %v2518
    %v2527 = vmul.f32 %v2523, %v2523
    %v2528 = vmul.f32 %v2518, %v2526
    %v2529 = vmul.f32 %v2523, %v2527
    %v2530 = vmul.f32 %v2528, 0.044715
    %v2531 = vmul.f32 %v2529, 0.044715
    %v2532 = vadd.f32 %v2518, %v2530
    %v2533 = vadd.f32 %v2523, %v2531
    %v2534 = vmul.f32 %v2532, 0.7978846
    %v2535 = vmul.f32 %v2533, 0.7978846
    %v2536 = vtanh.pop %v2534
    %v2537 = vtanh.pop %v2535
    %v2538 = vadd.f32 %v2536, 1.0
    %v2539 = vadd.f32 %v2537, 1.0
    %v2540 = vmul.f32 %v2538, 0.5
    %v2541 = vmul.f32 %v2539, 0.5
    %v2542 = vmul.f32 %v2518, %v2540
    %v2543 = vmul.f32 %v2523, %v2541
    %s2544 = scalar_lea.vmem %s6, 128
    %v2545 = vld [vmem:[%s2544] sm:$0xff]
    %v2546 = vld [vmem:[%s2544 + $0x8] sm:$0xff]
    %v2547 = vld [vmem:[%s2544 + $0x10] sm:$0xff]
    %v2548 = vld [vmem:[%s2544 + $0x18] sm:$0xff]
    %v2549 = vld [vmem:[%s2544 + $0x20] sm:$0xff]
    %v2550 = vld [vmem:[%s2544 + $0x28] sm:$0xff]
    %v2551 = vld [vmem:[%s2544 + $0x30] sm:$0xff]
    %v2552 = vld [vmem:[%s2544 + $0x38] sm:$0xff]
    %v2553 = vld [vmem:[%s2544 + $0x40] sm:$0xff]
    %v2554 = vld [vmem:[%s2544 + $0x48] sm:$0xff]
    %v2555 = vld [vmem:[%s2544 + $0x50] sm:$0xff]
    %v2556 = vld [vmem:[%s2544 + $0x58] sm:$0xff]
    %v2557 = vld [vmem:[%s2544 + $0x60] sm:$0xff]
    %v2558 = vld [vmem:[%s2544 + $0x68] sm:$0xff]
    %v2559 = vld [vmem:[%s2544 + $0x70] sm:$0xff]
    %v2560 = vld [vmem:[%s2544 + $0x78] sm:$0xff]
    %v2561 = vlaneseq
    %v2562 = vshrl.u32 %v2561, 7
    %v2563 = vsub.s32 3, %v2562
    %v2564 = vrot.slane %v1383, %v2563
    %2565 = vmatprep.subr.mxu0 0.0
    %2566 = vmatpush1.msra.mxu0 %v2560
    %2567 = vmatprep.subr.mxu0 0.0
    %2568 = vmatpush1.msra.mxu0 %v2559
    %2569 = vmatprep.subr.mxu0 0.0
    %2570 = vmatpush1.msra.mxu0 %v2558
    %2571 = vmatprep.subr.mxu0 0.0
    %2572 = vmatpush1.msra.mxu0 %v2557
    %2573 = vmatprep.subr.mxu0 0.0
    %2574 = vmatpush1.msra.mxu0 %v2556
    %2575 = vmatprep.subr.mxu0 0.0
    %2576 = vmatpush1.msra.mxu0 %v2555
    %2577 = vmatprep.subr.mxu0 0.0
    %2578 = vmatpush1.msra.mxu0 %v2554
    %2579 = vmatprep.subr.mxu0 0.0
    %2580 = vmatpush1.msra.mxu0 %v2553
    %2581 = vmatprep.subr.mxu0 0.0
    %2582 = vmatpush1.msra.mxu0 %v2552
    %2583 = vmatprep.subr.mxu0 0.0
    %2584 = vmatpush1.msra.mxu0 %v2551
    %2585 = vmatprep.subr.mxu0 0.0
    %2586 = vmatpush1.msra.mxu0 %v2550
    %2587 = vmatprep.subr.mxu0 0.0
    %2588 = vmatpush1.msra.mxu0 %v2549
    %2589 = vmatprep.subr.mxu0 0.0
    %2590 = vmatpush1.msra.mxu0 %v2548
    %2591 = vmatprep.subr.mxu0 0.0
    %2592 = vmatpush1.msra.mxu0 %v2547
    %2593 = vmatprep.subr.mxu0 0.0
    %2594 = vmatpush1.msra.mxu0 %v2546
    %2595 = vmatprep.subr.mxu0 0.0
    %2596 = vmatpush1.msra.mxu0 %v2545
    %2597 = vmatprep.subr.mxu0 0.0
    %2598 = vmatpush2.msra.mxu0 0.0
    %2599 = vmatprep.subr.mxu0 0.0
    %2600 = vmatpush2.msra.mxu0 0.0
    %2601 = vmatprep.subr.mxu0 0.0
    %2602 = vmatpush2.msra.mxu0 0.0
    %2603 = vmatprep.subr.mxu0 0.0
    %2604 = vmatpush2.msra.mxu0 0.0
    %2605 = vmatprep.subr.mxu0 0.0
    %2606 = vmatpush2.msra.mxu0 0.0
    %2607 = vmatprep.subr.mxu0 0.0
    %2608 = vmatpush2.msra.mxu0 0.0
    %2609 = vmatprep.subr.mxu0 0.0
    %2610 = vmatpush2.msra.mxu0 0.0
    %2611 = vmatprep.subr.mxu0 0.0
    %2612 = vmatpush2.msra.mxu0 0.0
    %2613 = vmatprep.subr.mxu0 0.0
    %2614 = vmatpush2.msra.mxu0 0.0
    %2615 = vmatprep.subr.mxu0 0.0
    %2616 = vmatpush2.msra.mxu0 0.0
    %2617 = vmatprep.subr.mxu0 0.0
    %2618 = vmatpush2.msra.mxu0 0.0
    %2619 = vmatprep.subr.mxu0 0.0
    %2620 = vmatpush2.msra.mxu0 0.0
    %2621 = vmatprep.subr.mxu0 0.0
    %2622 = vmatpush2.msra.mxu0 0.0
    %2623 = vmatprep.subr.mxu0 0.0
    %2624 = vmatpush2.msra.mxu0 0.0
    %2625 = vmatprep.subr.mxu0 0.0
    %2626 = vmatpush2.msra.mxu0 0.0
    %2627 = vmatprep.subr.mxu0 0.0
    %2628 = vmatpush2.msra.mxu0 0.0
    %2629 = vmatprep.mubr.f32.mxu0 0.0
    %2630 = vmatmul.mubr.f32.gmra.mxu0 %v2542
    %v2631 = vpop.f32.mrf.mxu0
    %v2632 = vadd.f32 %v2564, %v2631
    %v2633 = vpop.f32.mrf.mxu0
    %2634 = vmatprep.mubr.f32.mxu0 0.0
    %2635 = vmatmul.mubr.f32.gmra.mxu0 %v2543
    %v2636 = vpop.f32.mrf.mxu0
    %v2637 = vadd.f32 %v2564, %v2636
    %v2638 = vpop.f32.mrf.mxu0
    %2639 = vdwg.mxu0
    %v2640 = vadd.f32 %v2434, %v2632
    %v2641 = vadd.f32 %v2435, %v2637
    %v2642 = vsel %vm37, %v2640, 0.0
    %2643 = vadd.xlane.f32.xlu0 %v2642
    %v2644 = vpop.xlane.xlu0 %2643
    %v2645 = vsel %vm37, %v2641, 0.0
    %2646 = vadd.xlane.f32.xlu0 %v2645
    %v2647 = vpop.xlane.xlu0 %2646
    %v2648 = vmul.f32 %v2644, 0.03125
    %v2649 = vmul.f32 %v2647, 0.03125
    %v2650 = vmul.f32 %v2640, %v2640
    %v2651 = vmul.f32 %v2641, %v2641
    %v2652 = vsel %vm37, %v2650, 0.0
    %2653 = vadd.xlane.f32.xlu0 %v2652
    %v2654 = vpop.xlane.xlu0 %2653
    %v2655 = vsel %vm37, %v2651, 0.0
    %2656 = vadd.xlane.f32.xlu0 %v2655
    %v2657 = vpop.xlane.xlu0 %2656
    %v2658 = vmul.f32 %v2654, 0.03125
    %v2659 = vmul.f32 %v2657, 0.03125
    %v2660 = vmul.f32 %v2648, %v2648
    %v2661 = vmul.f32 %v2649, %v2649
    %v2662 = vsub.f32 %v2658, %v2660
    %v2663 = vsub.f32 %v2659, %v2661
    %v2664 = vsub.f32 %v2640, %v2648
    %v2665 = vsub.f32 %v2641, %v2649
    %v2666 = vadd.f32 %v2662, 1e-12
    %v2667 = vadd.f32 %v2663, 1e-12
    %v2668 = vrsqrt.pop %v2666
    %v2669 = vrsqrt.pop %v2667
    %v2670 = vmul.f32 %v2664, %v2668
    %v2671 = vmul.f32 %v2665, %v2669
    %v2672 = vlaneseq
    %v2673 = vshrl.u32 %v2672, 7
    %v2674 = vsub.s32 6, %v2673
    %v2675 = vrot.slane %v1383, %v2674
    %v2676 = vmul.f32 %v2670, %v2675
    %v2677 = vmul.f32 %v2671, %v2675
    %v2678 = vlaneseq
    %v2679 = vshrl.u32 %v2678, 7
    %v2680 = vsub.s32 7, %v2679
    %v2681 = vrot.slane %v1383, %v2680
    %v2682 = vadd.f32 %v2676, %v2681
    %v2683 = vadd.f32 %v2677, %v2681
    %v2684 = vld [vmem:[%s8] sm:$0xff]
    %v2685 = vld [vmem:[%s8 + $0x8] sm:$0xff]
    %v2686 = vld [vmem:[%s8 + $0x10] sm:$0xff]
    %v2687 = vld [vmem:[%s8 + $0x18] sm:$0xff]
    %v2688 = vld [vmem:[%s2 + $0x2] sm:$0x1]
    %v2689 = vlaneseq
    %v2690 = vshrl.u32 %v2689, 7
    %v2691 = vsub.s32 0, %v2690
    %v2692 = vrot.slane %v2688, %v2691
    %v2694 = vsel %vm37, %v2682, 0
    %v2697 = vsel %vm37, %v2683, 0
    %2699 = vmatprep.subr.mxu0 0.0
    %2700 = vmatpush1.msra.mxu0 0.0
    %2701 = vmatprep.subr.mxu0 0.0
    %2702 = vmatpush1.msra.mxu0 0.0
    %2703 = vmatprep.subr.mxu0 0.0
    %2704 = vmatpush1.msra.mxu0 0.0
    %2705 = vmatprep.subr.mxu0 0.0
    %2706 = vmatpush1.msra.mxu0 0.0
    %2707 = vmatprep.subr.mxu0 0.0
    %2708 = vmatpush1.msra.mxu0 0.0
    %2709 = vmatprep.subr.mxu0 0.0
    %2710 = vmatpush1.msra.mxu0 0.0
    %2711 = vmatprep.subr.mxu0 0.0
    %2712 = vmatpush1.msra.mxu0 0.0
    %2713 = vmatprep.subr.mxu0 0.0
    %2714 = vmatpush1.msra.mxu0 0.0
    %2715 = vmatprep.subr.mxu0 0.0
    %2716 = vmatpush1.msra.mxu0 0.0
    %2717 = vmatprep.subr.mxu0 0.0
    %2718 = vmatpush1.msra.mxu0 0.0
    %2719 = vmatprep.subr.mxu0 0.0
    %2720 = vmatpush1.msra.mxu0 0.0
    %2721 = vmatprep.subr.mxu0 0.0
    %2722 = vmatpush1.msra.mxu0 0.0
    %2723 = vmatprep.subr.mxu0 0.0
    %2724 = vmatpush1.msra.mxu0 %v2687
    %2725 = vmatprep.subr.mxu0 0.0
    %2726 = vmatpush1.msra.mxu0 %v2686
    %2727 = vmatprep.subr.mxu0 0.0
    %2728 = vmatpush1.msra.mxu0 %v2685
    %2729 = vmatprep.subr.mxu0 0.0
    %2730 = vmatpush1.msra.mxu0 %v2684
    %2731 = vmatprep.subr.mxu0 0.0
    %2732 = vmatpush2.msra.mxu0 0.0
    %2733 = vmatprep.subr.mxu0 0.0
    %2734 = vmatpush2.msra.mxu0 0.0
    %2735 = vmatprep.subr.mxu0 0.0
    %2736 = vmatpush2.msra.mxu0 0.0
    %2737 = vmatprep.subr.mxu0 0.0
    %2738 = vmatpush2.msra.mxu0 0.0
    %2739 = vmatprep.subr.mxu0 0.0
    %2740 = vmatpush2.msra.mxu0 0.0
    %2741 = vmatprep.subr.mxu0 0.0
    %2742 = vmatpush2.msra.mxu0 0.0
    %2743 = vmatprep.subr.mxu0 0.0
    %2744 = vmatpush2.msra.mxu0 0.0
    %2745 = vmatprep.subr.mxu0 0.0
    %2746 = vmatpush2.msra.mxu0 0.0
    %2747 = vmatprep.subr.mxu0 0.0
    %2748 = vmatpush2.msra.mxu0 0.0
    %2749 = vmatprep.subr.mxu0 0.0
    %2750 = vmatpush2.msra.mxu0 0.0
    %2751 = vmatprep.subr.mxu0 0.0
    %2752 = vmatpush2.msra.mxu0 0.0
    %2753 = vmatprep.subr.mxu0 0.0
    %2754 = vmatpush2.msra.mxu0 0.0
    %2755 = vmatprep.subr.mxu0 0.0
    %2756 = vmatpush2.msra.mxu0 0.0
    %2757 = vmatprep.subr.mxu0 0.0
    %2758 = vmatpush2.msra.mxu0 0.0
    %2759 = vmatprep.subr.mxu0 0.0
    %2760 = vmatpush2.msra.mxu0 0.0
    %2761 = vmatprep.subr.mxu0 0.0
    %2762 = vmatpush2.msra.mxu0 0.0
    %2763 = vmatprep.mubr.f32.mxu0 0.0
    %2764 = vmatmul.mubr.f32.gmra.mxu0 %v2694
    %v2765 = vpop.f32.mrf.mxu0
    %v2766 = vadd.f32 %v2692, %v2765
    %v2767 = vpop.f32.mrf.mxu0
    %2768 = vmatprep.mubr.f32.mxu0 0.0
    %2769 = vmatmul.mubr.f32.gmra.mxu0 %v2697
    %v2770 = vpop.f32.mrf.mxu0
    %v2771 = vadd.f32 %v2692, %v2770
    %v2772 = vpop.f32.mrf.mxu0
    %2773 = vdwg.mxu0
    %2774 = vst [vmem:[#allocation2] sm:$0xff] %v2766
    %2775 = vst [vmem:[#allocation2 + $0x8] sm:$0xff] %v2771
    // Predicated region
    $region38: #{tpu_custom_call.1} parent=1 // pred_check
      _
    $region39: #{tpu_custom_call.1} parent=1 // pred_check_branch
      %2777 = sbr.rel (0) target = $region41
    $region40: #{tpu_custom_call.1} parent=1 // pred_region
      %s2779 = ssub.s32 256, 256
      %2780 = vsyncadd [#allocation3], %s2779
      %s2781 = sshll.u32 [#allocation2], 4
      %s2782 = int_to_ptr.vmem [resolvable:$true] %s2781
      %2787 = dma.vmem_to_hbm [thread:$0]  %s2782, 256, %s9, [#allocation3], 128, 128, 8
    $region41: #{tpu_custom_call.1} parent=1 // pred_fallthru
      _
    // Predicated region
    $region42: #{tpu_custom_call.1} parent=1 // pred_check
      _
    $region43: #{tpu_custom_call.1} parent=1 // pred_check_branch
      %2789 = sbr.rel (0) target = $region45
    $region44: #{tpu_custom_call.1} parent=1 // pred_region
      %2790 = dma.done [#allocation3], 256
    $region45: #{tpu_custom_call.1} parent=1 // pred_fallthru
      _
    %2791 = vsyncpa [#allocation3], 1

</llo_original>
